<compile_context>
chip_gen: v5e
topology: v5e:2x2
jax: 0.10.0
libtpu: 0.0.40
codegen_flags: <defaults>
</compile_context>

<pallas_src>
import numpy as np

import jax
import jax.numpy as jnp
from jax.experimental import pallas as pl
from jax.experimental.pallas import tpu as pltpu


# ---------------------------------------------------------------------------
# One-time weight packing (PyTorch layouts -> fused-kernel matmul layouts)
#
# Internal per-image representations (flattened output positions x channels):
#   lhs1 : (16, 192)  L1 im2col of the 4x4 space-to-depth padded input
#   a1   : (16, 256)  L1 out: 2x2 output phases x 64ch of the 8x8x64 tensor
#   a2   : (16, 128)  L2 out: dense 4x4x128
#   a3   : (16, 256)  L3 out: 2x2 output phases x 64ch of the 8x8x64 tensor
#   out  : (16, 128)  L4 out: 4x4 output phases x 3ch (padded to 128 lanes)
# Row m = th*4 + tw is the coarse 4x4 spatial position; every layer is then a
# stride-1 KxK window op over a zero-guarded 6x6 grid = one matmul.
# ---------------------------------------------------------------------------
def prepare_params(params):
    w1 = np.asarray(params["enc1_w"], np.float32)   # (64, 3, 4, 4)    Conv2d
    b1 = np.asarray(params["enc1_b"], np.float32)
    w2 = np.asarray(params["enc2_w"], np.float32)   # (128, 64, 4, 4)  Conv2d
    b2 = np.asarray(params["enc2_b"], np.float32)
    w3 = np.asarray(params["dec1_w"], np.float32)   # (128, 64, 4, 4)  ConvT (Cin,Cout,kh,kw)
    b3 = np.asarray(params["dec1_b"], np.float32)
    w4 = np.asarray(params["dec2_w"], np.float32)   # (64, 3, 4, 4)    ConvT
    b4 = np.asarray(params["dec2_b"], np.float32)

    # ---- L1: Conv(3->64,k4,s2,p1) on the 4x space-to-depth input.
    # rows: (tap s_h,s_w in 2x2) x (plane a_h,a_w in 4x4) x cin
    # cols: (output phase q_h,q_w in 2x2) x cout
    w1p = np.zeros((4 * 48, 4 * 64), np.float32)
    for qh in range(2):
        for qw in range(2):
            for di in range(4):
                for dj in range(4):
                    ah, sh = (2 * qh + di) % 4, (2 * qh + di) // 4
                    aw, sw = (2 * qw + dj) % 4, (2 * qw + dj) // 4
                    r = (sh * 2 + sw) * 48 + (ah * 4 + aw) * 3
                    c = (qh * 2 + qw) * 64
                    w1p[r:r + 3, c:c + 64] = w1[:, :, di, dj].T
    b1p = np.tile(b1, 4)[None, :]                                    # (1, 256)

    # ---- L2: Conv(64->128,k4,s2,p1) reading L1's phase-split output.
    def enc_tap(d):
        q = (d + 1) % 2
        dh = (d - 1 - q) // 2 + 1
        return q, dh

    w2p = np.zeros((9 * 256, 128), np.float32)
    for di in range(4):
        qh, dh = enc_tap(di)
        for dj in range(4):
            qw, dw = enc_tap(dj)
            r = (dh * 3 + dw) * 256 + (qh * 2 + qw) * 64
            w2p[r:r + 64, :] = w2[:, :, di, dj].T
    b2p = b2[None, :]                                                # (1, 128)

    # ---- L3: ConvT(128->64,k4,s2,p1) as per-output-phase 3x3 window conv.
    w3p = np.zeros((9 * 128, 4 * 64), np.float32)
    for rh in range(2):
        for rw in range(2):
            for di in range(4):
                if di % 2 != (rh + 1) % 2:
                    continue
                dh = (rh + 1 - di) // 2 + 1
                for dj in range(4):
                    if dj % 2 != (rw + 1) % 2:
                        continue
                    dw = (rw + 1 - dj) // 2 + 1
                    r = (dh * 3 + dw) * 128
                    c = (rh * 2 + rw) * 64
                    w3p[r:r + 128, c:c + 64] += w3[:, :, di, dj]
    b3p = np.tile(b3, 4)[None, :]                                    # (1, 256)

    # ---- L4: ConvT(64->3,k4,s2,p1) -> 16 output phases x 3 channels.
    # Output columns padded 48 -> 128 so the kernel's stores are lane-dense.
    w4p = np.zeros((9 * 256, 128), np.float32)
    for sh in range(4):
        for sw in range(4):
            for di in range(4):
                if di % 2 != (sh + 1) % 2:
                    continue
                f = (sh + 1 - di) // 2
                qh, gh = f % 2, (f - f % 2) // 2
                dh = gh + 1
                for dj in range(4):
                    if dj % 2 != (sw + 1) % 2:
                        continue
                    g = (sw + 1 - dj) // 2
                    qw, gw = g % 2, (g - g % 2) // 2
                    dw = gw + 1
                    r = (dh * 3 + dw) * 256 + (qh * 2 + qw) * 64
                    c = (sh * 4 + sw) * 3
                    w4p[r:r + 64, c:c + 3] += w4[:, :, di, dj]
    b4p = np.zeros((1, 128), np.float32)
    b4p[0, :48] = np.tile(b4, 16)

    bf16 = lambda a: jnp.asarray(a, jnp.bfloat16)
    f32 = lambda a: jnp.asarray(a, jnp.float32)
    return {
        "w1": bf16(w1p), "b1": f32(b1p),
        "w2": bf16(w2p), "b2": f32(b2p),
        "w3": bf16(w3p), "b3": f32(b3p),
        "w4": bf16(w4p), "b4": f32(b4p),
    }


# ---------------------------------------------------------------------------
# The single fused Pallas kernel: one matmul per layer per batch block.
# ---------------------------------------------------------------------------
def _ae_kernel(lhs1_ref, w1_ref, b1_ref, w2_ref, b2_ref,
               w3_ref, b3_ref, w4_ref, b4_ref, out_ref):
    m_rows = out_ref.shape[0]            # NB * 16 flattened output positions

    # Row m = img*16 + th*4 + tw.  Build the 3x3-window validity masks once
    # (shared by L2/L3/L4); power-of-two bit ops only.
    row = jax.lax.broadcasted_iota(jnp.int32, (m_rows, 1), 0)
    p16 = jnp.bitwise_and(row, 15)       # th*4 + tw
    p4 = jnp.bitwise_and(row, 3)         # tw
    h_ok = (p16 >= 4, None, p16 < 12)    # th+dh-1 in [0,4) for dh = 0,1,2
    w_ok = (p4 >= 1, None, p4 < 3)       # tw+dw-1 in [0,4) for dw = 0,1,2

    taps = []
    for dh in range(3):
        for dw in range(3):
            hm, wm = h_ok[dh], w_ok[dw]
            if hm is None:
                mask = wm
            elif wm is None:
                mask = hm
            else:
                mask = jnp.logical_and(hm, wm)
            taps.append(((dh - 1) * 4 + (dw - 1), mask))

    def window3(act):
        """im2col for a stride-1 3x3 window over the zero-guarded 6x6 grid.

        act : (m_rows, C) f32, rows = flattened 4x4 output positions.
        Returns (m_rows, 9*C) bf16 whose K layout (tap-major, channel-minor)
        matches the packed weights, so the layer is a single MXU matmul.
        """
        c = act.shape[-1]
        zpad = jnp.zeros((8, c), act.dtype)            # sublane-aligned guard
        padded = jnp.concatenate([zpad, act, zpad], axis=0)
        parts = []
        for shift, mask in taps:
            part = act if shift == 0 else padded[8 + shift:8 + shift + m_rows, :]
            if mask is not None:
                part = jnp.where(mask, part, jnp.zeros_like(part))
            parts.append(part)
        return jnp.concatenate(parts, axis=-1).astype(jnp.bfloat16)

    def layer(lhs, w_ref, b_ref):
        # bf16 x bf16 MXU matmul with f32 accumulation, f32 bias epilogue.
        return jnp.dot(lhs, w_ref[...],
                       preferred_element_type=jnp.float32) + b_ref[...]

    # L1: Conv(3->64, k4, s2, p1)   (im2col slab pre-built in the wrapper)
    a1 = jnp.maximum(layer(lhs1_ref[...], w1_ref, b1_ref), 0.0)
    # L2: Conv(64->128, k4, s2, p1)
    a2 = jnp.maximum(layer(window3(a1), w2_ref, b2_ref), 0.0)
    # L3: ConvT(128->64, k4, s2, p1)
    a3 = jnp.maximum(layer(window3(a2), w3_ref, b3_ref), 0.0)
    # L4: ConvT(64->3, k4, s2, p1) + sigmoid (exp and reciprocal on the EUP)
    z4 = layer(window3(a3), w4_ref, b4_ref)
    out_ref[...] = pl.reciprocal(1.0 + jnp.exp(-z4), approx=True)


def _fused_forward(lhs1, packed, nb):
    m_total, k1 = lhs1.shape
    m_blk = nb * 16
    grid = (m_total // m_blk,)

    def resident(arr):                   # whole array, VMEM-resident block
        return pl.BlockSpec(arr.shape, lambda i: (0, 0))

    args = (lhs1, packed["w1"], packed["b1"], packed["w2"], packed["b2"],
            packed["w3"], packed["b3"], packed["w4"], packed["b4"])
    in_specs = [pl.BlockSpec((m_blk, k1), lambda i: (i, 0))]
    in_specs += [resident(a) for a in args[1:]]

    return pl.pallas_call(
        _ae_kernel,
        out_shape=jax.ShapeDtypeStruct((m_total, 128), jnp.float32),
        grid=grid,
        in_specs=in_specs,
        out_specs=pl.BlockSpec((m_blk, 128), lambda i: (i, 0)),
        compiler_params=pltpu.CompilerParams(
            dimension_semantics=("parallel",)),
    )(*args)


@jax.jit
def anomaly_detector_forward(x_nchw, packed):
    n, c, h, w = x_nchw.shape
    assert (c, h, w) == (3, 16, 16), "kernel is specialized to 3x16x16 inputs"
    x = jnp.transpose(x_nchw, (0, 2, 3, 1))                       # NHWC
    # conv padding (1) + alignment padding so the padded grid splits 4-ways
    xp = jnp.pad(x, ((0, 0), (1, 3), (1, 3), (0, 0)))             # (n, 20, 20, 3)
    # 4x4 space-to-depth -> (n,5,5,48); L1 im2col (2x2 window) -> (n*16, 192)
    r0 = xp.reshape(n, 5, 4, 5, 4, 3).transpose(0, 1, 3, 2, 4, 5).reshape(n, 5, 5, 48)
    parts = [r0[:, sh:sh + 4, sw:sw + 4, :] for sh in range(2) for sw in range(2)]
    lhs1 = jnp.concatenate(parts, axis=-1).reshape(n * 16, 192).astype(jnp.bfloat16)

    # batch-block the grid; pad the batch up to a multiple of the block size
    nb = n if n <= 32 else 32
    g = -(-n // nb)
    if g * nb != n:
        lhs1 = jnp.pad(lhs1, ((0, (g * nb - n) * 16), (0, 0)))

    out = _fused_forward(lhs1, packed, nb)                        # (g*nb*16, 128) f32
    # undo the phase split: row m = n*16+th*4+tw, channel = (sh*4+sw)*3 + c
    r4 = out[:n * 16, :48].reshape(n, 4, 4, 4, 4, 3)
    y = r4.transpose(0, 1, 3, 2, 4, 5).reshape(n, 16, 16, 3)
    return jnp.transpose(y, (0, 3, 1, 2))                         # NCHW


# ---------------------------------------------------------------------------
# Parameter init (PyTorch layouts) and plain-JAX reference for verification
# ---------------------------------------------------------------------------
def init_params(key):
    ks = jax.random.split(key, 8)

    def w_init(k, shape, fan_in):
        return jax.random.normal(k, shape, jnp.float32) / jnp.sqrt(fan_in)

    return {
        "enc1_w": w_init(ks[0], (64, 3, 4, 4), 3 * 16),
        "enc1_b": jax.random.normal(ks[1], (64,), jnp.float32) * 0.01,
        "enc2_w": w_init(ks[2], (128, 64, 4, 4), 64 * 16),
        "enc2_b": jax.random.normal(ks[3], (128,), jnp.float32) * 0.01,
        "dec1_w": w_init(ks[4], (128, 64, 4, 4), 128 * 16),
        "dec1_b": jax.random.normal(ks[5], (64,), jnp.float32) * 0.01,
        "dec2_w": w_init(ks[6], (64, 3, 4, 4), 64 * 16),
        "dec2_b": jax.random.normal(ks[7], (3,), jnp.float32) * 0.01,
    }


def _ref_forward(x_nchw, params):
    """Plain-JAX f32 reference with PyTorch Conv2d/ConvTranspose2d semantics."""
    def conv2d(x, w, b, stride, pad, act):
        cout, cin, k, _ = w.shape
        xp = jnp.pad(x, ((0, 0), (pad, pad), (pad, pad), (0, 0)))
        n, hp, wp, c = xp.shape
        ho = (hp - k) // stride + 1
        wo = (wp - k) // stride + 1
        cols = []
        for di in range(k):
            for dj in range(k):
                cols.append(xp[:, di:di + stride * (ho - 1) + 1:stride,
                               dj:dj + stride * (wo - 1) + 1:stride, :])
        p = jnp.stack(cols, axis=3).reshape(n, ho, wo, k * k * c)
        wm = jnp.transpose(w, (2, 3, 1, 0)).reshape(k * k * cin, cout)
        y = jnp.einsum("nhwk,ko->nhwo", p, wm) + b
        return jnp.maximum(y, 0.0) if act == "relu" else jax.nn.sigmoid(y)

    def conv_t2d(x, w, b, stride, pad, act):
        cin, cout, k, _ = w.shape
        n, h, wd, c = x.shape
        hd = (h - 1) * stride + 1
        wdd = (wd - 1) * stride + 1
        xd = jnp.zeros((n, hd, wdd, c), x.dtype).at[:, ::stride, ::stride, :].set(x)
        w_conv = jnp.transpose(w[:, :, ::-1, ::-1], (1, 0, 2, 3))
        return conv2d(xd, w_conv, b, stride=1, pad=k - 1 - pad, act=act)

    x = jnp.transpose(x_nchw, (0, 2, 3, 1))
    x = conv2d(x, params["enc1_w"], params["enc1_b"], 2, 1, "relu")
    x = conv2d(x, params["enc2_w"], params["enc2_b"], 2, 1, "relu")
    x = conv_t2d(x, params["dec1_w"], params["dec1_b"], 2, 1, "relu")
    x = conv_t2d(x, params["dec2_w"], params["dec2_b"], 2, 1, "sigmoid")
    return jnp.transpose(x, (0, 3, 1, 2))


if __name__ == "__main__":
    key = jax.random.PRNGKey(0)
    pkey, xkey = jax.random.split(key)
    params = init_params(pkey)
    packed = prepare_params(params)          # one-time weight packing (numpy)
    x = jax.random.normal(xkey, (2, 3, 16, 16), jnp.float32)  # NCHW

    y = jax.block_until_ready(anomaly_detector_forward(x, packed))

    assert y.shape == (2, 3, 16, 16), y.shape
    assert bool(jnp.all(jnp.isfinite(y)))
    # sigmoid range (tiny slack for the approx EUP reciprocal)
    assert bool(jnp.all((y >= -1e-3) & (y <= 1.0 + 1e-3)))

    # cross-check against the plain-JAX (f32) reference; tolerance covers the
    # bf16 matmul inputs (accumulation stays f32) and the approx reciprocal.
    y_ref = _ref_forward(x, params)
    max_err = float(jnp.max(jnp.abs(y - y_ref)))
    assert max_err < 5e-2, f"mismatch vs reference: {max_err}"

    print("KERNEL_OK")
</pallas_src>

<mosaic_0001>
module attributes {stable_mosaic.version = 11 : i64} {
  func.func @_ae_kernel(%arg0: i32, %arg1: memref<32x192xbf16, #tpu.memory_space<vmem>>, %arg2: memref<192x256xbf16, #tpu.memory_space<vmem>>, %arg3: memref<1x256xf32, #tpu.memory_space<vmem>>, %arg4: memref<2304x128xbf16, #tpu.memory_space<vmem>>, %arg5: memref<1x128xf32, #tpu.memory_space<vmem>>, %arg6: memref<1152x256xbf16, #tpu.memory_space<vmem>>, %arg7: memref<1x256xf32, #tpu.memory_space<vmem>>, %arg8: memref<2304x128xbf16, #tpu.memory_space<vmem>>, %arg9: memref<1x128xf32, #tpu.memory_space<vmem>>, %arg10: memref<32x128xf32, #tpu.memory_space<vmem>>) attributes {dimension_semantics = [#tpu.dimension_semantics<parallel>], iteration_bounds = array<i64: 1>, scalar_prefetch = 0 : i64, scratch_operands = 0 : i64, tpu.core_type = #tpu.core_type<tc>, window_params = [{transform_indices = @transform_0, window_bounds = array<i64: 32, 192>}, {pipeline_mode = #tpu.pipeline_mode<synchronous>, transform_indices = @transform_1, window_bounds = array<i64: 192, 256>}, {pipeline_mode = #tpu.pipeline_mode<synchronous>, transform_indices = @transform_2, window_bounds = array<i64: 1, 256>}, {pipeline_mode = #tpu.pipeline_mode<synchronous>, transform_indices = @transform_3, window_bounds = array<i64: 2304, 128>}, {pipeline_mode = #tpu.pipeline_mode<synchronous>, transform_indices = @transform_4, window_bounds = array<i64: 1, 128>}, {pipeline_mode = #tpu.pipeline_mode<synchronous>, transform_indices = @transform_5, window_bounds = array<i64: 1152, 256>}, {pipeline_mode = #tpu.pipeline_mode<synchronous>, transform_indices = @transform_6, window_bounds = array<i64: 1, 256>}, {pipeline_mode = #tpu.pipeline_mode<synchronous>, transform_indices = @transform_7, window_bounds = array<i64: 2304, 128>}, {pipeline_mode = #tpu.pipeline_mode<synchronous>, transform_indices = @transform_8, window_bounds = array<i64: 1, 128>}, {transform_indices = @transform_9, window_bounds = array<i64: 32, 128>}]} {
    %0 = tpu.iota {dimensions = array<i32: 0>} : vector<32x1xi32>
    %c15_i32 = arith.constant 15 : i32
    %1 = vector.broadcast %c15_i32 : i32 to vector<32x1xi32>
    %2 = arith.andi %0, %1 : vector<32x1xi32>
    %c3_i32 = arith.constant 3 : i32
    %3 = vector.broadcast %c3_i32 : i32 to vector<32x1xi32>
    %4 = arith.andi %0, %3 : vector<32x1xi32>
    %c4_i32 = arith.constant 4 : i32
    %5 = vector.broadcast %c4_i32 : i32 to vector<32x1xi32>
    %6 = arith.cmpi sge, %2, %5 : vector<32x1xi32>
    %c12_i32 = arith.constant 12 : i32
    %7 = vector.broadcast %c12_i32 : i32 to vector<32x1xi32>
    %8 = arith.cmpi slt, %2, %7 : vector<32x1xi32>
    %c1_i32 = arith.constant 1 : i32
    %9 = vector.broadcast %c1_i32 : i32 to vector<32x1xi32>
    %10 = arith.cmpi sge, %4, %9 : vector<32x1xi32>
    %c3_i32_0 = arith.constant 3 : i32
    %11 = vector.broadcast %c3_i32_0 : i32 to vector<32x1xi32>
    %12 = arith.cmpi slt, %4, %11 : vector<32x1xi32>
    %13 = arith.andi %6, %10 : vector<32x1xi1>
    %14 = arith.andi %6, %12 : vector<32x1xi1>
    %15 = arith.andi %8, %10 : vector<32x1xi1>
    %16 = arith.andi %8, %12 : vector<32x1xi1>
    %c0 = arith.constant 0 : index
    %c0_1 = arith.constant 0 : index
    %17 = vector.load %arg1[%c0, %c0_1] : memref<32x192xbf16, #tpu.memory_space<vmem>>, vector<32x192xbf16>
    %c0_2 = arith.constant 0 : index
    %c0_3 = arith.constant 0 : index
    %18 = vector.load %arg2[%c0_2, %c0_3] : memref<192x256xbf16, #tpu.memory_space<vmem>>, vector<192x256xbf16>
    %cst = arith.constant dense<0.000000e+00> : vector<32x256xf32>
    %19 = tpu.matmul %17, %18, %cst {dimension_numbers = #tpu.dot_dimension_numbers<[1], [0], [0], [1], [0, 0, 1, 1], [], []>} : vector<32x192xbf16>, vector<192x256xbf16>, vector<32x256xf32> -> vector<32x256xf32>
    %c0_4 = arith.constant 0 : index
    %c0_5 = arith.constant 0 : index
    %20 = vector.load %arg3[%c0_4, %c0_5] : memref<1x256xf32, #tpu.memory_space<vmem>>, vector<1x256xf32>
    %21 = vector.broadcast %20 : vector<1x256xf32> to vector<32x256xf32>
    %22 = arith.addf %19, %21 : vector<32x256xf32>
    %cst_6 = arith.constant 0.000000e+00 : f32
    %23 = vector.broadcast %cst_6 : f32 to vector<32x256xf32>
    %24 = arith.maximumf %22, %23 : vector<32x256xf32>
    %cst_7 = arith.constant 0.000000e+00 : f32
    %25 = vector.broadcast %cst_7 : f32 to vector<8x256xf32>
    %26 = tpu.concatenate %25, %24, %25 in 0 : vector<8x256xf32>, vector<32x256xf32>, vector<8x256xf32> -> vector<48x256xf32>
    %27 = vector.extract_strided_slice %26 {offsets = [3, 0], sizes = [32, 256], strides = [1, 1]} : vector<48x256xf32> to vector<32x256xf32>
    %cst_8 = arith.constant 0.000000e+00 : f32
    %28 = vector.broadcast %cst_8 : f32 to vector<32x256xf32>
    %29 = vector.shape_cast %13 : vector<32x1xi1> to vector<32x1xi1>
    %30 = vector.broadcast %29 : vector<32x1xi1> to vector<32x256xi1>
    %31 = arith.select %30, %27, %28 : vector<32x256xi1>, vector<32x256xf32>
    %32 = vector.extract_strided_slice %26 {offsets = [4, 0], sizes = [32, 256], strides = [1, 1]} : vector<48x256xf32> to vector<32x256xf32>
    %cst_9 = arith.constant 0.000000e+00 : f32
    %33 = vector.broadcast %cst_9 : f32 to vector<32x256xf32>
    %34 = vector.shape_cast %6 : vector<32x1xi1> to vector<32x1xi1>
    %35 = vector.broadcast %34 : vector<32x1xi1> to vector<32x256xi1>
    %36 = arith.select %35, %32, %33 : vector<32x256xi1>, vector<32x256xf32>
    %37 = vector.extract_strided_slice %26 {offsets = [5, 0], sizes = [32, 256], strides = [1, 1]} : vector<48x256xf32> to vector<32x256xf32>
    %cst_10 = arith.constant 0.000000e+00 : f32
    %38 = vector.broadcast %cst_10 : f32 to vector<32x256xf32>
    %39 = vector.shape_cast %14 : vector<32x1xi1> to vector<32x1xi1>
    %40 = vector.broadcast %39 : vector<32x1xi1> to vector<32x256xi1>
    %41 = arith.select %40, %37, %38 : vector<32x256xi1>, vector<32x256xf32>
    %42 = vector.extract_strided_slice %26 {offsets = [7, 0], sizes = [32, 256], strides = [1, 1]} : vector<48x256xf32> to vector<32x256xf32>
    %cst_11 = arith.constant 0.000000e+00 : f32
    %43 = vector.broadcast %cst_11 : f32 to vector<32x256xf32>
    %44 = vector.shape_cast %10 : vector<32x1xi1> to vector<32x1xi1>
    %45 = vector.broadcast %44 : vector<32x1xi1> to vector<32x256xi1>
    %46 = arith.select %45, %42, %43 : vector<32x256xi1>, vector<32x256xf32>
    %47 = vector.extract_strided_slice %26 {offsets = [9, 0], sizes = [32, 256], strides = [1, 1]} : vector<48x256xf32> to vector<32x256xf32>
    %cst_12 = arith.constant 0.000000e+00 : f32
    %48 = vector.broadcast %cst_12 : f32 to vector<32x256xf32>
    %49 = vector.shape_cast %12 : vector<32x1xi1> to vector<32x1xi1>
    %50 = vector.broadcast %49 : vector<32x1xi1> to vector<32x256xi1>
    %51 = arith.select %50, %47, %48 : vector<32x256xi1>, vector<32x256xf32>
    %52 = vector.extract_strided_slice %26 {offsets = [11, 0], sizes = [32, 256], strides = [1, 1]} : vector<48x256xf32> to vector<32x256xf32>
    %cst_13 = arith.constant 0.000000e+00 : f32
    %53 = vector.broadcast %cst_13 : f32 to vector<32x256xf32>
    %54 = vector.shape_cast %15 : vector<32x1xi1> to vector<32x1xi1>
    %55 = vector.broadcast %54 : vector<32x1xi1> to vector<32x256xi1>
    %56 = arith.select %55, %52, %53 : vector<32x256xi1>, vector<32x256xf32>
    %57 = vector.extract_strided_slice %26 {offsets = [12, 0], sizes = [32, 256], strides = [1, 1]} : vector<48x256xf32> to vector<32x256xf32>
    %cst_14 = arith.constant 0.000000e+00 : f32
    %58 = vector.broadcast %cst_14 : f32 to vector<32x256xf32>
    %59 = vector.shape_cast %8 : vector<32x1xi1> to vector<32x1xi1>
    %60 = vector.broadcast %59 : vector<32x1xi1> to vector<32x256xi1>
    %61 = arith.select %60, %57, %58 : vector<32x256xi1>, vector<32x256xf32>
    %62 = vector.extract_strided_slice %26 {offsets = [13, 0], sizes = [32, 256], strides = [1, 1]} : vector<48x256xf32> to vector<32x256xf32>
    %cst_15 = arith.constant 0.000000e+00 : f32
    %63 = vector.broadcast %cst_15 : f32 to vector<32x256xf32>
    %64 = vector.shape_cast %16 : vector<32x1xi1> to vector<32x1xi1>
    %65 = vector.broadcast %64 : vector<32x1xi1> to vector<32x256xi1>
    %66 = arith.select %65, %62, %63 : vector<32x256xi1>, vector<32x256xf32>
    %67 = tpu.concatenate %31, %36, %41, %46, %24, %51, %56, %61, %66 in 1 : vector<32x256xf32>, vector<32x256xf32>, vector<32x256xf32>, vector<32x256xf32>, vector<32x256xf32>, vector<32x256xf32>, vector<32x256xf32>, vector<32x256xf32>, vector<32x256xf32> -> vector<32x2304xf32>
    %68 = arith.truncf %67 : vector<32x2304xf32> to vector<32x2304xbf16>
    %c0_16 = arith.constant 0 : index
    %c0_17 = arith.constant 0 : index
    %69 = vector.load %arg4[%c0_16, %c0_17] : memref<2304x128xbf16, #tpu.memory_space<vmem>>, vector<2304x128xbf16>
    %cst_18 = arith.constant dense<0.000000e+00> : vector<32x128xf32>
    %70 = tpu.matmul %68, %69, %cst_18 {dimension_numbers = #tpu.dot_dimension_numbers<[1], [0], [0], [1], [0, 0, 1, 1], [], []>} : vector<32x2304xbf16>, vector<2304x128xbf16>, vector<32x128xf32> -> vector<32x128xf32>
    %c0_19 = arith.constant 0 : index
    %c0_20 = arith.constant 0 : index
    %71 = vector.load %arg5[%c0_19, %c0_20] : memref<1x128xf32, #tpu.memory_space<vmem>>, vector<1x128xf32>
    %72 = vector.broadcast %71 : vector<1x128xf32> to vector<32x128xf32>
    %73 = arith.addf %70, %72 : vector<32x128xf32>
    %cst_21 = arith.constant 0.000000e+00 : f32
    %74 = vector.broadcast %cst_21 : f32 to vector<32x128xf32>
    %75 = arith.maximumf %73, %74 : vector<32x128xf32>
    %cst_22 = arith.constant 0.000000e+00 : f32
    %76 = vector.broadcast %cst_22 : f32 to vector<8x128xf32>
    %77 = tpu.concatenate %76, %75, %76 in 0 : vector<8x128xf32>, vector<32x128xf32>, vector<8x128xf32> -> vector<48x128xf32>
    %78 = vector.extract_strided_slice %77 {offsets = [3, 0], sizes = [32, 128], strides = [1, 1]} : vector<48x128xf32> to vector<32x128xf32>
    %cst_23 = arith.constant 0.000000e+00 : f32
    %79 = vector.broadcast %cst_23 : f32 to vector<32x128xf32>
    %80 = vector.shape_cast %13 : vector<32x1xi1> to vector<32x1xi1>
    %81 = vector.broadcast %80 : vector<32x1xi1> to vector<32x128xi1>
    %82 = arith.select %81, %78, %79 : vector<32x128xi1>, vector<32x128xf32>
    %83 = vector.extract_strided_slice %77 {offsets = [4, 0], sizes = [32, 128], strides = [1, 1]} : vector<48x128xf32> to vector<32x128xf32>
    %cst_24 = arith.constant 0.000000e+00 : f32
    %84 = vector.broadcast %cst_24 : f32 to vector<32x128xf32>
    %85 = vector.shape_cast %6 : vector<32x1xi1> to vector<32x1xi1>
    %86 = vector.broadcast %85 : vector<32x1xi1> to vector<32x128xi1>
    %87 = arith.select %86, %83, %84 : vector<32x128xi1>, vector<32x128xf32>
    %88 = vector.extract_strided_slice %77 {offsets = [5, 0], sizes = [32, 128], strides = [1, 1]} : vector<48x128xf32> to vector<32x128xf32>
    %cst_25 = arith.constant 0.000000e+00 : f32
    %89 = vector.broadcast %cst_25 : f32 to vector<32x128xf32>
    %90 = vector.shape_cast %14 : vector<32x1xi1> to vector<32x1xi1>
    %91 = vector.broadcast %90 : vector<32x1xi1> to vector<32x128xi1>
    %92 = arith.select %91, %88, %89 : vector<32x128xi1>, vector<32x128xf32>
    %93 = vector.extract_strided_slice %77 {offsets = [7, 0], sizes = [32, 128], strides = [1, 1]} : vector<48x128xf32> to vector<32x128xf32>
    %cst_26 = arith.constant 0.000000e+00 : f32
    %94 = vector.broadcast %cst_26 : f32 to vector<32x128xf32>
    %95 = vector.shape_cast %10 : vector<32x1xi1> to vector<32x1xi1>
    %96 = vector.broadcast %95 : vector<32x1xi1> to vector<32x128xi1>
    %97 = arith.select %96, %93, %94 : vector<32x128xi1>, vector<32x128xf32>
    %98 = vector.extract_strided_slice %77 {offsets = [9, 0], sizes = [32, 128], strides = [1, 1]} : vector<48x128xf32> to vector<32x128xf32>
    %cst_27 = arith.constant 0.000000e+00 : f32
    %99 = vector.broadcast %cst_27 : f32 to vector<32x128xf32>
    %100 = vector.shape_cast %12 : vector<32x1xi1> to vector<32x1xi1>
    %101 = vector.broadcast %100 : vector<32x1xi1> to vector<32x128xi1>
    %102 = arith.select %101, %98, %99 : vector<32x128xi1>, vector<32x128xf32>
    %103 = vector.extract_strided_slice %77 {offsets = [11, 0], sizes = [32, 128], strides = [1, 1]} : vector<48x128xf32> to vector<32x128xf32>
    %cst_28 = arith.constant 0.000000e+00 : f32
    %104 = vector.broadcast %cst_28 : f32 to vector<32x128xf32>
    %105 = vector.shape_cast %15 : vector<32x1xi1> to vector<32x1xi1>
    %106 = vector.broadcast %105 : vector<32x1xi1> to vector<32x128xi1>
    %107 = arith.select %106, %103, %104 : vector<32x128xi1>, vector<32x128xf32>
    %108 = vector.extract_strided_slice %77 {offsets = [12, 0], sizes = [32, 128], strides = [1, 1]} : vector<48x128xf32> to vector<32x128xf32>
    %cst_29 = arith.constant 0.000000e+00 : f32
    %109 = vector.broadcast %cst_29 : f32 to vector<32x128xf32>
    %110 = vector.shape_cast %8 : vector<32x1xi1> to vector<32x1xi1>
    %111 = vector.broadcast %110 : vector<32x1xi1> to vector<32x128xi1>
    %112 = arith.select %111, %108, %109 : vector<32x128xi1>, vector<32x128xf32>
    %113 = vector.extract_strided_slice %77 {offsets = [13, 0], sizes = [32, 128], strides = [1, 1]} : vector<48x128xf32> to vector<32x128xf32>
    %cst_30 = arith.constant 0.000000e+00 : f32
    %114 = vector.broadcast %cst_30 : f32 to vector<32x128xf32>
    %115 = vector.shape_cast %16 : vector<32x1xi1> to vector<32x1xi1>
    %116 = vector.broadcast %115 : vector<32x1xi1> to vector<32x128xi1>
    %117 = arith.select %116, %113, %114 : vector<32x128xi1>, vector<32x128xf32>
    %118 = tpu.concatenate %82, %87, %92, %97, %75, %102, %107, %112, %117 in 1 : vector<32x128xf32>, vector<32x128xf32>, vector<32x128xf32>, vector<32x128xf32>, vector<32x128xf32>, vector<32x128xf32>, vector<32x128xf32>, vector<32x128xf32>, vector<32x128xf32> -> vector<32x1152xf32>
    %119 = arith.truncf %118 : vector<32x1152xf32> to vector<32x1152xbf16>
    %c0_31 = arith.constant 0 : index
    %c0_32 = arith.constant 0 : index
    %120 = vector.load %arg6[%c0_31, %c0_32] : memref<1152x256xbf16, #tpu.memory_space<vmem>>, vector<1152x256xbf16>
    %cst_33 = arith.constant dense<0.000000e+00> : vector<32x256xf32>
    %121 = tpu.matmul %119, %120, %cst_33 {dimension_numbers = #tpu.dot_dimension_numbers<[1], [0], [0], [1], [0, 0, 1, 1], [], []>} : vector<32x1152xbf16>, vector<1152x256xbf16>, vector<32x256xf32> -> vector<32x256xf32>
    %c0_34 = arith.constant 0 : index
    %c0_35 = arith.constant 0 : index
    %122 = vector.load %arg7[%c0_34, %c0_35] : memref<1x256xf32, #tpu.memory_space<vmem>>, vector<1x256xf32>
    %123 = vector.broadcast %122 : vector<1x256xf32> to vector<32x256xf32>
    %124 = arith.addf %121, %123 : vector<32x256xf32>
    %cst_36 = arith.constant 0.000000e+00 : f32
    %125 = vector.broadcast %cst_36 : f32 to vector<32x256xf32>
    %126 = arith.maximumf %124, %125 : vector<32x256xf32>
    %cst_37 = arith.constant 0.000000e+00 : f32
    %127 = vector.broadcast %cst_37 : f32 to vector<8x256xf32>
    %128 = tpu.concatenate %127, %126, %127 in 0 : vector<8x256xf32>, vector<32x256xf32>, vector<8x256xf32> -> vector<48x256xf32>
    %129 = vector.extract_strided_slice %128 {offsets = [3, 0], sizes = [32, 256], strides = [1, 1]} : vector<48x256xf32> to vector<32x256xf32>
    %cst_38 = arith.constant 0.000000e+00 : f32
    %130 = vector.broadcast %cst_38 : f32 to vector<32x256xf32>
    %131 = vector.shape_cast %13 : vector<32x1xi1> to vector<32x1xi1>
    %132 = vector.broadcast %131 : vector<32x1xi1> to vector<32x256xi1>
    %133 = arith.select %132, %129, %130 : vector<32x256xi1>, vector<32x256xf32>
    %134 = vector.extract_strided_slice %128 {offsets = [4, 0], sizes = [32, 256], strides = [1, 1]} : vector<48x256xf32> to vector<32x256xf32>
    %cst_39 = arith.constant 0.000000e+00 : f32
    %135 = vector.broadcast %cst_39 : f32 to vector<32x256xf32>
    %136 = vector.shape_cast %6 : vector<32x1xi1> to vector<32x1xi1>
    %137 = vector.broadcast %136 : vector<32x1xi1> to vector<32x256xi1>
    %138 = arith.select %137, %134, %135 : vector<32x256xi1>, vector<32x256xf32>
    %139 = vector.extract_strided_slice %128 {offsets = [5, 0], sizes = [32, 256], strides = [1, 1]} : vector<48x256xf32> to vector<32x256xf32>
    %cst_40 = arith.constant 0.000000e+00 : f32
    %140 = vector.broadcast %cst_40 : f32 to vector<32x256xf32>
    %141 = vector.shape_cast %14 : vector<32x1xi1> to vector<32x1xi1>
    %142 = vector.broadcast %141 : vector<32x1xi1> to vector<32x256xi1>
    %143 = arith.select %142, %139, %140 : vector<32x256xi1>, vector<32x256xf32>
    %144 = vector.extract_strided_slice %128 {offsets = [7, 0], sizes = [32, 256], strides = [1, 1]} : vector<48x256xf32> to vector<32x256xf32>
    %cst_41 = arith.constant 0.000000e+00 : f32
    %145 = vector.broadcast %cst_41 : f32 to vector<32x256xf32>
    %146 = vector.shape_cast %10 : vector<32x1xi1> to vector<32x1xi1>
    %147 = vector.broadcast %146 : vector<32x1xi1> to vector<32x256xi1>
    %148 = arith.select %147, %144, %145 : vector<32x256xi1>, vector<32x256xf32>
    %149 = vector.extract_strided_slice %128 {offsets = [9, 0], sizes = [32, 256], strides = [1, 1]} : vector<48x256xf32> to vector<32x256xf32>
    %cst_42 = arith.constant 0.000000e+00 : f32
    %150 = vector.broadcast %cst_42 : f32 to vector<32x256xf32>
    %151 = vector.shape_cast %12 : vector<32x1xi1> to vector<32x1xi1>
    %152 = vector.broadcast %151 : vector<32x1xi1> to vector<32x256xi1>
    %153 = arith.select %152, %149, %150 : vector<32x256xi1>, vector<32x256xf32>
    %154 = vector.extract_strided_slice %128 {offsets = [11, 0], sizes = [32, 256], strides = [1, 1]} : vector<48x256xf32> to vector<32x256xf32>
    %cst_43 = arith.constant 0.000000e+00 : f32
    %155 = vector.broadcast %cst_43 : f32 to vector<32x256xf32>
    %156 = vector.shape_cast %15 : vector<32x1xi1> to vector<32x1xi1>
    %157 = vector.broadcast %156 : vector<32x1xi1> to vector<32x256xi1>
    %158 = arith.select %157, %154, %155 : vector<32x256xi1>, vector<32x256xf32>
    %159 = vector.extract_strided_slice %128 {offsets = [12, 0], sizes = [32, 256], strides = [1, 1]} : vector<48x256xf32> to vector<32x256xf32>
    %cst_44 = arith.constant 0.000000e+00 : f32
    %160 = vector.broadcast %cst_44 : f32 to vector<32x256xf32>
    %161 = vector.shape_cast %8 : vector<32x1xi1> to vector<32x1xi1>
    %162 = vector.broadcast %161 : vector<32x1xi1> to vector<32x256xi1>
    %163 = arith.select %162, %159, %160 : vector<32x256xi1>, vector<32x256xf32>
    %164 = vector.extract_strided_slice %128 {offsets = [13, 0], sizes = [32, 256], strides = [1, 1]} : vector<48x256xf32> to vector<32x256xf32>
    %cst_45 = arith.constant 0.000000e+00 : f32
    %165 = vector.broadcast %cst_45 : f32 to vector<32x256xf32>
    %166 = vector.shape_cast %16 : vector<32x1xi1> to vector<32x1xi1>
    %167 = vector.broadcast %166 : vector<32x1xi1> to vector<32x256xi1>
    %168 = arith.select %167, %164, %165 : vector<32x256xi1>, vector<32x256xf32>
    %169 = tpu.concatenate %133, %138, %143, %148, %126, %153, %158, %163, %168 in 1 : vector<32x256xf32>, vector<32x256xf32>, vector<32x256xf32>, vector<32x256xf32>, vector<32x256xf32>, vector<32x256xf32>, vector<32x256xf32>, vector<32x256xf32>, vector<32x256xf32> -> vector<32x2304xf32>
    %170 = arith.truncf %169 : vector<32x2304xf32> to vector<32x2304xbf16>
    %c0_46 = arith.constant 0 : index
    %c0_47 = arith.constant 0 : index
    %171 = vector.load %arg8[%c0_46, %c0_47] : memref<2304x128xbf16, #tpu.memory_space<vmem>>, vector<2304x128xbf16>
    %cst_48 = arith.constant dense<0.000000e+00> : vector<32x128xf32>
    %172 = tpu.matmul %170, %171, %cst_48 {dimension_numbers = #tpu.dot_dimension_numbers<[1], [0], [0], [1], [0, 0, 1, 1], [], []>} : vector<32x2304xbf16>, vector<2304x128xbf16>, vector<32x128xf32> -> vector<32x128xf32>
    %c0_49 = arith.constant 0 : index
    %c0_50 = arith.constant 0 : index
    %173 = vector.load %arg9[%c0_49, %c0_50] : memref<1x128xf32, #tpu.memory_space<vmem>>, vector<1x128xf32>
    %174 = vector.broadcast %173 : vector<1x128xf32> to vector<32x128xf32>
    %175 = arith.addf %172, %174 : vector<32x128xf32>
    %cst_51 = arith.constant 0.000000e+00 : f32
    %176 = vector.broadcast %cst_51 : f32 to vector<32x128xf32>
    %177 = arith.subf %176, %175 : vector<32x128xf32>
    %178 = math.exp %177 : vector<32x128xf32>
    %cst_52 = arith.constant 1.000000e+00 : f32
    %179 = vector.broadcast %cst_52 : f32 to vector<32x128xf32>
    %180 = arith.addf %179, %178 : vector<32x128xf32>
    %181 = tpu.reciprocal %180 {approx = true} : vector<32x128xf32> -> vector<32x128xf32>
    %c0_53 = arith.constant 0 : index
    %c0_54 = arith.constant 0 : index
    %182 = vector.load %arg10[%c0_53, %c0_54] : memref<32x128xf32, #tpu.memory_space<vmem>>, vector<32x128xf32>
    tpu.vector_store %arg10[%c0_53, %c0_54], %181 {strides = array<i32>} : memref<32x128xf32, #tpu.memory_space<vmem>>, vector<32x128xf32>,
    return
  }
  func.func @transform_0(%arg0: i32) -> (i32, i32) {
    %c0_i32 = arith.constant 0 : i32
    %c0_i32_0 = arith.constant 0 : i32
    return %arg0, %c0_i32 : i32, i32
  }
  func.func @transform_1(%arg0: i32) -> (i32, i32) {
    %c0_i32 = arith.constant 0 : i32
    %c0_i32_0 = arith.constant 0 : i32
    %c0_i32_1 = arith.constant 0 : i32
    return %c0_i32, %c0_i32_0 : i32, i32
  }
  func.func @transform_2(%arg0: i32) -> (i32, i32) {
    %c0_i32 = arith.constant 0 : i32
    %c0_i32_0 = arith.constant 0 : i32
    %c0_i32_1 = arith.constant 0 : i32
    return %c0_i32, %c0_i32_0 : i32, i32
  }
  func.func @transform_3(%arg0: i32) -> (i32, i32) {
    %c0_i32 = arith.constant 0 : i32
    %c0_i32_0 = arith.constant 0 : i32
    %c0_i32_1 = arith.constant 0 : i32
    return %c0_i32, %c0_i32_0 : i32, i32
  }
  func.func @transform_4(%arg0: i32) -> (i32, i32) {
    %c0_i32 = arith.constant 0 : i32
    %c0_i32_0 = arith.constant 0 : i32
    %c0_i32_1 = arith.constant 0 : i32
    return %c0_i32, %c0_i32_0 : i32, i32
  }
  func.func @transform_5(%arg0: i32) -> (i32, i32) {
    %c0_i32 = arith.constant 0 : i32
    %c0_i32_0 = arith.constant 0 : i32
    %c0_i32_1 = arith.constant 0 : i32
    return %c0_i32, %c0_i32_0 : i32, i32
  }
  func.func @transform_6(%arg0: i32) -> (i32, i32) {
    %c0_i32 = arith.constant 0 : i32
    %c0_i32_0 = arith.constant 0 : i32
    %c0_i32_1 = arith.constant 0 : i32
    return %c0_i32, %c0_i32_0 : i32, i32
  }
  func.func @transform_7(%arg0: i32) -> (i32, i32) {
    %c0_i32 = arith.constant 0 : i32
    %c0_i32_0 = arith.constant 0 : i32
    %c0_i32_1 = arith.constant 0 : i32
    return %c0_i32, %c0_i32_0 : i32, i32
  }
  func.func @transform_8(%arg0: i32) -> (i32, i32) {
    %c0_i32 = arith.constant 0 : i32
    %c0_i32_0 = arith.constant 0 : i32
    %c0_i32_1 = arith.constant 0 : i32
    return %c0_i32, %c0_i32_0 : i32, i32
  }
  func.func @transform_9(%arg0: i32) -> (i32, i32) {
    %c0_i32 = arith.constant 0 : i32
    %c0_i32_0 = arith.constant 0 : i32
    return %arg0, %c0_i32 : i32, i32
  }
}

</mosaic_0001>

<llo_original>
// kernel: anomaly_detector_forward.1
$region0: #{anomaly_detector_forward.1}
  #allocation0 [shape = 'u32[]', space=smem, size = 0x4, offset = 0x4, fixed_abs, tag = 'smem constant byte address 0x4 - core index']
  #allocation1 [shape = 'u32[72,128]{1,0:T(1,128)}', space=vmem, size = 0x9000, scoped, tag = 'internal scratch']
  %s0 = inlined_call_operand.vmem [shape: bf16[32,192], index: 0, kind: input, shape index: {}]
  %s1 = inlined_call_operand.hbm [shape: bf16[192,256], index: 1, kind: input, shape index: {}]
  %s2 = inlined_call_operand.vmem [shape: f32[1,256], index: 2, kind: input, shape index: {}]
  %s3 = inlined_call_operand.vmem [shape: bf16[2304,128], index: 3, kind: input, shape index: {}]
  %s4 = inlined_call_operand.vmem [shape: f32[1,128], index: 4, kind: input, shape index: {}]
  %s5 = inlined_call_operand.vmem [shape: bf16[1152,256], index: 5, kind: input, shape index: {}]
  %s6 = inlined_call_operand.vmem [shape: f32[1,256], index: 6, kind: input, shape index: {}]
  %s7 = inlined_call_operand.hbm [shape: bf16[2304,128], index: 7, kind: input, shape index: {}]
  %s8 = inlined_call_operand.vmem [shape: f32[1,128], index: 8, kind: input, shape index: {}]
  %s9 = inlined_call_operand.vmem [shape: f32[32,128], index: 9, kind: output, shape index: {}]
  %s10 = sld [smem:[#allocation0]]
  $region54: #{anomaly_detector_forward.1} parent=0
    _
  %s12 = ssub.s32 1, %s10
  %s13 = scalar_select 0, %s12, %s10
  $region1: #{anomaly_detector_forward.1} parent=0
    #allocation2 [shape = 'u8[98304]{0}', space=vmem, size = 0x18000, scoped, tag = 'input window, operand 1, single buffered']
    #allocation3 [shape = 's32[1]{0}', space=sflag, size = 0x4, scoped, tag = 'scoped memory for anomaly_detector_forward.1']
    #allocation4 [shape = 'u8[589824]{0}', space=vmem, size = 0x90000, scoped, tag = 'input window, operand 7, single buffered']
    #allocation5 [shape = 's32[1]{0}', space=sflag, size = 0x4, scoped, tag = 'scoped memory for anomaly_detector_forward.1']
    %14 = vsyncpa [#allocation3], 0
    %15 = vsyncpa [#allocation5], 0
    // Predicated region
    $region2: #{anomaly_detector_forward.1} parent=1 // pred_check
      _
    $region3: #{anomaly_detector_forward.1} parent=1 // pred_check_branch
      %17 = sbr.rel (0) target = $region5
    $region4: #{anomaly_detector_forward.1} parent=1 // pred_region
      _
    $region5: #{anomaly_detector_forward.1} parent=1 // pred_fallthru
      _
    // Predicated region
    $region6: #{anomaly_detector_forward.1} parent=1 // pred_check
      _
    $region7: #{anomaly_detector_forward.1} parent=1 // pred_check_branch
      %19 = sbr.rel (0) target = $region9
    $region8: #{anomaly_detector_forward.1} parent=1 // pred_region
      %21 = vsyncadd [#allocation3], 0
      %s22 = sshll.u32 %s1, 4
      %s23 = int_to_ptr.hbm [resolvable:$true] %s22
      %s24 = sshll.u32 [#allocation2], 4
      %s25 = int_to_ptr.vmem [resolvable:$true] %s24
      %30 = dma.hbm_to_vmem [thread:$0]  %s23, 3072, %s25, [#allocation3], 128, 128, 8
    $region9: #{anomaly_detector_forward.1} parent=1 // pred_fallthru
      _
    // Predicated region
    $region10: #{anomaly_detector_forward.1} parent=1 // pred_check
      _
    $region11: #{anomaly_detector_forward.1} parent=1 // pred_check_branch
      %32 = sbr.rel (0) target = $region13
    $region12: #{anomaly_detector_forward.1} parent=1 // pred_region
      _
    $region13: #{anomaly_detector_forward.1} parent=1 // pred_fallthru
      _
    // Predicated region
    $region14: #{anomaly_detector_forward.1} parent=1 // pred_check
      _
    $region15: #{anomaly_detector_forward.1} parent=1 // pred_check_branch
      %34 = sbr.rel (0) target = $region17
    $region16: #{anomaly_detector_forward.1} parent=1 // pred_region
      _
    $region17: #{anomaly_detector_forward.1} parent=1 // pred_fallthru
      _
    // Predicated region
    $region18: #{anomaly_detector_forward.1} parent=1 // pred_check
      _
    $region19: #{anomaly_detector_forward.1} parent=1 // pred_check_branch
      %36 = sbr.rel (0) target = $region21
    $region20: #{anomaly_detector_forward.1} parent=1 // pred_region
      _
    $region21: #{anomaly_detector_forward.1} parent=1 // pred_fallthru
      _
    // Predicated region
    $region22: #{anomaly_detector_forward.1} parent=1 // pred_check
      _
    $region23: #{anomaly_detector_forward.1} parent=1 // pred_check_branch
      %38 = sbr.rel (0) target = $region25
    $region24: #{anomaly_detector_forward.1} parent=1 // pred_region
      _
    $region25: #{anomaly_detector_forward.1} parent=1 // pred_fallthru
      _
    // Predicated region
    $region26: #{anomaly_detector_forward.1} parent=1 // pred_check
      _
    $region27: #{anomaly_detector_forward.1} parent=1 // pred_check_branch
      %40 = sbr.rel (0) target = $region29
    $region28: #{anomaly_detector_forward.1} parent=1 // pred_region
      _
    $region29: #{anomaly_detector_forward.1} parent=1 // pred_fallthru
      _
    // Predicated region
    $region30: #{anomaly_detector_forward.1} parent=1 // pred_check
      _
    $region31: #{anomaly_detector_forward.1} parent=1 // pred_check_branch
      %42 = sbr.rel (0) target = $region33
    $region32: #{anomaly_detector_forward.1} parent=1 // pred_region
      %44 = vsyncadd [#allocation5], 0
      %s45 = sshll.u32 %s7, 4
      %s46 = int_to_ptr.hbm [resolvable:$true] %s45
      %s47 = sshll.u32 [#allocation4], 4
      %s48 = int_to_ptr.vmem [resolvable:$true] %s47
      %53 = dma.hbm_to_vmem [thread:$0]  %s46, 18432, %s48, [#allocation5], 64, 64, 4
    $region33: #{anomaly_detector_forward.1} parent=1 // pred_fallthru
      _
    // Predicated region
    $region34: #{anomaly_detector_forward.1} parent=1 // pred_check
      _
    $region35: #{anomaly_detector_forward.1} parent=1 // pred_check_branch
      %55 = sbr.rel (0) target = $region37
    $region36: #{anomaly_detector_forward.1} parent=1 // pred_region
      _
    $region37: #{anomaly_detector_forward.1} parent=1 // pred_fallthru
      _
    // Predicated region
    $region38: #{anomaly_detector_forward.1} parent=1 // pred_check
      _
    $region39: #{anomaly_detector_forward.1} parent=1 // pred_check_branch
      %57 = sbr.rel (0) target = $region41
    $region40: #{anomaly_detector_forward.1} parent=1 // pred_region
      %59 = dma.done [#allocation3], 3072
    $region41: #{anomaly_detector_forward.1} parent=1 // pred_fallthru
      _
    // Predicated region
    $region42: #{anomaly_detector_forward.1} parent=1 // pred_check
      _
    $region43: #{anomaly_detector_forward.1} parent=1 // pred_check_branch
      %61 = sbr.rel (0) target = $region45
    $region44: #{anomaly_detector_forward.1} parent=1 // pred_region
      %63 = dma.done [#allocation5], 18432
    $region45: #{anomaly_detector_forward.1} parent=1 // pred_fallthru
      _
    %v65 = vlaneseq
    %v66 = vshrl.u32 %v65, 7
    %v67 = vadd.s32 %v66, 8
    %v68 = vadd.s32 %v66, 16
    %v69 = vadd.s32 %v66, 24
    %v70 = vand.u32 %v66, 15
    %v71 = vand.u32 %v67, 15
    %v72 = vand.u32 %v68, 15
    %v73 = vand.u32 %v69, 15
    %v74 = vand.u32 %v66, 3
    %v75 = vand.u32 %v67, 3
    %v76 = vand.u32 %v68, 3
    %v77 = vand.u32 %v69, 3
    %vm78 = vcmp.ge.s32.totalorder %v70, 4
    %vm79 = vcmp.ge.s32.totalorder %v71, 4
    %vm80 = vcmp.ge.s32.totalorder %v72, 4
    %vm81 = vcmp.ge.s32.totalorder %v73, 4
    %vm82 = vcmp.lt.s32.totalorder %v70, 12
    %vm83 = vcmp.lt.s32.totalorder %v71, 12
    %vm84 = vcmp.lt.s32.totalorder %v72, 12
    %vm85 = vcmp.lt.s32.totalorder %v73, 12
    %vm86 = vcmp.ge.s32.totalorder %v74, 1
    %vm87 = vcmp.ge.s32.totalorder %v75, 1
    %vm88 = vcmp.ge.s32.totalorder %v76, 1
    %vm89 = vcmp.ge.s32.totalorder %v77, 1
    %vm90 = vcmp.lt.s32.totalorder %v74, 3
    %vm91 = vcmp.lt.s32.totalorder %v75, 3
    %vm92 = vcmp.lt.s32.totalorder %v76, 3
    %vm93 = vcmp.lt.s32.totalorder %v77, 3
    %vm94 = vmand %vm78, %vm86
    %vm95 = vmand %vm79, %vm87
    %vm96 = vmand %vm80, %vm88
    %vm97 = vmand %vm81, %vm89
    %vm98 = vmand %vm78, %vm90
    %vm99 = vmand %vm79, %vm91
    %vm100 = vmand %vm80, %vm92
    %vm101 = vmand %vm81, %vm93
    %vm102 = vmand %vm82, %vm86
    %vm103 = vmand %vm83, %vm87
    %vm104 = vmand %vm84, %vm88
    %vm105 = vmand %vm85, %vm89
    %vm106 = vmand %vm82, %vm90
    %vm107 = vmand %vm83, %vm91
    %vm108 = vmand %vm84, %vm92
    %vm109 = vmand %vm85, %vm93
    %v110 = vld [vmem:[%s0] sm:$0xff]
    %v111 = vld [vmem:[%s0 + $0x8] sm:$0xff]
    %v112 = vld [vmem:[%s0 + $0x10] sm:$0xff]
    %v113 = vld [vmem:[%s0 + $0x18] sm:$0xff]
    %v114 = vld [vmem:[#allocation2] sm:$0xff]
    %v115 = vld [vmem:[#allocation2 + $0x8] sm:$0xff]
    %v116 = vld [vmem:[#allocation2 + $0x10] sm:$0xff]
    %v117 = vld [vmem:[#allocation2 + $0x18] sm:$0xff]
    %v118 = vld [vmem:[#allocation2 + $0x20] sm:$0xff]
    %v119 = vld [vmem:[#allocation2 + $0x28] sm:$0xff]
    %v120 = vld [vmem:[#allocation2 + $0x30] sm:$0xff]
    %v121 = vld [vmem:[#allocation2 + $0x38] sm:$0xff]
    %v122 = vld [vmem:[#allocation2 + $0x40] sm:$0xff]
    %v123 = vld [vmem:[#allocation2 + $0x48] sm:$0xff]
    %v124 = vld [vmem:[#allocation2 + $0x50] sm:$0xff]
    %v125 = vld [vmem:[#allocation2 + $0x58] sm:$0xff]
    %v126 = vld [vmem:[#allocation2 + $0x60] sm:$0xff]
    %v127 = vld [vmem:[#allocation2 + $0x68] sm:$0xff]
    %v128 = vld [vmem:[#allocation2 + $0x70] sm:$0xff]
    %v129 = vld [vmem:[#allocation2 + $0x78] sm:$0xff]
    %v130 = vld [vmem:[#allocation2 + $0x80] sm:$0xff]
    %v131 = vld [vmem:[#allocation2 + $0x88] sm:$0xff]
    %v132 = vld [vmem:[#allocation2 + $0x90] sm:$0xff]
    %v133 = vld [vmem:[#allocation2 + $0x98] sm:$0xff]
    %v134 = vld [vmem:[#allocation2 + $0xa0] sm:$0xff]
    %v135 = vld [vmem:[#allocation2 + $0xa8] sm:$0xff]
    %v136 = vld [vmem:[#allocation2 + $0xb0] sm:$0xff]
    %v137 = vld [vmem:[#allocation2 + $0xb8] sm:$0xff]
    %v138 = vld [vmem:[%s2] sm:$0x3]
    %v140 = vperm.slane %v138, 0
    %v141 = vperm.slane %v138, 1
    %v148 = vunpack.c.l.b16 %v110
    %v149 = vunpack.c.h.b16 %v110
    %v150 = vunpack.c.l.b16 %v111
    %v151 = vunpack.c.h.b16 %v111
    %v152 = vunpack.c.l.b16 %v112
    %v153 = vunpack.c.h.b16 %v112
    %v154 = vunpack.c.l.b16 %v113
    %v155 = vunpack.c.h.b16 %v113
    %v156 = vpack.c.b16 %v150, %v148
    %v157 = vpack.c.b16 %v151, %v149
    %v158 = vpack.c.b16 %v154, %v152
    %v159 = vpack.c.b16 %v155, %v153
    %v186 = vunpack.c.l.b16 %v114
    %v187 = vunpack.c.h.b16 %v114
    %v188 = vunpack.c.l.b16 %v115
    %v189 = vunpack.c.h.b16 %v115
    %v190 = vunpack.c.l.b16 %v116
    %v191 = vunpack.c.h.b16 %v116
    %v192 = vunpack.c.l.b16 %v117
    %v193 = vunpack.c.h.b16 %v117
    %v194 = vunpack.c.l.b16 %v118
    %v195 = vunpack.c.h.b16 %v118
    %v196 = vunpack.c.l.b16 %v119
    %v197 = vunpack.c.h.b16 %v119
    %v198 = vunpack.c.l.b16 %v120
    %v199 = vunpack.c.h.b16 %v120
    %v200 = vunpack.c.l.b16 %v121
    %v201 = vunpack.c.h.b16 %v121
    %v202 = vunpack.c.l.b16 %v122
    %v203 = vunpack.c.h.b16 %v122
    %v204 = vunpack.c.l.b16 %v123
    %v205 = vunpack.c.h.b16 %v123
    %v206 = vunpack.c.l.b16 %v124
    %v207 = vunpack.c.h.b16 %v124
    %v208 = vunpack.c.l.b16 %v125
    %v209 = vunpack.c.h.b16 %v125
    %v210 = vunpack.c.l.b16 %v126
    %v211 = vunpack.c.h.b16 %v126
    %v212 = vunpack.c.l.b16 %v127
    %v213 = vunpack.c.h.b16 %v127
    %v214 = vunpack.c.l.b16 %v128
    %v215 = vunpack.c.h.b16 %v128
    %v216 = vunpack.c.l.b16 %v129
    %v217 = vunpack.c.h.b16 %v129
    %v218 = vunpack.c.l.b16 %v130
    %v219 = vunpack.c.h.b16 %v130
    %v220 = vunpack.c.l.b16 %v131
    %v221 = vunpack.c.h.b16 %v131
    %v222 = vunpack.c.l.b16 %v132
    %v223 = vunpack.c.h.b16 %v132
    %v224 = vunpack.c.l.b16 %v133
    %v225 = vunpack.c.h.b16 %v133
    %v226 = vunpack.c.l.b16 %v134
    %v227 = vunpack.c.h.b16 %v134
    %v228 = vunpack.c.l.b16 %v135
    %v229 = vunpack.c.h.b16 %v135
    %v230 = vunpack.c.l.b16 %v136
    %v231 = vunpack.c.h.b16 %v136
    %v232 = vunpack.c.l.b16 %v137
    %v233 = vunpack.c.h.b16 %v137
    %v234 = vpack.c.b16 %v188, %v186
    %v235 = vpack.c.b16 %v189, %v187
    %v236 = vpack.c.b16 %v192, %v190
    %v237 = vpack.c.b16 %v193, %v191
    %v238 = vpack.c.b16 %v196, %v194
    %v239 = vpack.c.b16 %v197, %v195
    %v240 = vpack.c.b16 %v200, %v198
    %v241 = vpack.c.b16 %v201, %v199
    %v242 = vpack.c.b16 %v204, %v202
    %v243 = vpack.c.b16 %v205, %v203
    %v244 = vpack.c.b16 %v208, %v206
    %v245 = vpack.c.b16 %v209, %v207
    %v246 = vpack.c.b16 %v212, %v210
    %v247 = vpack.c.b16 %v213, %v211
    %v248 = vpack.c.b16 %v216, %v214
    %v249 = vpack.c.b16 %v217, %v215
    %v250 = vpack.c.b16 %v220, %v218
    %v251 = vpack.c.b16 %v221, %v219
    %v252 = vpack.c.b16 %v224, %v222
    %v253 = vpack.c.b16 %v225, %v223
    %v254 = vpack.c.b16 %v228, %v226
    %v255 = vpack.c.b16 %v229, %v227
    %v256 = vpack.c.b16 %v232, %v230
    %v257 = vpack.c.b16 %v233, %v231
    %vm282 = vcmask 523264
    %v284 = vsel %vm282, %v157, 0
    %v287 = vsel %vm282, %v159, 0
    %289 = vmatpush.bf16.msra.mxu0 %v248
    %290 = vmatpush.bf16.msra.mxu0 %v246
    %291 = vmatpush.bf16.msra.mxu0 %v244
    %292 = vmatpush.bf16.msra.mxu0 %v242
    %293 = vmatpush.bf16.msra.mxu0 %v240
    %294 = vmatpush.bf16.msra.mxu0 %v238
    %295 = vmatpush.bf16.msra.mxu0 %v236
    %296 = vmatpush.bf16.msra.mxu0 %v234
    %297 = vmatmul.bf16.gmra.mxu0 %v156
    %v298 = vpop.f32.mrf.mxu0
    %v299 = vadd.f32 %v140, %v298
    %v300 = vpop.f32.mrf.mxu0
    %v301 = vadd.f32 %v140, %v300
    %302 = vmatmul.bf16.gmra.mxu0 %v158
    %v303 = vpop.f32.mrf.mxu0
    %v304 = vadd.f32 %v140, %v303
    %v305 = vpop.f32.mrf.mxu0
    %v306 = vadd.f32 %v140, %v305
    %307 = vdwg.mxu0
    %308 = vmatpush.bf16.msra.mxu0 0
    %309 = vmatpush.bf16.msra.mxu0 0
    %310 = vmatpush.bf16.msra.mxu0 0
    %311 = vmatpush.bf16.msra.mxu0 0
    %312 = vmatpush.bf16.msra.mxu0 %v256
    %313 = vmatpush.bf16.msra.mxu0 %v254
    %314 = vmatpush.bf16.msra.mxu0 %v252
    %315 = vmatpush.bf16.msra.mxu0 %v250
    %316 = vmatmul.bf16.gmra.mxu0 %v284
    %v317 = vpop.f32.mrf.mxu0
    %v318 = vadd.f32 %v299, %v317
    %v319 = vpop.f32.mrf.mxu0
    %v320 = vadd.f32 %v301, %v319
    %321 = vmatmul.bf16.gmra.mxu0 %v287
    %v322 = vpop.f32.mrf.mxu0
    %v323 = vadd.f32 %v304, %v322
    %v324 = vpop.f32.mrf.mxu0
    %v325 = vadd.f32 %v306, %v324
    %326 = vdwg.mxu0
    %327 = vmatpush.bf16.msra.mxu0 %v249
    %328 = vmatpush.bf16.msra.mxu0 %v247
    %329 = vmatpush.bf16.msra.mxu0 %v245
    %330 = vmatpush.bf16.msra.mxu0 %v243
    %331 = vmatpush.bf16.msra.mxu0 %v241
    %332 = vmatpush.bf16.msra.mxu0 %v239
    %333 = vmatpush.bf16.msra.mxu0 %v237
    %334 = vmatpush.bf16.msra.mxu0 %v235
    %335 = vmatmul.bf16.gmra.mxu0 %v156
    %v336 = vpop.f32.mrf.mxu0
    %v337 = vadd.f32 %v141, %v336
    %v338 = vpop.f32.mrf.mxu0
    %v339 = vadd.f32 %v141, %v338
    %340 = vmatmul.bf16.gmra.mxu0 %v158
    %v341 = vpop.f32.mrf.mxu0
    %v342 = vadd.f32 %v141, %v341
    %v343 = vpop.f32.mrf.mxu0
    %v344 = vadd.f32 %v141, %v343
    %345 = vdwg.mxu0
    %346 = vmatpush.bf16.msra.mxu0 0
    %347 = vmatpush.bf16.msra.mxu0 0
    %348 = vmatpush.bf16.msra.mxu0 0
    %349 = vmatpush.bf16.msra.mxu0 0
    %350 = vmatpush.bf16.msra.mxu0 %v257
    %351 = vmatpush.bf16.msra.mxu0 %v255
    %352 = vmatpush.bf16.msra.mxu0 %v253
    %353 = vmatpush.bf16.msra.mxu0 %v251
    %354 = vmatmul.bf16.gmra.mxu0 %v284
    %v355 = vpop.f32.mrf.mxu0
    %v356 = vadd.f32 %v337, %v355
    %v357 = vpop.f32.mrf.mxu0
    %v358 = vadd.f32 %v339, %v357
    %359 = vmatmul.bf16.gmra.mxu0 %v287
    %v360 = vpop.f32.mrf.mxu0
    %v361 = vadd.f32 %v342, %v360
    %v362 = vpop.f32.mrf.mxu0
    %v363 = vadd.f32 %v344, %v362
    %364 = vdwg.mxu0
    %v365 = vmax.f32 %v318, 0.0
    %v366 = vmax.f32 %v356, 0.0
    %v367 = vmax.f32 %v320, 0.0
    %v368 = vmax.f32 %v358, 0.0
    %v369 = vmax.f32 %v323, 0.0
    %v370 = vmax.f32 %v361, 0.0
    %v371 = vmax.f32 %v325, 0.0
    %v372 = vmax.f32 %v363, 0.0
    %v373 = vsel %vm94, 1, 0
    %v374 = vsel %vm95, 1, 0
    %v375 = vsel %vm96, 1, 0
    %v376 = vsel %vm97, 1, 0
    %vm377 = vcmp.eq.s32.totalorder %v373, 1
    %vm378 = vcmp.eq.s32.totalorder %v374, 1
    %vm379 = vcmp.eq.s32.totalorder %v375, 1
    %vm380 = vcmp.eq.s32.totalorder %v376, 1
    %vm390 = vcmask 1044480
    %v391 = vrot.slane 0.0, 3
    %v392 = vrot.slane %v365, 3
    %v393 = vsel %vm390, %v391, %v392
    %v394 = vrot.slane %v366, 3
    %v395 = vsel %vm390, %v391, %v394
    %v396 = vrot.slane %v367, 3
    %v397 = vsel %vm390, %v392, %v396
    %v398 = vrot.slane %v368, 3
    %v399 = vsel %vm390, %v394, %v398
    %v400 = vrot.slane %v369, 3
    %v401 = vsel %vm390, %v396, %v400
    %v402 = vrot.slane %v370, 3
    %v403 = vsel %vm390, %v398, %v402
    %v404 = vrot.slane %v371, 3
    %v405 = vsel %vm390, %v400, %v404
    %v406 = vrot.slane %v372, 3
    %v407 = vsel %vm390, %v402, %v406
    %v416 = vsel %vm377, %v393, 0.0
    %v417 = vsel %vm377, %v395, 0.0
    %v418 = vsel %vm378, %v397, 0.0
    %v419 = vsel %vm378, %v399, 0.0
    %v420 = vsel %vm379, %v401, 0.0
    %v421 = vsel %vm379, %v403, 0.0
    %v422 = vsel %vm380, %v405, 0.0
    %v423 = vsel %vm380, %v407, 0.0
    %v424 = vsel %vm78, 1, 0
    %v425 = vsel %vm79, 1, 0
    %v426 = vsel %vm80, 1, 0
    %v427 = vsel %vm81, 1, 0
    %vm428 = vcmp.eq.s32.totalorder %v424, 1
    %vm429 = vcmp.eq.s32.totalorder %v425, 1
    %vm430 = vcmp.eq.s32.totalorder %v426, 1
    %vm431 = vcmp.eq.s32.totalorder %v427, 1
    %vm432 = vcmask 1043456
    %v433 = vrot.slane 0.0, 4
    %v434 = vrot.slane %v365, 4
    %v435 = vsel %vm432, %v433, %v434
    %v436 = vrot.slane %v366, 4
    %v437 = vsel %vm432, %v433, %v436
    %v438 = vrot.slane %v367, 4
    %v439 = vsel %vm432, %v434, %v438
    %v440 = vrot.slane %v368, 4
    %v441 = vsel %vm432, %v436, %v440
    %v442 = vrot.slane %v369, 4
    %v443 = vsel %vm432, %v438, %v442
    %v444 = vrot.slane %v370, 4
    %v445 = vsel %vm432, %v440, %v444
    %v446 = vrot.slane %v371, 4
    %v447 = vsel %vm432, %v442, %v446
    %v448 = vrot.slane %v372, 4
    %v449 = vsel %vm432, %v444, %v448
    %v458 = vsel %vm428, %v435, 0.0
    %v459 = vsel %vm428, %v437, 0.0
    %v460 = vsel %vm429, %v439, 0.0
    %v461 = vsel %vm429, %v441, 0.0
    %v462 = vsel %vm430, %v443, 0.0
    %v463 = vsel %vm430, %v445, 0.0
    %v464 = vsel %vm431, %v447, 0.0
    %v465 = vsel %vm431, %v449, 0.0
    %v466 = vsel %vm98, 1, 0
    %v467 = vsel %vm99, 1, 0
    %v468 = vsel %vm100, 1, 0
    %v469 = vsel %vm101, 1, 0
    %vm470 = vcmp.eq.s32.totalorder %v466, 1
    %vm471 = vcmp.eq.s32.totalorder %v467, 1
    %vm472 = vcmp.eq.s32.totalorder %v468, 1
    %vm473 = vcmp.eq.s32.totalorder %v469, 1
    %vm474 = vcmask 1042432
    %v475 = vrot.slane 0.0, 5
    %v476 = vrot.slane %v365, 5
    %v477 = vsel %vm474, %v475, %v476
    %v478 = vrot.slane %v366, 5
    %v479 = vsel %vm474, %v475, %v478
    %v480 = vrot.slane %v367, 5
    %v481 = vsel %vm474, %v476, %v480
    %v482 = vrot.slane %v368, 5
    %v483 = vsel %vm474, %v478, %v482
    %v484 = vrot.slane %v369, 5
    %v485 = vsel %vm474, %v480, %v484
    %v486 = vrot.slane %v370, 5
    %v487 = vsel %vm474, %v482, %v486
    %v488 = vrot.slane %v371, 5
    %v489 = vsel %vm474, %v484, %v488
    %v490 = vrot.slane %v372, 5
    %v491 = vsel %vm474, %v486, %v490
    %v500 = vsel %vm470, %v477, 0.0
    %v501 = vsel %vm470, %v479, 0.0
    %v502 = vsel %vm471, %v481, 0.0
    %v503 = vsel %vm471, %v483, 0.0
    %v504 = vsel %vm472, %v485, 0.0
    %v505 = vsel %vm472, %v487, 0.0
    %v506 = vsel %vm473, %v489, 0.0
    %v507 = vsel %vm473, %v491, 0.0
    %v508 = vsel %vm86, 1, 0
    %v509 = vsel %vm87, 1, 0
    %v510 = vsel %vm88, 1, 0
    %v511 = vsel %vm89, 1, 0
    %vm512 = vcmp.eq.s32.totalorder %v508, 1
    %vm513 = vcmp.eq.s32.totalorder %v509, 1
    %vm514 = vcmp.eq.s32.totalorder %v510, 1
    %vm515 = vcmp.eq.s32.totalorder %v511, 1
    %vm516 = vcmask 1040384
    %v517 = vrot.slane 0.0, 7
    %v518 = vrot.slane %v365, 7
    %v519 = vsel %vm516, %v517, %v518
    %v520 = vrot.slane %v366, 7
    %v521 = vsel %vm516, %v517, %v520
    %v522 = vrot.slane %v367, 7
    %v523 = vsel %vm516, %v518, %v522
    %v524 = vrot.slane %v368, 7
    %v525 = vsel %vm516, %v520, %v524
    %v526 = vrot.slane %v369, 7
    %v527 = vsel %vm516, %v522, %v526
    %v528 = vrot.slane %v370, 7
    %v529 = vsel %vm516, %v524, %v528
    %v530 = vrot.slane %v371, 7
    %v531 = vsel %vm516, %v526, %v530
    %v532 = vrot.slane %v372, 7
    %v533 = vsel %vm516, %v528, %v532
    %v542 = vsel %vm512, %v519, 0.0
    %v543 = vsel %vm512, %v521, 0.0
    %v544 = vsel %vm513, %v523, 0.0
    %v545 = vsel %vm513, %v525, 0.0
    %v546 = vsel %vm514, %v527, 0.0
    %v547 = vsel %vm514, %v529, 0.0
    %v548 = vsel %vm515, %v531, 0.0
    %v549 = vsel %vm515, %v533, 0.0
    %v550 = vsel %vm90, 1, 0
    %v551 = vsel %vm91, 1, 0
    %v552 = vsel %vm92, 1, 0
    %v553 = vsel %vm93, 1, 0
    %vm554 = vcmp.eq.s32.totalorder %v550, 1
    %vm555 = vcmp.eq.s32.totalorder %v551, 1
    %vm556 = vcmp.eq.s32.totalorder %v552, 1
    %vm557 = vcmp.eq.s32.totalorder %v553, 1
    %vm558 = vcmask 1046528
    %v559 = vrot.slane %v365, 1
    %v560 = vrot.slane %v367, 1
    %v561 = vsel %vm558, %v559, %v560
    %v562 = vrot.slane %v366, 1
    %v563 = vrot.slane %v368, 1
    %v564 = vsel %vm558, %v562, %v563
    %v565 = vrot.slane %v369, 1
    %v566 = vsel %vm558, %v560, %v565
    %v567 = vrot.slane %v370, 1
    %v568 = vsel %vm558, %v563, %v567
    %v569 = vrot.slane %v371, 1
    %v570 = vsel %vm558, %v565, %v569
    %v571 = vrot.slane %v372, 1
    %v572 = vsel %vm558, %v567, %v571
    %v573 = vrot.slane 0.0, 1
    %v574 = vsel %vm558, %v569, %v573
    %v575 = vsel %vm558, %v571, %v573
    %v584 = vsel %vm554, %v561, 0.0
    %v585 = vsel %vm554, %v564, 0.0
    %v586 = vsel %vm555, %v566, 0.0
    %v587 = vsel %vm555, %v568, 0.0
    %v588 = vsel %vm556, %v570, 0.0
    %v589 = vsel %vm556, %v572, 0.0
    %v590 = vsel %vm557, %v574, 0.0
    %v591 = vsel %vm557, %v575, 0.0
    %v592 = vsel %vm102, 1, 0
    %v593 = vsel %vm103, 1, 0
    %v594 = vsel %vm104, 1, 0
    %v595 = vsel %vm105, 1, 0
    %vm596 = vcmp.eq.s32.totalorder %v592, 1
    %vm597 = vcmp.eq.s32.totalorder %v593, 1
    %vm598 = vcmp.eq.s32.totalorder %v594, 1
    %vm599 = vcmp.eq.s32.totalorder %v595, 1
    %v600 = vsel %vm390, %v404, %v391
    %v601 = vsel %vm390, %v406, %v391
    %v604 = vsel %vm596, %v397, 0.0
    %v605 = vsel %vm596, %v399, 0.0
    %v606 = vsel %vm597, %v401, 0.0
    %v607 = vsel %vm597, %v403, 0.0
    %v608 = vsel %vm598, %v405, 0.0
    %v609 = vsel %vm598, %v407, 0.0
    %v610 = vsel %vm599, %v600, 0.0
    %v611 = vsel %vm599, %v601, 0.0
    %v612 = vsel %vm82, 1, 0
    %v613 = vsel %vm83, 1, 0
    %v614 = vsel %vm84, 1, 0
    %v615 = vsel %vm85, 1, 0
    %vm616 = vcmp.eq.s32.totalorder %v612, 1
    %vm617 = vcmp.eq.s32.totalorder %v613, 1
    %vm618 = vcmp.eq.s32.totalorder %v614, 1
    %vm619 = vcmp.eq.s32.totalorder %v615, 1
    %v620 = vsel %vm432, %v446, %v433
    %v621 = vsel %vm432, %v448, %v433
    %v624 = vsel %vm616, %v439, 0.0
    %v625 = vsel %vm616, %v441, 0.0
    %v626 = vsel %vm617, %v443, 0.0
    %v627 = vsel %vm617, %v445, 0.0
    %v628 = vsel %vm618, %v447, 0.0
    %v629 = vsel %vm618, %v449, 0.0
    %v630 = vsel %vm619, %v620, 0.0
    %v631 = vsel %vm619, %v621, 0.0
    %v632 = vsel %vm106, 1, 0
    %v633 = vsel %vm107, 1, 0
    %v634 = vsel %vm108, 1, 0
    %v635 = vsel %vm109, 1, 0
    %vm636 = vcmp.eq.s32.totalorder %v632, 1
    %vm637 = vcmp.eq.s32.totalorder %v633, 1
    %vm638 = vcmp.eq.s32.totalorder %v634, 1
    %vm639 = vcmp.eq.s32.totalorder %v635, 1
    %v640 = vsel %vm474, %v488, %v475
    %v641 = vsel %vm474, %v490, %v475
    %v644 = vsel %vm636, %v481, 0.0
    %v645 = vsel %vm636, %v483, 0.0
    %v646 = vsel %vm637, %v485, 0.0
    %v647 = vsel %vm637, %v487, 0.0
    %v648 = vsel %vm638, %v489, 0.0
    %v649 = vsel %vm638, %v491, 0.0
    %v650 = vsel %vm639, %v640, 0.0
    %v651 = vsel %vm639, %v641, 0.0
    %v652 = vpack.c.bf16 %v418, %v416
    %v653 = vpack.c.bf16 %v419, %v417
    %v654 = vpack.c.bf16 %v460, %v458
    %v655 = vpack.c.bf16 %v461, %v459
    %v656 = vpack.c.bf16 %v502, %v500
    %v657 = vpack.c.bf16 %v503, %v501
    %v658 = vpack.c.bf16 %v544, %v542
    %v659 = vpack.c.bf16 %v545, %v543
    %v660 = vpack.c.bf16 %v367, %v365
    %v661 = vpack.c.bf16 %v368, %v366
    %v662 = vpack.c.bf16 %v586, %v584
    %v663 = vpack.c.bf16 %v587, %v585
    %v664 = vpack.c.bf16 %v606, %v604
    %v665 = vpack.c.bf16 %v607, %v605
    %v666 = vpack.c.bf16 %v626, %v624
    %v667 = vpack.c.bf16 %v627, %v625
    %v668 = vpack.c.bf16 %v646, %v644
    %v669 = vpack.c.bf16 %v647, %v645
    %v670 = vpack.c.bf16 %v422, %v420
    %v671 = vpack.c.bf16 %v423, %v421
    %v672 = vpack.c.bf16 %v464, %v462
    %v673 = vpack.c.bf16 %v465, %v463
    %v674 = vpack.c.bf16 %v506, %v504
    %v675 = vpack.c.bf16 %v507, %v505
    %v676 = vpack.c.bf16 %v548, %v546
    %v677 = vpack.c.bf16 %v549, %v547
    %v678 = vpack.c.bf16 %v371, %v369
    %v679 = vpack.c.bf16 %v372, %v370
    %v680 = vpack.c.bf16 %v590, %v588
    %v681 = vpack.c.bf16 %v591, %v589
    %v682 = vpack.c.bf16 %v610, %v608
    %v683 = vpack.c.bf16 %v611, %v609
    %v684 = vpack.c.bf16 %v630, %v628
    %v685 = vpack.c.bf16 %v631, %v629
    %v686 = vpack.c.bf16 %v650, %v648
    %v687 = vpack.c.bf16 %v651, %v649
    %v688 = vld [vmem:[%s3] sm:$0xf]
    %v689 = vld [vmem:[%s3 + $0x4] sm:$0xf]
    %v690 = vld [vmem:[%s3 + $0x8] sm:$0xf]
    %v691 = vld [vmem:[%s3 + $0xc] sm:$0xf]
    %v692 = vld [vmem:[%s3 + $0x10] sm:$0xf]
    %v693 = vld [vmem:[%s3 + $0x14] sm:$0xf]
    %v694 = vld [vmem:[%s3 + $0x18] sm:$0xf]
    %v695 = vld [vmem:[%s3 + $0x1c] sm:$0xf]
    %v696 = vld [vmem:[%s3 + $0x20] sm:$0xf]
    %v697 = vld [vmem:[%s3 + $0x24] sm:$0xf]
    %v698 = vld [vmem:[%s3 + $0x28] sm:$0xf]
    %v699 = vld [vmem:[%s3 + $0x2c] sm:$0xf]
    %v700 = vld [vmem:[%s3 + $0x30] sm:$0xf]
    %v701 = vld [vmem:[%s3 + $0x34] sm:$0xf]
    %v702 = vld [vmem:[%s3 + $0x38] sm:$0xf]
    %v703 = vld [vmem:[%s3 + $0x3c] sm:$0xf]
    %v704 = vld [vmem:[%s3 + $0x40] sm:$0xf]
    %v705 = vld [vmem:[%s3 + $0x44] sm:$0xf]
    %v706 = vld [vmem:[%s3 + $0x48] sm:$0xf]
    %v707 = vld [vmem:[%s3 + $0x4c] sm:$0xf]
    %v708 = vld [vmem:[%s3 + $0x50] sm:$0xf]
    %v709 = vld [vmem:[%s3 + $0x54] sm:$0xf]
    %v710 = vld [vmem:[%s3 + $0x58] sm:$0xf]
    %v711 = vld [vmem:[%s3 + $0x5c] sm:$0xf]
    %v712 = vld [vmem:[%s3 + $0x60] sm:$0xf]
    %v713 = vld [vmem:[%s3 + $0x64] sm:$0xf]
    %v714 = vld [vmem:[%s3 + $0x68] sm:$0xf]
    %v715 = vld [vmem:[%s3 + $0x6c] sm:$0xf]
    %v716 = vld [vmem:[%s3 + $0x70] sm:$0xf]
    %v717 = vld [vmem:[%s3 + $0x74] sm:$0xf]
    %v718 = vld [vmem:[%s3 + $0x78] sm:$0xf]
    %v719 = vld [vmem:[%s3 + $0x7c] sm:$0xf]
    %v720 = vld [vmem:[%s3 + $0x80] sm:$0xf]
    %v721 = vld [vmem:[%s3 + $0x84] sm:$0xf]
    %v722 = vld [vmem:[%s3 + $0x88] sm:$0xf]
    %v723 = vld [vmem:[%s3 + $0x8c] sm:$0xf]
    %v724 = vld [vmem:[%s3 + $0x90] sm:$0xf]
    %v725 = vld [vmem:[%s3 + $0x94] sm:$0xf]
    %v726 = vld [vmem:[%s3 + $0x98] sm:$0xf]
    %v727 = vld [vmem:[%s3 + $0x9c] sm:$0xf]
    %v728 = vld [vmem:[%s3 + $0xa0] sm:$0xf]
    %v729 = vld [vmem:[%s3 + $0xa4] sm:$0xf]
    %v730 = vld [vmem:[%s3 + $0xa8] sm:$0xf]
    %v731 = vld [vmem:[%s3 + $0xac] sm:$0xf]
    %v732 = vld [vmem:[%s3 + $0xb0] sm:$0xf]
    %v733 = vld [vmem:[%s3 + $0xb4] sm:$0xf]
    %v734 = vld [vmem:[%s3 + $0xb8] sm:$0xf]
    %v735 = vld [vmem:[%s3 + $0xbc] sm:$0xf]
    %v736 = vld [vmem:[%s3 + $0xc0] sm:$0xf]
    %v737 = vld [vmem:[%s3 + $0xc4] sm:$0xf]
    %v738 = vld [vmem:[%s3 + $0xc8] sm:$0xf]
    %v739 = vld [vmem:[%s3 + $0xcc] sm:$0xf]
    %v740 = vld [vmem:[%s3 + $0xd0] sm:$0xf]
    %v741 = vld [vmem:[%s3 + $0xd4] sm:$0xf]
    %v742 = vld [vmem:[%s3 + $0xd8] sm:$0xf]
    %v743 = vld [vmem:[%s3 + $0xdc] sm:$0xf]
    %v744 = vld [vmem:[%s3 + $0xe0] sm:$0xf]
    %v745 = vld [vmem:[%s3 + $0xe4] sm:$0xf]
    %v746 = vld [vmem:[%s3 + $0xe8] sm:$0xf]
    %v747 = vld [vmem:[%s3 + $0xec] sm:$0xf]
    %v748 = vld [vmem:[%s3 + $0xf0] sm:$0xf]
    %v749 = vld [vmem:[%s3 + $0xf4] sm:$0xf]
    %v750 = vld [vmem:[%s3 + $0xf8] sm:$0xf]
    %v751 = vld [vmem:[%s3 + $0xfc] sm:$0xf]
    %v752 = vld [vmem:[%s3 + $0x100] sm:$0xf]
    %v753 = vld [vmem:[%s3 + $0x104] sm:$0xf]
    %v754 = vld [vmem:[%s3 + $0x108] sm:$0xf]
    %v755 = vld [vmem:[%s3 + $0x10c] sm:$0xf]
    %v756 = vld [vmem:[%s3 + $0x110] sm:$0xf]
    %v757 = vld [vmem:[%s3 + $0x114] sm:$0xf]
    %v758 = vld [vmem:[%s3 + $0x118] sm:$0xf]
    %v759 = vld [vmem:[%s3 + $0x11c] sm:$0xf]
    %v760 = vld [vmem:[%s3 + $0x120] sm:$0xf]
    %v761 = vld [vmem:[%s3 + $0x124] sm:$0xf]
    %v762 = vld [vmem:[%s3 + $0x128] sm:$0xf]
    %v763 = vld [vmem:[%s3 + $0x12c] sm:$0xf]
    %v764 = vld [vmem:[%s3 + $0x130] sm:$0xf]
    %v765 = vld [vmem:[%s3 + $0x134] sm:$0xf]
    %v766 = vld [vmem:[%s3 + $0x138] sm:$0xf]
    %v767 = vld [vmem:[%s3 + $0x13c] sm:$0xf]
    %v768 = vld [vmem:[%s3 + $0x140] sm:$0xf]
    %v769 = vld [vmem:[%s3 + $0x144] sm:$0xf]
    %v770 = vld [vmem:[%s3 + $0x148] sm:$0xf]
    %v771 = vld [vmem:[%s3 + $0x14c] sm:$0xf]
    %v772 = vld [vmem:[%s3 + $0x150] sm:$0xf]
    %v773 = vld [vmem:[%s3 + $0x154] sm:$0xf]
    %v774 = vld [vmem:[%s3 + $0x158] sm:$0xf]
    %v775 = vld [vmem:[%s3 + $0x15c] sm:$0xf]
    %v776 = vld [vmem:[%s3 + $0x160] sm:$0xf]
    %v777 = vld [vmem:[%s3 + $0x164] sm:$0xf]
    %v778 = vld [vmem:[%s3 + $0x168] sm:$0xf]
    %v779 = vld [vmem:[%s3 + $0x16c] sm:$0xf]
    %v780 = vld [vmem:[%s3 + $0x170] sm:$0xf]
    %v781 = vld [vmem:[%s3 + $0x174] sm:$0xf]
    %v782 = vld [vmem:[%s3 + $0x178] sm:$0xf]
    %v783 = vld [vmem:[%s3 + $0x17c] sm:$0xf]
    %v784 = vld [vmem:[%s3 + $0x180] sm:$0xf]
    %v785 = vld [vmem:[%s3 + $0x184] sm:$0xf]
    %v786 = vld [vmem:[%s3 + $0x188] sm:$0xf]
    %v787 = vld [vmem:[%s3 + $0x18c] sm:$0xf]
    %v788 = vld [vmem:[%s3 + $0x190] sm:$0xf]
    %v789 = vld [vmem:[%s3 + $0x194] sm:$0xf]
    %v790 = vld [vmem:[%s3 + $0x198] sm:$0xf]
    %v791 = vld [vmem:[%s3 + $0x19c] sm:$0xf]
    %v792 = vld [vmem:[%s3 + $0x1a0] sm:$0xf]
    %v793 = vld [vmem:[%s3 + $0x1a4] sm:$0xf]
    %v794 = vld [vmem:[%s3 + $0x1a8] sm:$0xf]
    %v795 = vld [vmem:[%s3 + $0x1ac] sm:$0xf]
    %v796 = vld [vmem:[%s3 + $0x1b0] sm:$0xf]
    %v797 = vld [vmem:[%s3 + $0x1b4] sm:$0xf]
    %v798 = vld [vmem:[%s3 + $0x1b8] sm:$0xf]
    %v799 = vld [vmem:[%s3 + $0x1bc] sm:$0xf]
    %v800 = vld [vmem:[%s3 + $0x1c0] sm:$0xf]
    %v801 = vld [vmem:[%s3 + $0x1c4] sm:$0xf]
    %v802 = vld [vmem:[%s3 + $0x1c8] sm:$0xf]
    %v803 = vld [vmem:[%s3 + $0x1cc] sm:$0xf]
    %v804 = vld [vmem:[%s3 + $0x1d0] sm:$0xf]
    %v805 = vld [vmem:[%s3 + $0x1d4] sm:$0xf]
    %v806 = vld [vmem:[%s3 + $0x1d8] sm:$0xf]
    %v807 = vld [vmem:[%s3 + $0x1dc] sm:$0xf]
    %v808 = vld [vmem:[%s3 + $0x1e0] sm:$0xf]
    %v809 = vld [vmem:[%s3 + $0x1e4] sm:$0xf]
    %v810 = vld [vmem:[%s3 + $0x1e8] sm:$0xf]
    %v811 = vld [vmem:[%s3 + $0x1ec] sm:$0xf]
    %v812 = vld [vmem:[%s3 + $0x1f0] sm:$0xf]
    %v813 = vld [vmem:[%s3 + $0x1f4] sm:$0xf]
    %v814 = vld [vmem:[%s3 + $0x1f8] sm:$0xf]
    %v815 = vld [vmem:[%s3 + $0x1fc] sm:$0xf]
    %v816 = vld [vmem:[%s3 + $0x200] sm:$0xf]
    %v817 = vld [vmem:[%s3 + $0x204] sm:$0xf]
    %v818 = vld [vmem:[%s3 + $0x208] sm:$0xf]
    %v819 = vld [vmem:[%s3 + $0x20c] sm:$0xf]
    %v820 = vld [vmem:[%s3 + $0x210] sm:$0xf]
    %v821 = vld [vmem:[%s3 + $0x214] sm:$0xf]
    %v822 = vld [vmem:[%s3 + $0x218] sm:$0xf]
    %v823 = vld [vmem:[%s3 + $0x21c] sm:$0xf]
    %v824 = vld [vmem:[%s3 + $0x220] sm:$0xf]
    %v825 = vld [vmem:[%s3 + $0x224] sm:$0xf]
    %v826 = vld [vmem:[%s3 + $0x228] sm:$0xf]
    %v827 = vld [vmem:[%s3 + $0x22c] sm:$0xf]
    %v828 = vld [vmem:[%s3 + $0x230] sm:$0xf]
    %v829 = vld [vmem:[%s3 + $0x234] sm:$0xf]
    %v830 = vld [vmem:[%s3 + $0x238] sm:$0xf]
    %v831 = vld [vmem:[%s3 + $0x23c] sm:$0xf]
    %v832 = vld [vmem:[%s3 + $0x240] sm:$0xf]
    %v833 = vld [vmem:[%s3 + $0x244] sm:$0xf]
    %v834 = vld [vmem:[%s3 + $0x248] sm:$0xf]
    %v835 = vld [vmem:[%s3 + $0x24c] sm:$0xf]
    %v836 = vld [vmem:[%s3 + $0x250] sm:$0xf]
    %v837 = vld [vmem:[%s3 + $0x254] sm:$0xf]
    %v838 = vld [vmem:[%s3 + $0x258] sm:$0xf]
    %v839 = vld [vmem:[%s3 + $0x25c] sm:$0xf]
    %v840 = vld [vmem:[%s3 + $0x260] sm:$0xf]
    %v841 = vld [vmem:[%s3 + $0x264] sm:$0xf]
    %v842 = vld [vmem:[%s3 + $0x268] sm:$0xf]
    %v843 = vld [vmem:[%s3 + $0x26c] sm:$0xf]
    %v844 = vld [vmem:[%s3 + $0x270] sm:$0xf]
    %v845 = vld [vmem:[%s3 + $0x274] sm:$0xf]
    %v846 = vld [vmem:[%s3 + $0x278] sm:$0xf]
    %v847 = vld [vmem:[%s3 + $0x27c] sm:$0xf]
    %v848 = vld [vmem:[%s3 + $0x280] sm:$0xf]
    %v849 = vld [vmem:[%s3 + $0x284] sm:$0xf]
    %v850 = vld [vmem:[%s3 + $0x288] sm:$0xf]
    %v851 = vld [vmem:[%s3 + $0x28c] sm:$0xf]
    %v852 = vld [vmem:[%s3 + $0x290] sm:$0xf]
    %v853 = vld [vmem:[%s3 + $0x294] sm:$0xf]
    %v854 = vld [vmem:[%s3 + $0x298] sm:$0xf]
    %v855 = vld [vmem:[%s3 + $0x29c] sm:$0xf]
    %v856 = vld [vmem:[%s3 + $0x2a0] sm:$0xf]
    %v857 = vld [vmem:[%s3 + $0x2a4] sm:$0xf]
    %v858 = vld [vmem:[%s3 + $0x2a8] sm:$0xf]
    %v859 = vld [vmem:[%s3 + $0x2ac] sm:$0xf]
    %v860 = vld [vmem:[%s3 + $0x2b0] sm:$0xf]
    %v861 = vld [vmem:[%s3 + $0x2b4] sm:$0xf]
    %v862 = vld [vmem:[%s3 + $0x2b8] sm:$0xf]
    %v863 = vld [vmem:[%s3 + $0x2bc] sm:$0xf]
    %v864 = vld [vmem:[%s3 + $0x2c0] sm:$0xf]
    %v865 = vld [vmem:[%s3 + $0x2c4] sm:$0xf]
    %v866 = vld [vmem:[%s3 + $0x2c8] sm:$0xf]
    %v867 = vld [vmem:[%s3 + $0x2cc] sm:$0xf]
    %v868 = vld [vmem:[%s3 + $0x2d0] sm:$0xf]
    %v869 = vld [vmem:[%s3 + $0x2d4] sm:$0xf]
    %v870 = vld [vmem:[%s3 + $0x2d8] sm:$0xf]
    %v871 = vld [vmem:[%s3 + $0x2dc] sm:$0xf]
    %v872 = vld [vmem:[%s3 + $0x2e0] sm:$0xf]
    %v873 = vld [vmem:[%s3 + $0x2e4] sm:$0xf]
    %v874 = vld [vmem:[%s3 + $0x2e8] sm:$0xf]
    %v875 = vld [vmem:[%s3 + $0x2ec] sm:$0xf]
    %v876 = vld [vmem:[%s3 + $0x2f0] sm:$0xf]
    %v877 = vld [vmem:[%s3 + $0x2f4] sm:$0xf]
    %v878 = vld [vmem:[%s3 + $0x2f8] sm:$0xf]
    %v879 = vld [vmem:[%s3 + $0x2fc] sm:$0xf]
    %v880 = vld [vmem:[%s3 + $0x300] sm:$0xf]
    %v881 = vld [vmem:[%s3 + $0x304] sm:$0xf]
    %v882 = vld [vmem:[%s3 + $0x308] sm:$0xf]
    %v883 = vld [vmem:[%s3 + $0x30c] sm:$0xf]
    %v884 = vld [vmem:[%s3 + $0x310] sm:$0xf]
    %v885 = vld [vmem:[%s3 + $0x314] sm:$0xf]
    %v886 = vld [vmem:[%s3 + $0x318] sm:$0xf]
    %v887 = vld [vmem:[%s3 + $0x31c] sm:$0xf]
    %v888 = vld [vmem:[%s3 + $0x320] sm:$0xf]
    %v889 = vld [vmem:[%s3 + $0x324] sm:$0xf]
    %v890 = vld [vmem:[%s3 + $0x328] sm:$0xf]
    %v891 = vld [vmem:[%s3 + $0x32c] sm:$0xf]
    %v892 = vld [vmem:[%s3 + $0x330] sm:$0xf]
    %v893 = vld [vmem:[%s3 + $0x334] sm:$0xf]
    %v894 = vld [vmem:[%s3 + $0x338] sm:$0xf]
    %v895 = vld [vmem:[%s3 + $0x33c] sm:$0xf]
    %v896 = vld [vmem:[%s3 + $0x340] sm:$0xf]
    %v897 = vld [vmem:[%s3 + $0x344] sm:$0xf]
    %v898 = vld [vmem:[%s3 + $0x348] sm:$0xf]
    %v899 = vld [vmem:[%s3 + $0x34c] sm:$0xf]
    %v900 = vld [vmem:[%s3 + $0x350] sm:$0xf]
    %v901 = vld [vmem:[%s3 + $0x354] sm:$0xf]
    %v902 = vld [vmem:[%s3 + $0x358] sm:$0xf]
    %v903 = vld [vmem:[%s3 + $0x35c] sm:$0xf]
    %v904 = vld [vmem:[%s3 + $0x360] sm:$0xf]
    %v905 = vld [vmem:[%s3 + $0x364] sm:$0xf]
    %v906 = vld [vmem:[%s3 + $0x368] sm:$0xf]
    %v907 = vld [vmem:[%s3 + $0x36c] sm:$0xf]
    %v908 = vld [vmem:[%s3 + $0x370] sm:$0xf]
    %v909 = vld [vmem:[%s3 + $0x374] sm:$0xf]
    %v910 = vld [vmem:[%s3 + $0x378] sm:$0xf]
    %v911 = vld [vmem:[%s3 + $0x37c] sm:$0xf]
    %v912 = vld [vmem:[%s3 + $0x380] sm:$0xf]
    %v913 = vld [vmem:[%s3 + $0x384] sm:$0xf]
    %v914 = vld [vmem:[%s3 + $0x388] sm:$0xf]
    %v915 = vld [vmem:[%s3 + $0x38c] sm:$0xf]
    %v916 = vld [vmem:[%s3 + $0x390] sm:$0xf]
    %v917 = vld [vmem:[%s3 + $0x394] sm:$0xf]
    %v918 = vld [vmem:[%s3 + $0x398] sm:$0xf]
    %v919 = vld [vmem:[%s3 + $0x39c] sm:$0xf]
    %v920 = vld [vmem:[%s3 + $0x3a0] sm:$0xf]
    %v921 = vld [vmem:[%s3 + $0x3a4] sm:$0xf]
    %v922 = vld [vmem:[%s3 + $0x3a8] sm:$0xf]
    %v923 = vld [vmem:[%s3 + $0x3ac] sm:$0xf]
    %v924 = vld [vmem:[%s3 + $0x3b0] sm:$0xf]
    %v925 = vld [vmem:[%s3 + $0x3b4] sm:$0xf]
    %v926 = vld [vmem:[%s3 + $0x3b8] sm:$0xf]
    %v927 = vld [vmem:[%s3 + $0x3bc] sm:$0xf]
    %v928 = vld [vmem:[%s3 + $0x3c0] sm:$0xf]
    %v929 = vld [vmem:[%s3 + $0x3c4] sm:$0xf]
    %v930 = vld [vmem:[%s3 + $0x3c8] sm:$0xf]
    %v931 = vld [vmem:[%s3 + $0x3cc] sm:$0xf]
    %v932 = vld [vmem:[%s3 + $0x3d0] sm:$0xf]
    %v933 = vld [vmem:[%s3 + $0x3d4] sm:$0xf]
    %v934 = vld [vmem:[%s3 + $0x3d8] sm:$0xf]
    %v935 = vld [vmem:[%s3 + $0x3dc] sm:$0xf]
    %v936 = vld [vmem:[%s3 + $0x3e0] sm:$0xf]
    %v937 = vld [vmem:[%s3 + $0x3e4] sm:$0xf]
    %v938 = vld [vmem:[%s3 + $0x3e8] sm:$0xf]
    %v939 = vld [vmem:[%s3 + $0x3ec] sm:$0xf]
    %v940 = vld [vmem:[%s3 + $0x3f0] sm:$0xf]
    %v941 = vld [vmem:[%s3 + $0x3f4] sm:$0xf]
    %v942 = vld [vmem:[%s3 + $0x3f8] sm:$0xf]
    %v943 = vld [vmem:[%s3 + $0x3fc] sm:$0xf]
    %v944 = vld [vmem:[%s3 + $0x400] sm:$0xf]
    %v945 = vld [vmem:[%s3 + $0x404] sm:$0xf]
    %v946 = vld [vmem:[%s3 + $0x408] sm:$0xf]
    %v947 = vld [vmem:[%s3 + $0x40c] sm:$0xf]
    %v948 = vld [vmem:[%s3 + $0x410] sm:$0xf]
    %v949 = vld [vmem:[%s3 + $0x414] sm:$0xf]
    %v950 = vld [vmem:[%s3 + $0x418] sm:$0xf]
    %v951 = vld [vmem:[%s3 + $0x41c] sm:$0xf]
    %v952 = vld [vmem:[%s3 + $0x420] sm:$0xf]
    %v953 = vld [vmem:[%s3 + $0x424] sm:$0xf]
    %v954 = vld [vmem:[%s3 + $0x428] sm:$0xf]
    %v955 = vld [vmem:[%s3 + $0x42c] sm:$0xf]
    %v956 = vld [vmem:[%s3 + $0x430] sm:$0xf]
    %v957 = vld [vmem:[%s3 + $0x434] sm:$0xf]
    %v958 = vld [vmem:[%s3 + $0x438] sm:$0xf]
    %v959 = vld [vmem:[%s3 + $0x43c] sm:$0xf]
    %v960 = vld [vmem:[%s3 + $0x440] sm:$0xf]
    %v961 = vld [vmem:[%s3 + $0x444] sm:$0xf]
    %v962 = vld [vmem:[%s3 + $0x448] sm:$0xf]
    %v963 = vld [vmem:[%s3 + $0x44c] sm:$0xf]
    %v964 = vld [vmem:[%s3 + $0x450] sm:$0xf]
    %v965 = vld [vmem:[%s3 + $0x454] sm:$0xf]
    %v966 = vld [vmem:[%s3 + $0x458] sm:$0xf]
    %v967 = vld [vmem:[%s3 + $0x45c] sm:$0xf]
    %v968 = vld [vmem:[%s3 + $0x460] sm:$0xf]
    %v969 = vld [vmem:[%s3 + $0x464] sm:$0xf]
    %v970 = vld [vmem:[%s3 + $0x468] sm:$0xf]
    %v971 = vld [vmem:[%s3 + $0x46c] sm:$0xf]
    %v972 = vld [vmem:[%s3 + $0x470] sm:$0xf]
    %v973 = vld [vmem:[%s3 + $0x474] sm:$0xf]
    %v974 = vld [vmem:[%s3 + $0x478] sm:$0xf]
    %v975 = vld [vmem:[%s3 + $0x47c] sm:$0xf]
    %v976 = vld [vmem:[%s4] sm:$0x1]
    %v978 = vperm.slane %v976, 0
    %v1268 = vunpack.c.l.b16 %v688
    %v1269 = vunpack.c.l.b16 %v689
    %v1270 = vunpack.c.l.b16 %v690
    %v1271 = vunpack.c.l.b16 %v691
    %v1272 = vunpack.c.l.b16 %v692
    %v1273 = vunpack.c.l.b16 %v693
    %v1274 = vunpack.c.l.b16 %v694
    %v1275 = vunpack.c.l.b16 %v695
    %v1276 = vunpack.c.l.b16 %v696
    %v1277 = vunpack.c.l.b16 %v697
    %v1278 = vunpack.c.l.b16 %v698
    %v1279 = vunpack.c.l.b16 %v699
    %v1280 = vunpack.c.l.b16 %v700
    %v1281 = vunpack.c.l.b16 %v701
    %v1282 = vunpack.c.l.b16 %v702
    %v1283 = vunpack.c.l.b16 %v703
    %v1284 = vunpack.c.l.b16 %v704
    %v1285 = vunpack.c.l.b16 %v705
    %v1286 = vunpack.c.l.b16 %v706
    %v1287 = vunpack.c.l.b16 %v707
    %v1288 = vunpack.c.l.b16 %v708
    %v1289 = vunpack.c.l.b16 %v709
    %v1290 = vunpack.c.l.b16 %v710
    %v1291 = vunpack.c.l.b16 %v711
    %v1292 = vunpack.c.l.b16 %v712
    %v1293 = vunpack.c.l.b16 %v713
    %v1294 = vunpack.c.l.b16 %v714
    %v1295 = vunpack.c.l.b16 %v715
    %v1296 = vunpack.c.l.b16 %v716
    %v1297 = vunpack.c.l.b16 %v717
    %v1298 = vunpack.c.l.b16 %v718
    %v1299 = vunpack.c.l.b16 %v719
    %v1300 = vunpack.c.l.b16 %v720
    %v1301 = vunpack.c.l.b16 %v721
    %v1302 = vunpack.c.l.b16 %v722
    %v1303 = vunpack.c.l.b16 %v723
    %v1304 = vunpack.c.l.b16 %v724
    %v1305 = vunpack.c.l.b16 %v725
    %v1306 = vunpack.c.l.b16 %v726
    %v1307 = vunpack.c.l.b16 %v727
    %v1308 = vunpack.c.l.b16 %v728
    %v1309 = vunpack.c.l.b16 %v729
    %v1310 = vunpack.c.l.b16 %v730
    %v1311 = vunpack.c.l.b16 %v731
    %v1312 = vunpack.c.l.b16 %v732
    %v1313 = vunpack.c.l.b16 %v733
    %v1314 = vunpack.c.l.b16 %v734
    %v1315 = vunpack.c.l.b16 %v735
    %v1316 = vunpack.c.l.b16 %v736
    %v1317 = vunpack.c.l.b16 %v737
    %v1318 = vunpack.c.l.b16 %v738
    %v1319 = vunpack.c.l.b16 %v739
    %v1320 = vunpack.c.l.b16 %v740
    %v1321 = vunpack.c.l.b16 %v741
    %v1322 = vunpack.c.l.b16 %v742
    %v1323 = vunpack.c.l.b16 %v743
    %v1324 = vunpack.c.l.b16 %v744
    %v1325 = vunpack.c.l.b16 %v745
    %v1326 = vunpack.c.l.b16 %v746
    %v1327 = vunpack.c.l.b16 %v747
    %v1328 = vunpack.c.l.b16 %v748
    %v1329 = vunpack.c.l.b16 %v749
    %v1330 = vunpack.c.l.b16 %v750
    %v1331 = vunpack.c.l.b16 %v751
    %v1332 = vunpack.c.l.b16 %v752
    %v1333 = vunpack.c.l.b16 %v753
    %v1334 = vunpack.c.l.b16 %v754
    %v1335 = vunpack.c.l.b16 %v755
    %v1336 = vunpack.c.l.b16 %v756
    %v1337 = vunpack.c.l.b16 %v757
    %v1338 = vunpack.c.l.b16 %v758
    %v1339 = vunpack.c.l.b16 %v759
    %v1340 = vunpack.c.l.b16 %v760
    %v1341 = vunpack.c.l.b16 %v761
    %v1342 = vunpack.c.l.b16 %v762
    %v1343 = vunpack.c.l.b16 %v763
    %v1344 = vunpack.c.l.b16 %v764
    %v1345 = vunpack.c.l.b16 %v765
    %v1346 = vunpack.c.l.b16 %v766
    %v1347 = vunpack.c.l.b16 %v767
    %v1348 = vunpack.c.l.b16 %v768
    %v1349 = vunpack.c.l.b16 %v769
    %v1350 = vunpack.c.l.b16 %v770
    %v1351 = vunpack.c.l.b16 %v771
    %v1352 = vunpack.c.l.b16 %v772
    %v1353 = vunpack.c.l.b16 %v773
    %v1354 = vunpack.c.l.b16 %v774
    %v1355 = vunpack.c.l.b16 %v775
    %v1356 = vunpack.c.l.b16 %v776
    %v1357 = vunpack.c.l.b16 %v777
    %v1358 = vunpack.c.l.b16 %v778
    %v1359 = vunpack.c.l.b16 %v779
    %v1360 = vunpack.c.l.b16 %v780
    %v1361 = vunpack.c.l.b16 %v781
    %v1362 = vunpack.c.l.b16 %v782
    %v1363 = vunpack.c.l.b16 %v783
    %v1364 = vunpack.c.l.b16 %v784
    %v1365 = vunpack.c.l.b16 %v785
    %v1366 = vunpack.c.l.b16 %v786
    %v1367 = vunpack.c.l.b16 %v787
    %v1368 = vunpack.c.l.b16 %v788
    %v1369 = vunpack.c.l.b16 %v789
    %v1370 = vunpack.c.l.b16 %v790
    %v1371 = vunpack.c.l.b16 %v791
    %v1372 = vunpack.c.l.b16 %v792
    %v1373 = vunpack.c.l.b16 %v793
    %v1374 = vunpack.c.l.b16 %v794
    %v1375 = vunpack.c.l.b16 %v795
    %v1376 = vunpack.c.l.b16 %v796
    %v1377 = vunpack.c.l.b16 %v797
    %v1378 = vunpack.c.l.b16 %v798
    %v1379 = vunpack.c.l.b16 %v799
    %v1380 = vunpack.c.l.b16 %v800
    %v1381 = vunpack.c.l.b16 %v801
    %v1382 = vunpack.c.l.b16 %v802
    %v1383 = vunpack.c.l.b16 %v803
    %v1384 = vunpack.c.l.b16 %v804
    %v1385 = vunpack.c.l.b16 %v805
    %v1386 = vunpack.c.l.b16 %v806
    %v1387 = vunpack.c.l.b16 %v807
    %v1388 = vunpack.c.l.b16 %v808
    %v1389 = vunpack.c.l.b16 %v809
    %v1390 = vunpack.c.l.b16 %v810
    %v1391 = vunpack.c.l.b16 %v811
    %v1392 = vunpack.c.l.b16 %v812
    %v1393 = vunpack.c.l.b16 %v813
    %v1394 = vunpack.c.l.b16 %v814
    %v1395 = vunpack.c.l.b16 %v815
    %v1396 = vunpack.c.l.b16 %v816
    %v1397 = vunpack.c.l.b16 %v817
    %v1398 = vunpack.c.l.b16 %v818
    %v1399 = vunpack.c.l.b16 %v819
    %v1400 = vunpack.c.l.b16 %v820
    %v1401 = vunpack.c.l.b16 %v821
    %v1402 = vunpack.c.l.b16 %v822
    %v1403 = vunpack.c.l.b16 %v823
    %v1404 = vunpack.c.l.b16 %v824
    %v1405 = vunpack.c.l.b16 %v825
    %v1406 = vunpack.c.l.b16 %v826
    %v1407 = vunpack.c.l.b16 %v827
    %v1408 = vunpack.c.l.b16 %v828
    %v1409 = vunpack.c.l.b16 %v829
    %v1410 = vunpack.c.l.b16 %v830
    %v1411 = vunpack.c.l.b16 %v831
    %v1412 = vunpack.c.l.b16 %v832
    %v1413 = vunpack.c.l.b16 %v833
    %v1414 = vunpack.c.l.b16 %v834
    %v1415 = vunpack.c.l.b16 %v835
    %v1416 = vunpack.c.l.b16 %v836
    %v1417 = vunpack.c.l.b16 %v837
    %v1418 = vunpack.c.l.b16 %v838
    %v1419 = vunpack.c.l.b16 %v839
    %v1420 = vunpack.c.l.b16 %v840
    %v1421 = vunpack.c.l.b16 %v841
    %v1422 = vunpack.c.l.b16 %v842
    %v1423 = vunpack.c.l.b16 %v843
    %v1424 = vunpack.c.l.b16 %v844
    %v1425 = vunpack.c.l.b16 %v845
    %v1426 = vunpack.c.l.b16 %v846
    %v1427 = vunpack.c.l.b16 %v847
    %v1428 = vunpack.c.l.b16 %v848
    %v1429 = vunpack.c.l.b16 %v849
    %v1430 = vunpack.c.l.b16 %v850
    %v1431 = vunpack.c.l.b16 %v851
    %v1432 = vunpack.c.l.b16 %v852
    %v1433 = vunpack.c.l.b16 %v853
    %v1434 = vunpack.c.l.b16 %v854
    %v1435 = vunpack.c.l.b16 %v855
    %v1436 = vunpack.c.l.b16 %v856
    %v1437 = vunpack.c.l.b16 %v857
    %v1438 = vunpack.c.l.b16 %v858
    %v1439 = vunpack.c.l.b16 %v859
    %v1440 = vunpack.c.l.b16 %v860
    %v1441 = vunpack.c.l.b16 %v861
    %v1442 = vunpack.c.l.b16 %v862
    %v1443 = vunpack.c.l.b16 %v863
    %v1444 = vunpack.c.l.b16 %v864
    %v1445 = vunpack.c.l.b16 %v865
    %v1446 = vunpack.c.l.b16 %v866
    %v1447 = vunpack.c.l.b16 %v867
    %v1448 = vunpack.c.l.b16 %v868
    %v1449 = vunpack.c.l.b16 %v869
    %v1450 = vunpack.c.l.b16 %v870
    %v1451 = vunpack.c.l.b16 %v871
    %v1452 = vunpack.c.l.b16 %v872
    %v1453 = vunpack.c.l.b16 %v873
    %v1454 = vunpack.c.l.b16 %v874
    %v1455 = vunpack.c.l.b16 %v875
    %v1456 = vunpack.c.l.b16 %v876
    %v1457 = vunpack.c.l.b16 %v877
    %v1458 = vunpack.c.l.b16 %v878
    %v1459 = vunpack.c.l.b16 %v879
    %v1460 = vunpack.c.l.b16 %v880
    %v1461 = vunpack.c.l.b16 %v881
    %v1462 = vunpack.c.l.b16 %v882
    %v1463 = vunpack.c.l.b16 %v883
    %v1464 = vunpack.c.l.b16 %v884
    %v1465 = vunpack.c.l.b16 %v885
    %v1466 = vunpack.c.l.b16 %v886
    %v1467 = vunpack.c.l.b16 %v887
    %v1468 = vunpack.c.l.b16 %v888
    %v1469 = vunpack.c.l.b16 %v889
    %v1470 = vunpack.c.l.b16 %v890
    %v1471 = vunpack.c.l.b16 %v891
    %v1472 = vunpack.c.l.b16 %v892
    %v1473 = vunpack.c.l.b16 %v893
    %v1474 = vunpack.c.l.b16 %v894
    %v1475 = vunpack.c.l.b16 %v895
    %v1476 = vunpack.c.l.b16 %v896
    %v1477 = vunpack.c.l.b16 %v897
    %v1478 = vunpack.c.l.b16 %v898
    %v1479 = vunpack.c.l.b16 %v899
    %v1480 = vunpack.c.l.b16 %v900
    %v1481 = vunpack.c.l.b16 %v901
    %v1482 = vunpack.c.l.b16 %v902
    %v1483 = vunpack.c.l.b16 %v903
    %v1484 = vunpack.c.l.b16 %v904
    %v1485 = vunpack.c.l.b16 %v905
    %v1486 = vunpack.c.l.b16 %v906
    %v1487 = vunpack.c.l.b16 %v907
    %v1488 = vunpack.c.l.b16 %v908
    %v1489 = vunpack.c.l.b16 %v909
    %v1490 = vunpack.c.l.b16 %v910
    %v1491 = vunpack.c.l.b16 %v911
    %v1492 = vunpack.c.l.b16 %v912
    %v1493 = vunpack.c.l.b16 %v913
    %v1494 = vunpack.c.l.b16 %v914
    %v1495 = vunpack.c.l.b16 %v915
    %v1496 = vunpack.c.l.b16 %v916
    %v1497 = vunpack.c.l.b16 %v917
    %v1498 = vunpack.c.l.b16 %v918
    %v1499 = vunpack.c.l.b16 %v919
    %v1500 = vunpack.c.l.b16 %v920
    %v1501 = vunpack.c.l.b16 %v921
    %v1502 = vunpack.c.l.b16 %v922
    %v1503 = vunpack.c.l.b16 %v923
    %v1504 = vunpack.c.l.b16 %v924
    %v1505 = vunpack.c.l.b16 %v925
    %v1506 = vunpack.c.l.b16 %v926
    %v1507 = vunpack.c.l.b16 %v927
    %v1508 = vunpack.c.l.b16 %v928
    %v1509 = vunpack.c.l.b16 %v929
    %v1510 = vunpack.c.l.b16 %v930
    %v1511 = vunpack.c.l.b16 %v931
    %v1512 = vunpack.c.l.b16 %v932
    %v1513 = vunpack.c.l.b16 %v933
    %v1514 = vunpack.c.l.b16 %v934
    %v1515 = vunpack.c.l.b16 %v935
    %v1516 = vunpack.c.l.b16 %v936
    %v1517 = vunpack.c.l.b16 %v937
    %v1518 = vunpack.c.l.b16 %v938
    %v1519 = vunpack.c.l.b16 %v939
    %v1520 = vunpack.c.l.b16 %v940
    %v1521 = vunpack.c.l.b16 %v941
    %v1522 = vunpack.c.l.b16 %v942
    %v1523 = vunpack.c.l.b16 %v943
    %v1524 = vunpack.c.l.b16 %v944
    %v1525 = vunpack.c.l.b16 %v945
    %v1526 = vunpack.c.l.b16 %v946
    %v1527 = vunpack.c.l.b16 %v947
    %v1528 = vunpack.c.l.b16 %v948
    %v1529 = vunpack.c.l.b16 %v949
    %v1530 = vunpack.c.l.b16 %v950
    %v1531 = vunpack.c.l.b16 %v951
    %v1532 = vunpack.c.l.b16 %v952
    %v1533 = vunpack.c.l.b16 %v953
    %v1534 = vunpack.c.l.b16 %v954
    %v1535 = vunpack.c.l.b16 %v955
    %v1536 = vunpack.c.l.b16 %v956
    %v1537 = vunpack.c.l.b16 %v957
    %v1538 = vunpack.c.l.b16 %v958
    %v1539 = vunpack.c.l.b16 %v959
    %v1540 = vunpack.c.l.b16 %v960
    %v1541 = vunpack.c.l.b16 %v961
    %v1542 = vunpack.c.l.b16 %v962
    %v1543 = vunpack.c.l.b16 %v963
    %v1544 = vunpack.c.l.b16 %v964
    %v1545 = vunpack.c.l.b16 %v965
    %v1546 = vunpack.c.l.b16 %v966
    %v1547 = vunpack.c.l.b16 %v967
    %v1548 = vunpack.c.l.b16 %v968
    %v1549 = vunpack.c.l.b16 %v969
    %v1550 = vunpack.c.l.b16 %v970
    %v1551 = vunpack.c.l.b16 %v971
    %v1552 = vunpack.c.l.b16 %v972
    %v1553 = vunpack.c.l.b16 %v973
    %v1554 = vunpack.c.l.b16 %v974
    %v1555 = vunpack.c.l.b16 %v975
    %v1556 = vpack.c.b16 %v1269, %v1268
    %v1557 = vpack.c.b16 %v1271, %v1270
    %v1558 = vpack.c.b16 %v1273, %v1272
    %v1559 = vpack.c.b16 %v1275, %v1274
    %v1560 = vpack.c.b16 %v1277, %v1276
    %v1561 = vpack.c.b16 %v1279, %v1278
    %v1562 = vpack.c.b16 %v1281, %v1280
    %v1563 = vpack.c.b16 %v1283, %v1282
    %v1564 = vpack.c.b16 %v1285, %v1284
    %v1565 = vpack.c.b16 %v1287, %v1286
    %v1566 = vpack.c.b16 %v1289, %v1288
    %v1567 = vpack.c.b16 %v1291, %v1290
    %v1568 = vpack.c.b16 %v1293, %v1292
    %v1569 = vpack.c.b16 %v1295, %v1294
    %v1570 = vpack.c.b16 %v1297, %v1296
    %v1571 = vpack.c.b16 %v1299, %v1298
    %v1572 = vpack.c.b16 %v1301, %v1300
    %v1573 = vpack.c.b16 %v1303, %v1302
    %v1574 = vpack.c.b16 %v1305, %v1304
    %v1575 = vpack.c.b16 %v1307, %v1306
    %v1576 = vpack.c.b16 %v1309, %v1308
    %v1577 = vpack.c.b16 %v1311, %v1310
    %v1578 = vpack.c.b16 %v1313, %v1312
    %v1579 = vpack.c.b16 %v1315, %v1314
    %v1580 = vpack.c.b16 %v1317, %v1316
    %v1581 = vpack.c.b16 %v1319, %v1318
    %v1582 = vpack.c.b16 %v1321, %v1320
    %v1583 = vpack.c.b16 %v1323, %v1322
    %v1584 = vpack.c.b16 %v1325, %v1324
    %v1585 = vpack.c.b16 %v1327, %v1326
    %v1586 = vpack.c.b16 %v1329, %v1328
    %v1587 = vpack.c.b16 %v1331, %v1330
    %v1588 = vpack.c.b16 %v1333, %v1332
    %v1589 = vpack.c.b16 %v1335, %v1334
    %v1590 = vpack.c.b16 %v1337, %v1336
    %v1591 = vpack.c.b16 %v1339, %v1338
    %v1592 = vpack.c.b16 %v1341, %v1340
    %v1593 = vpack.c.b16 %v1343, %v1342
    %v1594 = vpack.c.b16 %v1345, %v1344
    %v1595 = vpack.c.b16 %v1347, %v1346
    %v1596 = vpack.c.b16 %v1349, %v1348
    %v1597 = vpack.c.b16 %v1351, %v1350
    %v1598 = vpack.c.b16 %v1353, %v1352
    %v1599 = vpack.c.b16 %v1355, %v1354
    %v1600 = vpack.c.b16 %v1357, %v1356
    %v1601 = vpack.c.b16 %v1359, %v1358
    %v1602 = vpack.c.b16 %v1361, %v1360
    %v1603 = vpack.c.b16 %v1363, %v1362
    %v1604 = vpack.c.b16 %v1365, %v1364
    %v1605 = vpack.c.b16 %v1367, %v1366
    %v1606 = vpack.c.b16 %v1369, %v1368
    %v1607 = vpack.c.b16 %v1371, %v1370
    %v1608 = vpack.c.b16 %v1373, %v1372
    %v1609 = vpack.c.b16 %v1375, %v1374
    %v1610 = vpack.c.b16 %v1377, %v1376
    %v1611 = vpack.c.b16 %v1379, %v1378
    %v1612 = vpack.c.b16 %v1381, %v1380
    %v1613 = vpack.c.b16 %v1383, %v1382
    %v1614 = vpack.c.b16 %v1385, %v1384
    %v1615 = vpack.c.b16 %v1387, %v1386
    %v1616 = vpack.c.b16 %v1389, %v1388
    %v1617 = vpack.c.b16 %v1391, %v1390
    %v1618 = vpack.c.b16 %v1393, %v1392
    %v1619 = vpack.c.b16 %v1395, %v1394
    %v1620 = vpack.c.b16 %v1397, %v1396
    %v1621 = vpack.c.b16 %v1399, %v1398
    %v1622 = vpack.c.b16 %v1401, %v1400
    %v1623 = vpack.c.b16 %v1403, %v1402
    %v1624 = vpack.c.b16 %v1405, %v1404
    %v1625 = vpack.c.b16 %v1407, %v1406
    %v1626 = vpack.c.b16 %v1409, %v1408
    %v1627 = vpack.c.b16 %v1411, %v1410
    %v1628 = vpack.c.b16 %v1413, %v1412
    %v1629 = vpack.c.b16 %v1415, %v1414
    %v1630 = vpack.c.b16 %v1417, %v1416
    %v1631 = vpack.c.b16 %v1419, %v1418
    %v1632 = vpack.c.b16 %v1421, %v1420
    %v1633 = vpack.c.b16 %v1423, %v1422
    %v1634 = vpack.c.b16 %v1425, %v1424
    %v1635 = vpack.c.b16 %v1427, %v1426
    %v1636 = vpack.c.b16 %v1429, %v1428
    %v1637 = vpack.c.b16 %v1431, %v1430
    %v1638 = vpack.c.b16 %v1433, %v1432
    %v1639 = vpack.c.b16 %v1435, %v1434
    %v1640 = vpack.c.b16 %v1437, %v1436
    %v1641 = vpack.c.b16 %v1439, %v1438
    %v1642 = vpack.c.b16 %v1441, %v1440
    %v1643 = vpack.c.b16 %v1443, %v1442
    %v1644 = vpack.c.b16 %v1445, %v1444
    %v1645 = vpack.c.b16 %v1447, %v1446
    %v1646 = vpack.c.b16 %v1449, %v1448
    %v1647 = vpack.c.b16 %v1451, %v1450
    %v1648 = vpack.c.b16 %v1453, %v1452
    %v1649 = vpack.c.b16 %v1455, %v1454
    %v1650 = vpack.c.b16 %v1457, %v1456
    %v1651 = vpack.c.b16 %v1459, %v1458
    %v1652 = vpack.c.b16 %v1461, %v1460
    %v1653 = vpack.c.b16 %v1463, %v1462
    %v1654 = vpack.c.b16 %v1465, %v1464
    %v1655 = vpack.c.b16 %v1467, %v1466
    %v1656 = vpack.c.b16 %v1469, %v1468
    %v1657 = vpack.c.b16 %v1471, %v1470
    %v1658 = vpack.c.b16 %v1473, %v1472
    %v1659 = vpack.c.b16 %v1475, %v1474
    %v1660 = vpack.c.b16 %v1477, %v1476
    %v1661 = vpack.c.b16 %v1479, %v1478
    %v1662 = vpack.c.b16 %v1481, %v1480
    %v1663 = vpack.c.b16 %v1483, %v1482
    %v1664 = vpack.c.b16 %v1485, %v1484
    %v1665 = vpack.c.b16 %v1487, %v1486
    %v1666 = vpack.c.b16 %v1489, %v1488
    %v1667 = vpack.c.b16 %v1491, %v1490
    %v1668 = vpack.c.b16 %v1493, %v1492
    %v1669 = vpack.c.b16 %v1495, %v1494
    %v1670 = vpack.c.b16 %v1497, %v1496
    %v1671 = vpack.c.b16 %v1499, %v1498
    %v1672 = vpack.c.b16 %v1501, %v1500
    %v1673 = vpack.c.b16 %v1503, %v1502
    %v1674 = vpack.c.b16 %v1505, %v1504
    %v1675 = vpack.c.b16 %v1507, %v1506
    %v1676 = vpack.c.b16 %v1509, %v1508
    %v1677 = vpack.c.b16 %v1511, %v1510
    %v1678 = vpack.c.b16 %v1513, %v1512
    %v1679 = vpack.c.b16 %v1515, %v1514
    %v1680 = vpack.c.b16 %v1517, %v1516
    %v1681 = vpack.c.b16 %v1519, %v1518
    %v1682 = vpack.c.b16 %v1521, %v1520
    %v1683 = vpack.c.b16 %v1523, %v1522
    %v1684 = vpack.c.b16 %v1525, %v1524
    %v1685 = vpack.c.b16 %v1527, %v1526
    %v1686 = vpack.c.b16 %v1529, %v1528
    %v1687 = vpack.c.b16 %v1531, %v1530
    %v1688 = vpack.c.b16 %v1533, %v1532
    %v1689 = vpack.c.b16 %v1535, %v1534
    %v1690 = vpack.c.b16 %v1537, %v1536
    %v1691 = vpack.c.b16 %v1539, %v1538
    %v1692 = vpack.c.b16 %v1541, %v1540
    %v1693 = vpack.c.b16 %v1543, %v1542
    %v1694 = vpack.c.b16 %v1545, %v1544
    %v1695 = vpack.c.b16 %v1547, %v1546
    %v1696 = vpack.c.b16 %v1549, %v1548
    %v1697 = vpack.c.b16 %v1551, %v1550
    %v1698 = vpack.c.b16 %v1553, %v1552
    %v1699 = vpack.c.b16 %v1555, %v1554
    %1844 = vmatpush.bf16.msra.mxu0 %v1563
    %1845 = vmatpush.bf16.msra.mxu0 %v1562
    %1846 = vmatpush.bf16.msra.mxu0 %v1561
    %1847 = vmatpush.bf16.msra.mxu0 %v1560
    %1848 = vmatpush.bf16.msra.mxu0 %v1559
    %1849 = vmatpush.bf16.msra.mxu0 %v1558
    %1850 = vmatpush.bf16.msra.mxu0 %v1557
    %1851 = vmatpush.bf16.msra.mxu0 %v1556
    %1852 = vmatmul.bf16.gmra.mxu0 %v652
    %v1853 = vpop.f32.mrf.mxu0
    %v1854 = vadd.f32 %v978, %v1853
    %v1855 = vpop.f32.mrf.mxu0
    %v1856 = vadd.f32 %v978, %v1855
    %1857 = vmatmul.bf16.gmra.mxu0 %v670
    %v1858 = vpop.f32.mrf.mxu0
    %v1859 = vadd.f32 %v978, %v1858
    %v1860 = vpop.f32.mrf.mxu0
    %v1861 = vadd.f32 %v978, %v1860
    %1862 = vdwg.mxu0
    %1863 = vmatpush.bf16.msra.mxu0 %v1571
    %1864 = vmatpush.bf16.msra.mxu0 %v1570
    %1865 = vmatpush.bf16.msra.mxu0 %v1569
    %1866 = vmatpush.bf16.msra.mxu0 %v1568
    %1867 = vmatpush.bf16.msra.mxu0 %v1567
    %1868 = vmatpush.bf16.msra.mxu0 %v1566
    %1869 = vmatpush.bf16.msra.mxu0 %v1565
    %1870 = vmatpush.bf16.msra.mxu0 %v1564
    %1871 = vmatmul.bf16.gmra.mxu0 %v653
    %v1872 = vpop.f32.mrf.mxu0
    %v1873 = vadd.f32 %v1854, %v1872
    %v1874 = vpop.f32.mrf.mxu0
    %v1875 = vadd.f32 %v1856, %v1874
    %1876 = vmatmul.bf16.gmra.mxu0 %v671
    %v1877 = vpop.f32.mrf.mxu0
    %v1878 = vadd.f32 %v1859, %v1877
    %v1879 = vpop.f32.mrf.mxu0
    %v1880 = vadd.f32 %v1861, %v1879
    %1881 = vdwg.mxu0
    %1882 = vmatpush.bf16.msra.mxu0 %v1579
    %1883 = vmatpush.bf16.msra.mxu0 %v1578
    %1884 = vmatpush.bf16.msra.mxu0 %v1577
    %1885 = vmatpush.bf16.msra.mxu0 %v1576
    %1886 = vmatpush.bf16.msra.mxu0 %v1575
    %1887 = vmatpush.bf16.msra.mxu0 %v1574
    %1888 = vmatpush.bf16.msra.mxu0 %v1573
    %1889 = vmatpush.bf16.msra.mxu0 %v1572
    %1890 = vmatmul.bf16.gmra.mxu0 %v654
    %v1891 = vpop.f32.mrf.mxu0
    %v1892 = vadd.f32 %v1873, %v1891
    %v1893 = vpop.f32.mrf.mxu0
    %v1894 = vadd.f32 %v1875, %v1893
    %1895 = vmatmul.bf16.gmra.mxu0 %v672
    %v1896 = vpop.f32.mrf.mxu0
    %v1897 = vadd.f32 %v1878, %v1896
    %v1898 = vpop.f32.mrf.mxu0
    %v1899 = vadd.f32 %v1880, %v1898
    %1900 = vdwg.mxu0
    %1901 = vmatpush.bf16.msra.mxu0 %v1587
    %1902 = vmatpush.bf16.msra.mxu0 %v1586
    %1903 = vmatpush.bf16.msra.mxu0 %v1585
    %1904 = vmatpush.bf16.msra.mxu0 %v1584
    %1905 = vmatpush.bf16.msra.mxu0 %v1583
    %1906 = vmatpush.bf16.msra.mxu0 %v1582
    %1907 = vmatpush.bf16.msra.mxu0 %v1581
    %1908 = vmatpush.bf16.msra.mxu0 %v1580
    %1909 = vmatmul.bf16.gmra.mxu0 %v655
    %v1910 = vpop.f32.mrf.mxu0
    %v1911 = vadd.f32 %v1892, %v1910
    %v1912 = vpop.f32.mrf.mxu0
    %v1913 = vadd.f32 %v1894, %v1912
    %1914 = vmatmul.bf16.gmra.mxu0 %v673
    %v1915 = vpop.f32.mrf.mxu0
    %v1916 = vadd.f32 %v1897, %v1915
    %v1917 = vpop.f32.mrf.mxu0
    %v1918 = vadd.f32 %v1899, %v1917
    %1919 = vdwg.mxu0
    %1920 = vmatpush.bf16.msra.mxu0 %v1595
    %1921 = vmatpush.bf16.msra.mxu0 %v1594
    %1922 = vmatpush.bf16.msra.mxu0 %v1593
    %1923 = vmatpush.bf16.msra.mxu0 %v1592
    %1924 = vmatpush.bf16.msra.mxu0 %v1591
    %1925 = vmatpush.bf16.msra.mxu0 %v1590
    %1926 = vmatpush.bf16.msra.mxu0 %v1589
    %1927 = vmatpush.bf16.msra.mxu0 %v1588
    %1928 = vmatmul.bf16.gmra.mxu0 %v656
    %v1929 = vpop.f32.mrf.mxu0
    %v1930 = vadd.f32 %v1911, %v1929
    %v1931 = vpop.f32.mrf.mxu0
    %v1932 = vadd.f32 %v1913, %v1931
    %1933 = vmatmul.bf16.gmra.mxu0 %v674
    %v1934 = vpop.f32.mrf.mxu0
    %v1935 = vadd.f32 %v1916, %v1934
    %v1936 = vpop.f32.mrf.mxu0
    %v1937 = vadd.f32 %v1918, %v1936
    %1938 = vdwg.mxu0
    %1939 = vmatpush.bf16.msra.mxu0 %v1603
    %1940 = vmatpush.bf16.msra.mxu0 %v1602
    %1941 = vmatpush.bf16.msra.mxu0 %v1601
    %1942 = vmatpush.bf16.msra.mxu0 %v1600
    %1943 = vmatpush.bf16.msra.mxu0 %v1599
    %1944 = vmatpush.bf16.msra.mxu0 %v1598
    %1945 = vmatpush.bf16.msra.mxu0 %v1597
    %1946 = vmatpush.bf16.msra.mxu0 %v1596
    %1947 = vmatmul.bf16.gmra.mxu0 %v657
    %v1948 = vpop.f32.mrf.mxu0
    %v1949 = vadd.f32 %v1930, %v1948
    %v1950 = vpop.f32.mrf.mxu0
    %v1951 = vadd.f32 %v1932, %v1950
    %1952 = vmatmul.bf16.gmra.mxu0 %v675
    %v1953 = vpop.f32.mrf.mxu0
    %v1954 = vadd.f32 %v1935, %v1953
    %v1955 = vpop.f32.mrf.mxu0
    %v1956 = vadd.f32 %v1937, %v1955
    %1957 = vdwg.mxu0
    %1958 = vmatpush.bf16.msra.mxu0 %v1611
    %1959 = vmatpush.bf16.msra.mxu0 %v1610
    %1960 = vmatpush.bf16.msra.mxu0 %v1609
    %1961 = vmatpush.bf16.msra.mxu0 %v1608
    %1962 = vmatpush.bf16.msra.mxu0 %v1607
    %1963 = vmatpush.bf16.msra.mxu0 %v1606
    %1964 = vmatpush.bf16.msra.mxu0 %v1605
    %1965 = vmatpush.bf16.msra.mxu0 %v1604
    %1966 = vmatmul.bf16.gmra.mxu0 %v658
    %v1967 = vpop.f32.mrf.mxu0
    %v1968 = vadd.f32 %v1949, %v1967
    %v1969 = vpop.f32.mrf.mxu0
    %v1970 = vadd.f32 %v1951, %v1969
    %1971 = vmatmul.bf16.gmra.mxu0 %v676
    %v1972 = vpop.f32.mrf.mxu0
    %v1973 = vadd.f32 %v1954, %v1972
    %v1974 = vpop.f32.mrf.mxu0
    %v1975 = vadd.f32 %v1956, %v1974
    %1976 = vdwg.mxu0
    %1977 = vmatpush.bf16.msra.mxu0 %v1619
    %1978 = vmatpush.bf16.msra.mxu0 %v1618
    %1979 = vmatpush.bf16.msra.mxu0 %v1617
    %1980 = vmatpush.bf16.msra.mxu0 %v1616
    %1981 = vmatpush.bf16.msra.mxu0 %v1615
    %1982 = vmatpush.bf16.msra.mxu0 %v1614
    %1983 = vmatpush.bf16.msra.mxu0 %v1613
    %1984 = vmatpush.bf16.msra.mxu0 %v1612
    %1985 = vmatmul.bf16.gmra.mxu0 %v659
    %v1986 = vpop.f32.mrf.mxu0
    %v1987 = vadd.f32 %v1968, %v1986
    %v1988 = vpop.f32.mrf.mxu0
    %v1989 = vadd.f32 %v1970, %v1988
    %1990 = vmatmul.bf16.gmra.mxu0 %v677
    %v1991 = vpop.f32.mrf.mxu0
    %v1992 = vadd.f32 %v1973, %v1991
    %v1993 = vpop.f32.mrf.mxu0
    %v1994 = vadd.f32 %v1975, %v1993
    %1995 = vdwg.mxu0
    %1996 = vmatpush.bf16.msra.mxu0 %v1627
    %1997 = vmatpush.bf16.msra.mxu0 %v1626
    %1998 = vmatpush.bf16.msra.mxu0 %v1625
    %1999 = vmatpush.bf16.msra.mxu0 %v1624
    %2000 = vmatpush.bf16.msra.mxu0 %v1623
    %2001 = vmatpush.bf16.msra.mxu0 %v1622
    %2002 = vmatpush.bf16.msra.mxu0 %v1621
    %2003 = vmatpush.bf16.msra.mxu0 %v1620
    %2004 = vmatmul.bf16.gmra.mxu0 %v660
    %v2005 = vpop.f32.mrf.mxu0
    %v2006 = vadd.f32 %v1987, %v2005
    %v2007 = vpop.f32.mrf.mxu0
    %v2008 = vadd.f32 %v1989, %v2007
    %2009 = vmatmul.bf16.gmra.mxu0 %v678
    %v2010 = vpop.f32.mrf.mxu0
    %v2011 = vadd.f32 %v1992, %v2010
    %v2012 = vpop.f32.mrf.mxu0
    %v2013 = vadd.f32 %v1994, %v2012
    %2014 = vdwg.mxu0
    %2015 = vmatpush.bf16.msra.mxu0 %v1635
    %2016 = vmatpush.bf16.msra.mxu0 %v1634
    %2017 = vmatpush.bf16.msra.mxu0 %v1633
    %2018 = vmatpush.bf16.msra.mxu0 %v1632
    %2019 = vmatpush.bf16.msra.mxu0 %v1631
    %2020 = vmatpush.bf16.msra.mxu0 %v1630
    %2021 = vmatpush.bf16.msra.mxu0 %v1629
    %2022 = vmatpush.bf16.msra.mxu0 %v1628
    %2023 = vmatmul.bf16.gmra.mxu0 %v661
    %v2024 = vpop.f32.mrf.mxu0
    %v2025 = vadd.f32 %v2006, %v2024
    %v2026 = vpop.f32.mrf.mxu0
    %v2027 = vadd.f32 %v2008, %v2026
    %2028 = vmatmul.bf16.gmra.mxu0 %v679
    %v2029 = vpop.f32.mrf.mxu0
    %v2030 = vadd.f32 %v2011, %v2029
    %v2031 = vpop.f32.mrf.mxu0
    %v2032 = vadd.f32 %v2013, %v2031
    %2033 = vdwg.mxu0
    %2034 = vmatpush.bf16.msra.mxu0 %v1643
    %2035 = vmatpush.bf16.msra.mxu0 %v1642
    %2036 = vmatpush.bf16.msra.mxu0 %v1641
    %2037 = vmatpush.bf16.msra.mxu0 %v1640
    %2038 = vmatpush.bf16.msra.mxu0 %v1639
    %2039 = vmatpush.bf16.msra.mxu0 %v1638
    %2040 = vmatpush.bf16.msra.mxu0 %v1637
    %2041 = vmatpush.bf16.msra.mxu0 %v1636
    %2042 = vmatmul.bf16.gmra.mxu0 %v662
    %v2043 = vpop.f32.mrf.mxu0
    %v2044 = vadd.f32 %v2025, %v2043
    %v2045 = vpop.f32.mrf.mxu0
    %v2046 = vadd.f32 %v2027, %v2045
    %2047 = vmatmul.bf16.gmra.mxu0 %v680
    %v2048 = vpop.f32.mrf.mxu0
    %v2049 = vadd.f32 %v2030, %v2048
    %v2050 = vpop.f32.mrf.mxu0
    %v2051 = vadd.f32 %v2032, %v2050
    %2052 = vdwg.mxu0
    %2053 = vmatpush.bf16.msra.mxu0 %v1651
    %2054 = vmatpush.bf16.msra.mxu0 %v1650
    %2055 = vmatpush.bf16.msra.mxu0 %v1649
    %2056 = vmatpush.bf16.msra.mxu0 %v1648
    %2057 = vmatpush.bf16.msra.mxu0 %v1647
    %2058 = vmatpush.bf16.msra.mxu0 %v1646
    %2059 = vmatpush.bf16.msra.mxu0 %v1645
    %2060 = vmatpush.bf16.msra.mxu0 %v1644
    %2061 = vmatmul.bf16.gmra.mxu0 %v663
    %v2062 = vpop.f32.mrf.mxu0
    %v2063 = vadd.f32 %v2044, %v2062
    %v2064 = vpop.f32.mrf.mxu0
    %v2065 = vadd.f32 %v2046, %v2064
    %2066 = vmatmul.bf16.gmra.mxu0 %v681
    %v2067 = vpop.f32.mrf.mxu0
    %v2068 = vadd.f32 %v2049, %v2067
    %v2069 = vpop.f32.mrf.mxu0
    %v2070 = vadd.f32 %v2051, %v2069
    %2071 = vdwg.mxu0
    %2072 = vmatpush.bf16.msra.mxu0 %v1659
    %2073 = vmatpush.bf16.msra.mxu0 %v1658
    %2074 = vmatpush.bf16.msra.mxu0 %v1657
    %2075 = vmatpush.bf16.msra.mxu0 %v1656
    %2076 = vmatpush.bf16.msra.mxu0 %v1655
    %2077 = vmatpush.bf16.msra.mxu0 %v1654
    %2078 = vmatpush.bf16.msra.mxu0 %v1653
    %2079 = vmatpush.bf16.msra.mxu0 %v1652
    %2080 = vmatmul.bf16.gmra.mxu0 %v664
    %v2081 = vpop.f32.mrf.mxu0
    %v2082 = vadd.f32 %v2063, %v2081
    %v2083 = vpop.f32.mrf.mxu0
    %v2084 = vadd.f32 %v2065, %v2083
    %2085 = vmatmul.bf16.gmra.mxu0 %v682
    %v2086 = vpop.f32.mrf.mxu0
    %v2087 = vadd.f32 %v2068, %v2086
    %v2088 = vpop.f32.mrf.mxu0
    %v2089 = vadd.f32 %v2070, %v2088
    %2090 = vdwg.mxu0
    %2091 = vmatpush.bf16.msra.mxu0 %v1667
    %2092 = vmatpush.bf16.msra.mxu0 %v1666
    %2093 = vmatpush.bf16.msra.mxu0 %v1665
    %2094 = vmatpush.bf16.msra.mxu0 %v1664
    %2095 = vmatpush.bf16.msra.mxu0 %v1663
    %2096 = vmatpush.bf16.msra.mxu0 %v1662
    %2097 = vmatpush.bf16.msra.mxu0 %v1661
    %2098 = vmatpush.bf16.msra.mxu0 %v1660
    %2099 = vmatmul.bf16.gmra.mxu0 %v665
    %v2100 = vpop.f32.mrf.mxu0
    %v2101 = vadd.f32 %v2082, %v2100
    %v2102 = vpop.f32.mrf.mxu0
    %v2103 = vadd.f32 %v2084, %v2102
    %2104 = vmatmul.bf16.gmra.mxu0 %v683
    %v2105 = vpop.f32.mrf.mxu0
    %v2106 = vadd.f32 %v2087, %v2105
    %v2107 = vpop.f32.mrf.mxu0
    %v2108 = vadd.f32 %v2089, %v2107
    %2109 = vdwg.mxu0
    %2110 = vmatpush.bf16.msra.mxu0 %v1675
    %2111 = vmatpush.bf16.msra.mxu0 %v1674
    %2112 = vmatpush.bf16.msra.mxu0 %v1673
    %2113 = vmatpush.bf16.msra.mxu0 %v1672
    %2114 = vmatpush.bf16.msra.mxu0 %v1671
    %2115 = vmatpush.bf16.msra.mxu0 %v1670
    %2116 = vmatpush.bf16.msra.mxu0 %v1669
    %2117 = vmatpush.bf16.msra.mxu0 %v1668
    %2118 = vmatmul.bf16.gmra.mxu0 %v666
    %v2119 = vpop.f32.mrf.mxu0
    %v2120 = vadd.f32 %v2101, %v2119
    %v2121 = vpop.f32.mrf.mxu0
    %v2122 = vadd.f32 %v2103, %v2121
    %2123 = vmatmul.bf16.gmra.mxu0 %v684
    %v2124 = vpop.f32.mrf.mxu0
    %v2125 = vadd.f32 %v2106, %v2124
    %v2126 = vpop.f32.mrf.mxu0
    %v2127 = vadd.f32 %v2108, %v2126
    %2128 = vdwg.mxu0
    %2129 = vmatpush.bf16.msra.mxu0 %v1683
    %2130 = vmatpush.bf16.msra.mxu0 %v1682
    %2131 = vmatpush.bf16.msra.mxu0 %v1681
    %2132 = vmatpush.bf16.msra.mxu0 %v1680
    %2133 = vmatpush.bf16.msra.mxu0 %v1679
    %2134 = vmatpush.bf16.msra.mxu0 %v1678
    %2135 = vmatpush.bf16.msra.mxu0 %v1677
    %2136 = vmatpush.bf16.msra.mxu0 %v1676
    %2137 = vmatmul.bf16.gmra.mxu0 %v667
    %v2138 = vpop.f32.mrf.mxu0
    %v2139 = vadd.f32 %v2120, %v2138
    %v2140 = vpop.f32.mrf.mxu0
    %v2141 = vadd.f32 %v2122, %v2140
    %2142 = vmatmul.bf16.gmra.mxu0 %v685
    %v2143 = vpop.f32.mrf.mxu0
    %v2144 = vadd.f32 %v2125, %v2143
    %v2145 = vpop.f32.mrf.mxu0
    %v2146 = vadd.f32 %v2127, %v2145
    %2147 = vdwg.mxu0
    %2148 = vmatpush.bf16.msra.mxu0 %v1691
    %2149 = vmatpush.bf16.msra.mxu0 %v1690
    %2150 = vmatpush.bf16.msra.mxu0 %v1689
    %2151 = vmatpush.bf16.msra.mxu0 %v1688
    %2152 = vmatpush.bf16.msra.mxu0 %v1687
    %2153 = vmatpush.bf16.msra.mxu0 %v1686
    %2154 = vmatpush.bf16.msra.mxu0 %v1685
    %2155 = vmatpush.bf16.msra.mxu0 %v1684
    %2156 = vmatmul.bf16.gmra.mxu0 %v668
    %v2157 = vpop.f32.mrf.mxu0
    %v2158 = vadd.f32 %v2139, %v2157
    %v2159 = vpop.f32.mrf.mxu0
    %v2160 = vadd.f32 %v2141, %v2159
    %2161 = vmatmul.bf16.gmra.mxu0 %v686
    %v2162 = vpop.f32.mrf.mxu0
    %v2163 = vadd.f32 %v2144, %v2162
    %v2164 = vpop.f32.mrf.mxu0
    %v2165 = vadd.f32 %v2146, %v2164
    %2166 = vdwg.mxu0
    %2167 = vmatpush.bf16.msra.mxu0 %v1699
    %2168 = vmatpush.bf16.msra.mxu0 %v1698
    %2169 = vmatpush.bf16.msra.mxu0 %v1697
    %2170 = vmatpush.bf16.msra.mxu0 %v1696
    %2171 = vmatpush.bf16.msra.mxu0 %v1695
    %2172 = vmatpush.bf16.msra.mxu0 %v1694
    %2173 = vmatpush.bf16.msra.mxu0 %v1693
    %2174 = vmatpush.bf16.msra.mxu0 %v1692
    %2175 = vmatmul.bf16.gmra.mxu0 %v669
    %v2176 = vpop.f32.mrf.mxu0
    %v2177 = vadd.f32 %v2158, %v2176
    %v2178 = vpop.f32.mrf.mxu0
    %v2179 = vadd.f32 %v2160, %v2178
    %2180 = vmatmul.bf16.gmra.mxu0 %v687
    %v2181 = vpop.f32.mrf.mxu0
    %v2182 = vadd.f32 %v2163, %v2181
    %v2183 = vpop.f32.mrf.mxu0
    %v2184 = vadd.f32 %v2165, %v2183
    %2185 = vdwg.mxu0
    %v2186 = vmax.f32 %v2177, 0.0
    %v2187 = vmax.f32 %v2179, 0.0
    %v2188 = vmax.f32 %v2182, 0.0
    %v2189 = vmax.f32 %v2184, 0.0
    %v2194 = vrot.slane %v2186, 3
    %v2195 = vsel %vm390, %v391, %v2194
    %v2196 = vrot.slane %v2187, 3
    %v2197 = vsel %vm390, %v2194, %v2196
    %v2198 = vrot.slane %v2188, 3
    %v2199 = vsel %vm390, %v2196, %v2198
    %v2200 = vrot.slane %v2189, 3
    %v2201 = vsel %vm390, %v2198, %v2200
    %v2206 = vsel %vm377, %v2195, 0.0
    %v2207 = vsel %vm378, %v2197, 0.0
    %v2208 = vsel %vm379, %v2199, 0.0
    %v2209 = vsel %vm380, %v2201, 0.0
    %v2210 = vrot.slane %v2186, 4
    %v2211 = vsel %vm432, %v433, %v2210
    %v2212 = vrot.slane %v2187, 4
    %v2213 = vsel %vm432, %v2210, %v2212
    %v2214 = vrot.slane %v2188, 4
    %v2215 = vsel %vm432, %v2212, %v2214
    %v2216 = vrot.slane %v2189, 4
    %v2217 = vsel %vm432, %v2214, %v2216
    %v2222 = vsel %vm428, %v2211, 0.0
    %v2223 = vsel %vm429, %v2213, 0.0
    %v2224 = vsel %vm430, %v2215, 0.0
    %v2225 = vsel %vm431, %v2217, 0.0
    %v2226 = vrot.slane %v2186, 5
    %v2227 = vsel %vm474, %v475, %v2226
    %v2228 = vrot.slane %v2187, 5
    %v2229 = vsel %vm474, %v2226, %v2228
    %v2230 = vrot.slane %v2188, 5
    %v2231 = vsel %vm474, %v2228, %v2230
    %v2232 = vrot.slane %v2189, 5
    %v2233 = vsel %vm474, %v2230, %v2232
    %v2238 = vsel %vm470, %v2227, 0.0
    %v2239 = vsel %vm471, %v2229, 0.0
    %v2240 = vsel %vm472, %v2231, 0.0
    %v2241 = vsel %vm473, %v2233, 0.0
    %v2242 = vrot.slane %v2186, 7
    %v2243 = vsel %vm516, %v517, %v2242
    %v2244 = vrot.slane %v2187, 7
    %v2245 = vsel %vm516, %v2242, %v2244
    %v2246 = vrot.slane %v2188, 7
    %v2247 = vsel %vm516, %v2244, %v2246
    %v2248 = vrot.slane %v2189, 7
    %v2249 = vsel %vm516, %v2246, %v2248
    %v2254 = vsel %vm512, %v2243, 0.0
    %v2255 = vsel %vm513, %v2245, 0.0
    %v2256 = vsel %vm514, %v2247, 0.0
    %v2257 = vsel %vm515, %v2249, 0.0
    %v2258 = vrot.slane %v2186, 1
    %v2259 = vrot.slane %v2187, 1
    %v2260 = vsel %vm558, %v2258, %v2259
    %v2261 = vrot.slane %v2188, 1
    %v2262 = vsel %vm558, %v2259, %v2261
    %v2263 = vrot.slane %v2189, 1
    %v2264 = vsel %vm558, %v2261, %v2263
    %v2265 = vsel %vm558, %v2263, %v573
    %v2270 = vsel %vm554, %v2260, 0.0
    %v2271 = vsel %vm555, %v2262, 0.0
    %v2272 = vsel %vm556, %v2264, 0.0
    %v2273 = vsel %vm557, %v2265, 0.0
    %v2274 = vsel %vm390, %v2200, %v391
    %v2276 = vsel %vm596, %v2197, 0.0
    %v2277 = vsel %vm597, %v2199, 0.0
    %v2278 = vsel %vm598, %v2201, 0.0
    %v2279 = vsel %vm599, %v2274, 0.0
    %v2280 = vsel %vm432, %v2216, %v433
    %v2282 = vsel %vm616, %v2213, 0.0
    %v2283 = vsel %vm617, %v2215, 0.0
    %v2284 = vsel %vm618, %v2217, 0.0
    %v2285 = vsel %vm619, %v2280, 0.0
    %v2286 = vsel %vm474, %v2232, %v475
    %v2288 = vsel %vm636, %v2229, 0.0
    %v2289 = vsel %vm637, %v2231, 0.0
    %v2290 = vsel %vm638, %v2233, 0.0
    %v2291 = vsel %vm639, %v2286, 0.0
    %v2292 = vpack.c.bf16 %v2207, %v2206
    %v2293 = vpack.c.bf16 %v2223, %v2222
    %v2294 = vpack.c.bf16 %v2239, %v2238
    %v2295 = vpack.c.bf16 %v2255, %v2254
    %v2296 = vpack.c.bf16 %v2187, %v2186
    %v2297 = vpack.c.bf16 %v2271, %v2270
    %v2298 = vpack.c.bf16 %v2277, %v2276
    %v2299 = vpack.c.bf16 %v2283, %v2282
    %v2300 = vpack.c.bf16 %v2289, %v2288
    %v2301 = vpack.c.bf16 %v2209, %v2208
    %v2302 = vpack.c.bf16 %v2225, %v2224
    %v2303 = vpack.c.bf16 %v2241, %v2240
    %v2304 = vpack.c.bf16 %v2257, %v2256
    %v2305 = vpack.c.bf16 %v2189, %v2188
    %v2306 = vpack.c.bf16 %v2273, %v2272
    %v2307 = vpack.c.bf16 %v2279, %v2278
    %v2308 = vpack.c.bf16 %v2285, %v2284
    %v2309 = vpack.c.bf16 %v2291, %v2290
    %v2310 = vld [vmem:[%s5] sm:$0xff]
    %v2311 = vld [vmem:[%s5 + $0x8] sm:$0xff]
    %v2312 = vld [vmem:[%s5 + $0x10] sm:$0xff]
    %v2313 = vld [vmem:[%s5 + $0x18] sm:$0xff]
    %v2314 = vld [vmem:[%s5 + $0x20] sm:$0xff]
    %v2315 = vld [vmem:[%s5 + $0x28] sm:$0xff]
    %v2316 = vld [vmem:[%s5 + $0x30] sm:$0xff]
    %v2317 = vld [vmem:[%s5 + $0x38] sm:$0xff]
    %v2318 = vld [vmem:[%s5 + $0x40] sm:$0xff]
    %v2319 = vld [vmem:[%s5 + $0x48] sm:$0xff]
    %v2320 = vld [vmem:[%s5 + $0x50] sm:$0xff]
    %v2321 = vld [vmem:[%s5 + $0x58] sm:$0xff]
    %v2322 = vld [vmem:[%s5 + $0x60] sm:$0xff]
    %v2323 = vld [vmem:[%s5 + $0x68] sm:$0xff]
    %v2324 = vld [vmem:[%s5 + $0x70] sm:$0xff]
    %v2325 = vld [vmem:[%s5 + $0x78] sm:$0xff]
    %v2326 = vld [vmem:[%s5 + $0x80] sm:$0xff]
    %v2327 = vld [vmem:[%s5 + $0x88] sm:$0xff]
    %v2328 = vld [vmem:[%s5 + $0x90] sm:$0xff]
    %v2329 = vld [vmem:[%s5 + $0x98] sm:$0xff]
    %v2330 = vld [vmem:[%s5 + $0xa0] sm:$0xff]
    %v2331 = vld [vmem:[%s5 + $0xa8] sm:$0xff]
    %v2332 = vld [vmem:[%s5 + $0xb0] sm:$0xff]
    %v2333 = vld [vmem:[%s5 + $0xb8] sm:$0xff]
    %v2334 = vld [vmem:[%s5 + $0xc0] sm:$0xff]
    %v2335 = vld [vmem:[%s5 + $0xc8] sm:$0xff]
    %v2336 = vld [vmem:[%s5 + $0xd0] sm:$0xff]
    %v2337 = vld [vmem:[%s5 + $0xd8] sm:$0xff]
    %v2338 = vld [vmem:[%s5 + $0xe0] sm:$0xff]
    %v2339 = vld [vmem:[%s5 + $0xe8] sm:$0xff]
    %v2340 = vld [vmem:[%s5 + $0xf0] sm:$0xff]
    %v2341 = vld [vmem:[%s5 + $0xf8] sm:$0xff]
    %v2342 = vld [vmem:[%s5 + $0x100] sm:$0xff]
    %v2343 = vld [vmem:[%s5 + $0x108] sm:$0xff]
    %v2344 = vld [vmem:[%s5 + $0x110] sm:$0xff]
    %v2345 = vld [vmem:[%s5 + $0x118] sm:$0xff]
    %v2346 = vld [vmem:[%s5 + $0x120] sm:$0xff]
    %v2347 = vld [vmem:[%s5 + $0x128] sm:$0xff]
    %v2348 = vld [vmem:[%s5 + $0x130] sm:$0xff]
    %v2349 = vld [vmem:[%s5 + $0x138] sm:$0xff]
    %v2350 = vld [vmem:[%s5 + $0x140] sm:$0xff]
    %v2351 = vld [vmem:[%s5 + $0x148] sm:$0xff]
    %v2352 = vld [vmem:[%s5 + $0x150] sm:$0xff]
    %v2353 = vld [vmem:[%s5 + $0x158] sm:$0xff]
    %v2354 = vld [vmem:[%s5 + $0x160] sm:$0xff]
    %v2355 = vld [vmem:[%s5 + $0x168] sm:$0xff]
    %v2356 = vld [vmem:[%s5 + $0x170] sm:$0xff]
    %v2357 = vld [vmem:[%s5 + $0x178] sm:$0xff]
    %v2358 = vld [vmem:[%s5 + $0x180] sm:$0xff]
    %v2359 = vld [vmem:[%s5 + $0x188] sm:$0xff]
    %v2360 = vld [vmem:[%s5 + $0x190] sm:$0xff]
    %v2361 = vld [vmem:[%s5 + $0x198] sm:$0xff]
    %v2362 = vld [vmem:[%s5 + $0x1a0] sm:$0xff]
    %v2363 = vld [vmem:[%s5 + $0x1a8] sm:$0xff]
    %v2364 = vld [vmem:[%s5 + $0x1b0] sm:$0xff]
    %v2365 = vld [vmem:[%s5 + $0x1b8] sm:$0xff]
    %v2366 = vld [vmem:[%s5 + $0x1c0] sm:$0xff]
    %v2367 = vld [vmem:[%s5 + $0x1c8] sm:$0xff]
    %v2368 = vld [vmem:[%s5 + $0x1d0] sm:$0xff]
    %v2369 = vld [vmem:[%s5 + $0x1d8] sm:$0xff]
    %v2370 = vld [vmem:[%s5 + $0x1e0] sm:$0xff]
    %v2371 = vld [vmem:[%s5 + $0x1e8] sm:$0xff]
    %v2372 = vld [vmem:[%s5 + $0x1f0] sm:$0xff]
    %v2373 = vld [vmem:[%s5 + $0x1f8] sm:$0xff]
    %v2374 = vld [vmem:[%s5 + $0x200] sm:$0xff]
    %v2375 = vld [vmem:[%s5 + $0x208] sm:$0xff]
    %v2376 = vld [vmem:[%s5 + $0x210] sm:$0xff]
    %v2377 = vld [vmem:[%s5 + $0x218] sm:$0xff]
    %v2378 = vld [vmem:[%s5 + $0x220] sm:$0xff]
    %v2379 = vld [vmem:[%s5 + $0x228] sm:$0xff]
    %v2380 = vld [vmem:[%s5 + $0x230] sm:$0xff]
    %v2381 = vld [vmem:[%s5 + $0x238] sm:$0xff]
    %v2382 = vld [vmem:[%s5 + $0x240] sm:$0xff]
    %v2383 = vld [vmem:[%s5 + $0x248] sm:$0xff]
    %v2384 = vld [vmem:[%s5 + $0x250] sm:$0xff]
    %v2385 = vld [vmem:[%s5 + $0x258] sm:$0xff]
    %v2386 = vld [vmem:[%s5 + $0x260] sm:$0xff]
    %v2387 = vld [vmem:[%s5 + $0x268] sm:$0xff]
    %v2388 = vld [vmem:[%s5 + $0x270] sm:$0xff]
    %v2389 = vld [vmem:[%s5 + $0x278] sm:$0xff]
    %v2390 = vld [vmem:[%s5 + $0x280] sm:$0xff]
    %v2391 = vld [vmem:[%s5 + $0x288] sm:$0xff]
    %v2392 = vld [vmem:[%s5 + $0x290] sm:$0xff]
    %v2393 = vld [vmem:[%s5 + $0x298] sm:$0xff]
    %v2394 = vld [vmem:[%s5 + $0x2a0] sm:$0xff]
    %v2395 = vld [vmem:[%s5 + $0x2a8] sm:$0xff]
    %v2396 = vld [vmem:[%s5 + $0x2b0] sm:$0xff]
    %v2397 = vld [vmem:[%s5 + $0x2b8] sm:$0xff]
    %v2398 = vld [vmem:[%s5 + $0x2c0] sm:$0xff]
    %v2399 = vld [vmem:[%s5 + $0x2c8] sm:$0xff]
    %v2400 = vld [vmem:[%s5 + $0x2d0] sm:$0xff]
    %v2401 = vld [vmem:[%s5 + $0x2d8] sm:$0xff]
    %v2402 = vld [vmem:[%s5 + $0x2e0] sm:$0xff]
    %v2403 = vld [vmem:[%s5 + $0x2e8] sm:$0xff]
    %v2404 = vld [vmem:[%s5 + $0x2f0] sm:$0xff]
    %v2405 = vld [vmem:[%s5 + $0x2f8] sm:$0xff]
    %v2406 = vld [vmem:[%s5 + $0x300] sm:$0xff]
    %v2407 = vld [vmem:[%s5 + $0x308] sm:$0xff]
    %v2408 = vld [vmem:[%s5 + $0x310] sm:$0xff]
    %v2409 = vld [vmem:[%s5 + $0x318] sm:$0xff]
    %v2410 = vld [vmem:[%s5 + $0x320] sm:$0xff]
    %v2411 = vld [vmem:[%s5 + $0x328] sm:$0xff]
    %v2412 = vld [vmem:[%s5 + $0x330] sm:$0xff]
    %v2413 = vld [vmem:[%s5 + $0x338] sm:$0xff]
    %v2414 = vld [vmem:[%s5 + $0x340] sm:$0xff]
    %v2415 = vld [vmem:[%s5 + $0x348] sm:$0xff]
    %v2416 = vld [vmem:[%s5 + $0x350] sm:$0xff]
    %v2417 = vld [vmem:[%s5 + $0x358] sm:$0xff]
    %v2418 = vld [vmem:[%s5 + $0x360] sm:$0xff]
    %v2419 = vld [vmem:[%s5 + $0x368] sm:$0xff]
    %v2420 = vld [vmem:[%s5 + $0x370] sm:$0xff]
    %v2421 = vld [vmem:[%s5 + $0x378] sm:$0xff]
    %v2422 = vld [vmem:[%s5 + $0x380] sm:$0xff]
    %v2423 = vld [vmem:[%s5 + $0x388] sm:$0xff]
    %v2424 = vld [vmem:[%s5 + $0x390] sm:$0xff]
    %v2425 = vld [vmem:[%s5 + $0x398] sm:$0xff]
    %v2426 = vld [vmem:[%s5 + $0x3a0] sm:$0xff]
    %v2427 = vld [vmem:[%s5 + $0x3a8] sm:$0xff]
    %v2428 = vld [vmem:[%s5 + $0x3b0] sm:$0xff]
    %v2429 = vld [vmem:[%s5 + $0x3b8] sm:$0xff]
    %v2430 = vld [vmem:[%s5 + $0x3c0] sm:$0xff]
    %v2431 = vld [vmem:[%s5 + $0x3c8] sm:$0xff]
    %v2432 = vld [vmem:[%s5 + $0x3d0] sm:$0xff]
    %v2433 = vld [vmem:[%s5 + $0x3d8] sm:$0xff]
    %v2434 = vld [vmem:[%s5 + $0x3e0] sm:$0xff]
    %v2435 = vld [vmem:[%s5 + $0x3e8] sm:$0xff]
    %v2436 = vld [vmem:[%s5 + $0x3f0] sm:$0xff]
    %v2437 = vld [vmem:[%s5 + $0x3f8] sm:$0xff]
    %v2438 = vld [vmem:[%s5 + $0x400] sm:$0xff]
    %v2439 = vld [vmem:[%s5 + $0x408] sm:$0xff]
    %v2440 = vld [vmem:[%s5 + $0x410] sm:$0xff]
    %v2441 = vld [vmem:[%s5 + $0x418] sm:$0xff]
    %v2442 = vld [vmem:[%s5 + $0x420] sm:$0xff]
    %v2443 = vld [vmem:[%s5 + $0x428] sm:$0xff]
    %v2444 = vld [vmem:[%s5 + $0x430] sm:$0xff]
    %v2445 = vld [vmem:[%s5 + $0x438] sm:$0xff]
    %v2446 = vld [vmem:[%s5 + $0x440] sm:$0xff]
    %v2447 = vld [vmem:[%s5 + $0x448] sm:$0xff]
    %v2448 = vld [vmem:[%s5 + $0x450] sm:$0xff]
    %v2449 = vld [vmem:[%s5 + $0x458] sm:$0xff]
    %v2450 = vld [vmem:[%s5 + $0x460] sm:$0xff]
    %v2451 = vld [vmem:[%s5 + $0x468] sm:$0xff]
    %v2452 = vld [vmem:[%s5 + $0x470] sm:$0xff]
    %v2453 = vld [vmem:[%s5 + $0x478] sm:$0xff]
    %v2454 = vld [vmem:[%s6] sm:$0x3]
    %v2456 = vperm.slane %v2454, 0
    %v2457 = vperm.slane %v2454, 1
    %v2604 = vunpack.c.l.b16 %v2310
    %v2605 = vunpack.c.h.b16 %v2310
    %v2606 = vunpack.c.l.b16 %v2311
    %v2607 = vunpack.c.h.b16 %v2311
    %v2608 = vunpack.c.l.b16 %v2312
    %v2609 = vunpack.c.h.b16 %v2312
    %v2610 = vunpack.c.l.b16 %v2313
    %v2611 = vunpack.c.h.b16 %v2313
    %v2612 = vunpack.c.l.b16 %v2314
    %v2613 = vunpack.c.h.b16 %v2314
    %v2614 = vunpack.c.l.b16 %v2315
    %v2615 = vunpack.c.h.b16 %v2315
    %v2616 = vunpack.c.l.b16 %v2316
    %v2617 = vunpack.c.h.b16 %v2316
    %v2618 = vunpack.c.l.b16 %v2317
    %v2619 = vunpack.c.h.b16 %v2317
    %v2620 = vunpack.c.l.b16 %v2318
    %v2621 = vunpack.c.h.b16 %v2318
    %v2622 = vunpack.c.l.b16 %v2319
    %v2623 = vunpack.c.h.b16 %v2319
    %v2624 = vunpack.c.l.b16 %v2320
    %v2625 = vunpack.c.h.b16 %v2320
    %v2626 = vunpack.c.l.b16 %v2321
    %v2627 = vunpack.c.h.b16 %v2321
    %v2628 = vunpack.c.l.b16 %v2322
    %v2629 = vunpack.c.h.b16 %v2322
    %v2630 = vunpack.c.l.b16 %v2323
    %v2631 = vunpack.c.h.b16 %v2323
    %v2632 = vunpack.c.l.b16 %v2324
    %v2633 = vunpack.c.h.b16 %v2324
    %v2634 = vunpack.c.l.b16 %v2325
    %v2635 = vunpack.c.h.b16 %v2325
    %v2636 = vunpack.c.l.b16 %v2326
    %v2637 = vunpack.c.h.b16 %v2326
    %v2638 = vunpack.c.l.b16 %v2327
    %v2639 = vunpack.c.h.b16 %v2327
    %v2640 = vunpack.c.l.b16 %v2328
    %v2641 = vunpack.c.h.b16 %v2328
    %v2642 = vunpack.c.l.b16 %v2329
    %v2643 = vunpack.c.h.b16 %v2329
    %v2644 = vunpack.c.l.b16 %v2330
    %v2645 = vunpack.c.h.b16 %v2330
    %v2646 = vunpack.c.l.b16 %v2331
    %v2647 = vunpack.c.h.b16 %v2331
    %v2648 = vunpack.c.l.b16 %v2332
    %v2649 = vunpack.c.h.b16 %v2332
    %v2650 = vunpack.c.l.b16 %v2333
    %v2651 = vunpack.c.h.b16 %v2333
    %v2652 = vunpack.c.l.b16 %v2334
    %v2653 = vunpack.c.h.b16 %v2334
    %v2654 = vunpack.c.l.b16 %v2335
    %v2655 = vunpack.c.h.b16 %v2335
    %v2656 = vunpack.c.l.b16 %v2336
    %v2657 = vunpack.c.h.b16 %v2336
    %v2658 = vunpack.c.l.b16 %v2337
    %v2659 = vunpack.c.h.b16 %v2337
    %v2660 = vunpack.c.l.b16 %v2338
    %v2661 = vunpack.c.h.b16 %v2338
    %v2662 = vunpack.c.l.b16 %v2339
    %v2663 = vunpack.c.h.b16 %v2339
    %v2664 = vunpack.c.l.b16 %v2340
    %v2665 = vunpack.c.h.b16 %v2340
    %v2666 = vunpack.c.l.b16 %v2341
    %v2667 = vunpack.c.h.b16 %v2341
    %v2668 = vunpack.c.l.b16 %v2342
    %v2669 = vunpack.c.h.b16 %v2342
    %v2670 = vunpack.c.l.b16 %v2343
    %v2671 = vunpack.c.h.b16 %v2343
    %v2672 = vunpack.c.l.b16 %v2344
    %v2673 = vunpack.c.h.b16 %v2344
    %v2674 = vunpack.c.l.b16 %v2345
    %v2675 = vunpack.c.h.b16 %v2345
    %v2676 = vunpack.c.l.b16 %v2346
    %v2677 = vunpack.c.h.b16 %v2346
    %v2678 = vunpack.c.l.b16 %v2347
    %v2679 = vunpack.c.h.b16 %v2347
    %v2680 = vunpack.c.l.b16 %v2348
    %v2681 = vunpack.c.h.b16 %v2348
    %v2682 = vunpack.c.l.b16 %v2349
    %v2683 = vunpack.c.h.b16 %v2349
    %v2684 = vunpack.c.l.b16 %v2350
    %v2685 = vunpack.c.h.b16 %v2350
    %v2686 = vunpack.c.l.b16 %v2351
    %v2687 = vunpack.c.h.b16 %v2351
    %v2688 = vunpack.c.l.b16 %v2352
    %v2689 = vunpack.c.h.b16 %v2352
    %v2690 = vunpack.c.l.b16 %v2353
    %v2691 = vunpack.c.h.b16 %v2353
    %v2692 = vunpack.c.l.b16 %v2354
    %v2693 = vunpack.c.h.b16 %v2354
    %v2694 = vunpack.c.l.b16 %v2355
    %v2695 = vunpack.c.h.b16 %v2355
    %v2696 = vunpack.c.l.b16 %v2356
    %v2697 = vunpack.c.h.b16 %v2356
    %v2698 = vunpack.c.l.b16 %v2357
    %v2699 = vunpack.c.h.b16 %v2357
    %v2700 = vunpack.c.l.b16 %v2358
    %v2701 = vunpack.c.h.b16 %v2358
    %v2702 = vunpack.c.l.b16 %v2359
    %v2703 = vunpack.c.h.b16 %v2359
    %v2704 = vunpack.c.l.b16 %v2360
    %v2705 = vunpack.c.h.b16 %v2360
    %v2706 = vunpack.c.l.b16 %v2361
    %v2707 = vunpack.c.h.b16 %v2361
    %v2708 = vunpack.c.l.b16 %v2362
    %v2709 = vunpack.c.h.b16 %v2362
    %v2710 = vunpack.c.l.b16 %v2363
    %v2711 = vunpack.c.h.b16 %v2363
    %v2712 = vunpack.c.l.b16 %v2364
    %v2713 = vunpack.c.h.b16 %v2364
    %v2714 = vunpack.c.l.b16 %v2365
    %v2715 = vunpack.c.h.b16 %v2365
    %v2716 = vunpack.c.l.b16 %v2366
    %v2717 = vunpack.c.h.b16 %v2366
    %v2718 = vunpack.c.l.b16 %v2367
    %v2719 = vunpack.c.h.b16 %v2367
    %v2720 = vunpack.c.l.b16 %v2368
    %v2721 = vunpack.c.h.b16 %v2368
    %v2722 = vunpack.c.l.b16 %v2369
    %v2723 = vunpack.c.h.b16 %v2369
    %v2724 = vunpack.c.l.b16 %v2370
    %v2725 = vunpack.c.h.b16 %v2370
    %v2726 = vunpack.c.l.b16 %v2371
    %v2727 = vunpack.c.h.b16 %v2371
    %v2728 = vunpack.c.l.b16 %v2372
    %v2729 = vunpack.c.h.b16 %v2372
    %v2730 = vunpack.c.l.b16 %v2373
    %v2731 = vunpack.c.h.b16 %v2373
    %v2732 = vunpack.c.l.b16 %v2374
    %v2733 = vunpack.c.h.b16 %v2374
    %v2734 = vunpack.c.l.b16 %v2375
    %v2735 = vunpack.c.h.b16 %v2375
    %v2736 = vunpack.c.l.b16 %v2376
    %v2737 = vunpack.c.h.b16 %v2376
    %v2738 = vunpack.c.l.b16 %v2377
    %v2739 = vunpack.c.h.b16 %v2377
    %v2740 = vunpack.c.l.b16 %v2378
    %v2741 = vunpack.c.h.b16 %v2378
    %v2742 = vunpack.c.l.b16 %v2379
    %v2743 = vunpack.c.h.b16 %v2379
    %v2744 = vunpack.c.l.b16 %v2380
    %v2745 = vunpack.c.h.b16 %v2380
    %v2746 = vunpack.c.l.b16 %v2381
    %v2747 = vunpack.c.h.b16 %v2381
    %v2748 = vunpack.c.l.b16 %v2382
    %v2749 = vunpack.c.h.b16 %v2382
    %v2750 = vunpack.c.l.b16 %v2383
    %v2751 = vunpack.c.h.b16 %v2383
    %v2752 = vunpack.c.l.b16 %v2384
    %v2753 = vunpack.c.h.b16 %v2384
    %v2754 = vunpack.c.l.b16 %v2385
    %v2755 = vunpack.c.h.b16 %v2385
    %v2756 = vunpack.c.l.b16 %v2386
    %v2757 = vunpack.c.h.b16 %v2386
    %v2758 = vunpack.c.l.b16 %v2387
    %v2759 = vunpack.c.h.b16 %v2387
    %v2760 = vunpack.c.l.b16 %v2388
    %v2761 = vunpack.c.h.b16 %v2388
    %v2762 = vunpack.c.l.b16 %v2389
    %v2763 = vunpack.c.h.b16 %v2389
    %v2764 = vunpack.c.l.b16 %v2390
    %v2765 = vunpack.c.h.b16 %v2390
    %v2766 = vunpack.c.l.b16 %v2391
    %v2767 = vunpack.c.h.b16 %v2391
    %v2768 = vunpack.c.l.b16 %v2392
    %v2769 = vunpack.c.h.b16 %v2392
    %v2770 = vunpack.c.l.b16 %v2393
    %v2771 = vunpack.c.h.b16 %v2393
    %v2772 = vunpack.c.l.b16 %v2394
    %v2773 = vunpack.c.h.b16 %v2394
    %v2774 = vunpack.c.l.b16 %v2395
    %v2775 = vunpack.c.h.b16 %v2395
    %v2776 = vunpack.c.l.b16 %v2396
    %v2777 = vunpack.c.h.b16 %v2396
    %v2778 = vunpack.c.l.b16 %v2397
    %v2779 = vunpack.c.h.b16 %v2397
    %v2780 = vunpack.c.l.b16 %v2398
    %v2781 = vunpack.c.h.b16 %v2398
    %v2782 = vunpack.c.l.b16 %v2399
    %v2783 = vunpack.c.h.b16 %v2399
    %v2784 = vunpack.c.l.b16 %v2400
    %v2785 = vunpack.c.h.b16 %v2400
    %v2786 = vunpack.c.l.b16 %v2401
    %v2787 = vunpack.c.h.b16 %v2401
    %v2788 = vunpack.c.l.b16 %v2402
    %v2789 = vunpack.c.h.b16 %v2402
    %v2790 = vunpack.c.l.b16 %v2403
    %v2791 = vunpack.c.h.b16 %v2403
    %v2792 = vunpack.c.l.b16 %v2404
    %v2793 = vunpack.c.h.b16 %v2404
    %v2794 = vunpack.c.l.b16 %v2405
    %v2795 = vunpack.c.h.b16 %v2405
    %v2796 = vunpack.c.l.b16 %v2406
    %v2797 = vunpack.c.h.b16 %v2406
    %v2798 = vunpack.c.l.b16 %v2407
    %v2799 = vunpack.c.h.b16 %v2407
    %v2800 = vunpack.c.l.b16 %v2408
    %v2801 = vunpack.c.h.b16 %v2408
    %v2802 = vunpack.c.l.b16 %v2409
    %v2803 = vunpack.c.h.b16 %v2409
    %v2804 = vunpack.c.l.b16 %v2410
    %v2805 = vunpack.c.h.b16 %v2410
    %v2806 = vunpack.c.l.b16 %v2411
    %v2807 = vunpack.c.h.b16 %v2411
    %v2808 = vunpack.c.l.b16 %v2412
    %v2809 = vunpack.c.h.b16 %v2412
    %v2810 = vunpack.c.l.b16 %v2413
    %v2811 = vunpack.c.h.b16 %v2413
    %v2812 = vunpack.c.l.b16 %v2414
    %v2813 = vunpack.c.h.b16 %v2414
    %v2814 = vunpack.c.l.b16 %v2415
    %v2815 = vunpack.c.h.b16 %v2415
    %v2816 = vunpack.c.l.b16 %v2416
    %v2817 = vunpack.c.h.b16 %v2416
    %v2818 = vunpack.c.l.b16 %v2417
    %v2819 = vunpack.c.h.b16 %v2417
    %v2820 = vunpack.c.l.b16 %v2418
    %v2821 = vunpack.c.h.b16 %v2418
    %v2822 = vunpack.c.l.b16 %v2419
    %v2823 = vunpack.c.h.b16 %v2419
    %v2824 = vunpack.c.l.b16 %v2420
    %v2825 = vunpack.c.h.b16 %v2420
    %v2826 = vunpack.c.l.b16 %v2421
    %v2827 = vunpack.c.h.b16 %v2421
    %v2828 = vunpack.c.l.b16 %v2422
    %v2829 = vunpack.c.h.b16 %v2422
    %v2830 = vunpack.c.l.b16 %v2423
    %v2831 = vunpack.c.h.b16 %v2423
    %v2832 = vunpack.c.l.b16 %v2424
    %v2833 = vunpack.c.h.b16 %v2424
    %v2834 = vunpack.c.l.b16 %v2425
    %v2835 = vunpack.c.h.b16 %v2425
    %v2836 = vunpack.c.l.b16 %v2426
    %v2837 = vunpack.c.h.b16 %v2426
    %v2838 = vunpack.c.l.b16 %v2427
    %v2839 = vunpack.c.h.b16 %v2427
    %v2840 = vunpack.c.l.b16 %v2428
    %v2841 = vunpack.c.h.b16 %v2428
    %v2842 = vunpack.c.l.b16 %v2429
    %v2843 = vunpack.c.h.b16 %v2429
    %v2844 = vunpack.c.l.b16 %v2430
    %v2845 = vunpack.c.h.b16 %v2430
    %v2846 = vunpack.c.l.b16 %v2431
    %v2847 = vunpack.c.h.b16 %v2431
    %v2848 = vunpack.c.l.b16 %v2432
    %v2849 = vunpack.c.h.b16 %v2432
    %v2850 = vunpack.c.l.b16 %v2433
    %v2851 = vunpack.c.h.b16 %v2433
    %v2852 = vunpack.c.l.b16 %v2434
    %v2853 = vunpack.c.h.b16 %v2434
    %v2854 = vunpack.c.l.b16 %v2435
    %v2855 = vunpack.c.h.b16 %v2435
    %v2856 = vunpack.c.l.b16 %v2436
    %v2857 = vunpack.c.h.b16 %v2436
    %v2858 = vunpack.c.l.b16 %v2437
    %v2859 = vunpack.c.h.b16 %v2437
    %v2860 = vunpack.c.l.b16 %v2438
    %v2861 = vunpack.c.h.b16 %v2438
    %v2862 = vunpack.c.l.b16 %v2439
    %v2863 = vunpack.c.h.b16 %v2439
    %v2864 = vunpack.c.l.b16 %v2440
    %v2865 = vunpack.c.h.b16 %v2440
    %v2866 = vunpack.c.l.b16 %v2441
    %v2867 = vunpack.c.h.b16 %v2441
    %v2868 = vunpack.c.l.b16 %v2442
    %v2869 = vunpack.c.h.b16 %v2442
    %v2870 = vunpack.c.l.b16 %v2443
    %v2871 = vunpack.c.h.b16 %v2443
    %v2872 = vunpack.c.l.b16 %v2444
    %v2873 = vunpack.c.h.b16 %v2444
    %v2874 = vunpack.c.l.b16 %v2445
    %v2875 = vunpack.c.h.b16 %v2445
    %v2876 = vunpack.c.l.b16 %v2446
    %v2877 = vunpack.c.h.b16 %v2446
    %v2878 = vunpack.c.l.b16 %v2447
    %v2879 = vunpack.c.h.b16 %v2447
    %v2880 = vunpack.c.l.b16 %v2448
    %v2881 = vunpack.c.h.b16 %v2448
    %v2882 = vunpack.c.l.b16 %v2449
    %v2883 = vunpack.c.h.b16 %v2449
    %v2884 = vunpack.c.l.b16 %v2450
    %v2885 = vunpack.c.h.b16 %v2450
    %v2886 = vunpack.c.l.b16 %v2451
    %v2887 = vunpack.c.h.b16 %v2451
    %v2888 = vunpack.c.l.b16 %v2452
    %v2889 = vunpack.c.h.b16 %v2452
    %v2890 = vunpack.c.l.b16 %v2453
    %v2891 = vunpack.c.h.b16 %v2453
    %v2892 = vpack.c.b16 %v2606, %v2604
    %v2893 = vpack.c.b16 %v2607, %v2605
    %v2894 = vpack.c.b16 %v2610, %v2608
    %v2895 = vpack.c.b16 %v2611, %v2609
    %v2896 = vpack.c.b16 %v2614, %v2612
    %v2897 = vpack.c.b16 %v2615, %v2613
    %v2898 = vpack.c.b16 %v2618, %v2616
    %v2899 = vpack.c.b16 %v2619, %v2617
    %v2900 = vpack.c.b16 %v2622, %v2620
    %v2901 = vpack.c.b16 %v2623, %v2621
    %v2902 = vpack.c.b16 %v2626, %v2624
    %v2903 = vpack.c.b16 %v2627, %v2625
    %v2904 = vpack.c.b16 %v2630, %v2628
    %v2905 = vpack.c.b16 %v2631, %v2629
    %v2906 = vpack.c.b16 %v2634, %v2632
    %v2907 = vpack.c.b16 %v2635, %v2633
    %v2908 = vpack.c.b16 %v2638, %v2636
    %v2909 = vpack.c.b16 %v2639, %v2637
    %v2910 = vpack.c.b16 %v2642, %v2640
    %v2911 = vpack.c.b16 %v2643, %v2641
    %v2912 = vpack.c.b16 %v2646, %v2644
    %v2913 = vpack.c.b16 %v2647, %v2645
    %v2914 = vpack.c.b16 %v2650, %v2648
    %v2915 = vpack.c.b16 %v2651, %v2649
    %v2916 = vpack.c.b16 %v2654, %v2652
    %v2917 = vpack.c.b16 %v2655, %v2653
    %v2918 = vpack.c.b16 %v2658, %v2656
    %v2919 = vpack.c.b16 %v2659, %v2657
    %v2920 = vpack.c.b16 %v2662, %v2660
    %v2921 = vpack.c.b16 %v2663, %v2661
    %v2922 = vpack.c.b16 %v2666, %v2664
    %v2923 = vpack.c.b16 %v2667, %v2665
    %v2924 = vpack.c.b16 %v2670, %v2668
    %v2925 = vpack.c.b16 %v2671, %v2669
    %v2926 = vpack.c.b16 %v2674, %v2672
    %v2927 = vpack.c.b16 %v2675, %v2673
    %v2928 = vpack.c.b16 %v2678, %v2676
    %v2929 = vpack.c.b16 %v2679, %v2677
    %v2930 = vpack.c.b16 %v2682, %v2680
    %v2931 = vpack.c.b16 %v2683, %v2681
    %v2932 = vpack.c.b16 %v2686, %v2684
    %v2933 = vpack.c.b16 %v2687, %v2685
    %v2934 = vpack.c.b16 %v2690, %v2688
    %v2935 = vpack.c.b16 %v2691, %v2689
    %v2936 = vpack.c.b16 %v2694, %v2692
    %v2937 = vpack.c.b16 %v2695, %v2693
    %v2938 = vpack.c.b16 %v2698, %v2696
    %v2939 = vpack.c.b16 %v2699, %v2697
    %v2940 = vpack.c.b16 %v2702, %v2700
    %v2941 = vpack.c.b16 %v2703, %v2701
    %v2942 = vpack.c.b16 %v2706, %v2704
    %v2943 = vpack.c.b16 %v2707, %v2705
    %v2944 = vpack.c.b16 %v2710, %v2708
    %v2945 = vpack.c.b16 %v2711, %v2709
    %v2946 = vpack.c.b16 %v2714, %v2712
    %v2947 = vpack.c.b16 %v2715, %v2713
    %v2948 = vpack.c.b16 %v2718, %v2716
    %v2949 = vpack.c.b16 %v2719, %v2717
    %v2950 = vpack.c.b16 %v2722, %v2720
    %v2951 = vpack.c.b16 %v2723, %v2721
    %v2952 = vpack.c.b16 %v2726, %v2724
    %v2953 = vpack.c.b16 %v2727, %v2725
    %v2954 = vpack.c.b16 %v2730, %v2728
    %v2955 = vpack.c.b16 %v2731, %v2729
    %v2956 = vpack.c.b16 %v2734, %v2732
    %v2957 = vpack.c.b16 %v2735, %v2733
    %v2958 = vpack.c.b16 %v2738, %v2736
    %v2959 = vpack.c.b16 %v2739, %v2737
    %v2960 = vpack.c.b16 %v2742, %v2740
    %v2961 = vpack.c.b16 %v2743, %v2741
    %v2962 = vpack.c.b16 %v2746, %v2744
    %v2963 = vpack.c.b16 %v2747, %v2745
    %v2964 = vpack.c.b16 %v2750, %v2748
    %v2965 = vpack.c.b16 %v2751, %v2749
    %v2966 = vpack.c.b16 %v2754, %v2752
    %v2967 = vpack.c.b16 %v2755, %v2753
    %v2968 = vpack.c.b16 %v2758, %v2756
    %v2969 = vpack.c.b16 %v2759, %v2757
    %v2970 = vpack.c.b16 %v2762, %v2760
    %v2971 = vpack.c.b16 %v2763, %v2761
    %v2972 = vpack.c.b16 %v2766, %v2764
    %v2973 = vpack.c.b16 %v2767, %v2765
    %v2974 = vpack.c.b16 %v2770, %v2768
    %v2975 = vpack.c.b16 %v2771, %v2769
    %v2976 = vpack.c.b16 %v2774, %v2772
    %v2977 = vpack.c.b16 %v2775, %v2773
    %v2978 = vpack.c.b16 %v2778, %v2776
    %v2979 = vpack.c.b16 %v2779, %v2777
    %v2980 = vpack.c.b16 %v2782, %v2780
    %v2981 = vpack.c.b16 %v2783, %v2781
    %v2982 = vpack.c.b16 %v2786, %v2784
    %v2983 = vpack.c.b16 %v2787, %v2785
    %v2984 = vpack.c.b16 %v2790, %v2788
    %v2985 = vpack.c.b16 %v2791, %v2789
    %v2986 = vpack.c.b16 %v2794, %v2792
    %v2987 = vpack.c.b16 %v2795, %v2793
    %v2988 = vpack.c.b16 %v2798, %v2796
    %v2989 = vpack.c.b16 %v2799, %v2797
    %v2990 = vpack.c.b16 %v2802, %v2800
    %v2991 = vpack.c.b16 %v2803, %v2801
    %v2992 = vpack.c.b16 %v2806, %v2804
    %v2993 = vpack.c.b16 %v2807, %v2805
    %v2994 = vpack.c.b16 %v2810, %v2808
    %v2995 = vpack.c.b16 %v2811, %v2809
    %v2996 = vpack.c.b16 %v2814, %v2812
    %v2997 = vpack.c.b16 %v2815, %v2813
    %v2998 = vpack.c.b16 %v2818, %v2816
    %v2999 = vpack.c.b16 %v2819, %v2817
    %v3000 = vpack.c.b16 %v2822, %v2820
    %v3001 = vpack.c.b16 %v2823, %v2821
    %v3002 = vpack.c.b16 %v2826, %v2824
    %v3003 = vpack.c.b16 %v2827, %v2825
    %v3004 = vpack.c.b16 %v2830, %v2828
    %v3005 = vpack.c.b16 %v2831, %v2829
    %v3006 = vpack.c.b16 %v2834, %v2832
    %v3007 = vpack.c.b16 %v2835, %v2833
    %v3008 = vpack.c.b16 %v2838, %v2836
    %v3009 = vpack.c.b16 %v2839, %v2837
    %v3010 = vpack.c.b16 %v2842, %v2840
    %v3011 = vpack.c.b16 %v2843, %v2841
    %v3012 = vpack.c.b16 %v2846, %v2844
    %v3013 = vpack.c.b16 %v2847, %v2845
    %v3014 = vpack.c.b16 %v2850, %v2848
    %v3015 = vpack.c.b16 %v2851, %v2849
    %v3016 = vpack.c.b16 %v2854, %v2852
    %v3017 = vpack.c.b16 %v2855, %v2853
    %v3018 = vpack.c.b16 %v2858, %v2856
    %v3019 = vpack.c.b16 %v2859, %v2857
    %v3020 = vpack.c.b16 %v2862, %v2860
    %v3021 = vpack.c.b16 %v2863, %v2861
    %v3022 = vpack.c.b16 %v2866, %v2864
    %v3023 = vpack.c.b16 %v2867, %v2865
    %v3024 = vpack.c.b16 %v2870, %v2868
    %v3025 = vpack.c.b16 %v2871, %v2869
    %v3026 = vpack.c.b16 %v2874, %v2872
    %v3027 = vpack.c.b16 %v2875, %v2873
    %v3028 = vpack.c.b16 %v2878, %v2876
    %v3029 = vpack.c.b16 %v2879, %v2877
    %v3030 = vpack.c.b16 %v2882, %v2880
    %v3031 = vpack.c.b16 %v2883, %v2881
    %v3032 = vpack.c.b16 %v2886, %v2884
    %v3033 = vpack.c.b16 %v2887, %v2885
    %v3034 = vpack.c.b16 %v2890, %v2888
    %v3035 = vpack.c.b16 %v2891, %v2889
    %3180 = vmatpush.bf16.msra.mxu0 %v2906
    %3181 = vmatpush.bf16.msra.mxu0 %v2904
    %3182 = vmatpush.bf16.msra.mxu0 %v2902
    %3183 = vmatpush.bf16.msra.mxu0 %v2900
    %3184 = vmatpush.bf16.msra.mxu0 %v2898
    %3185 = vmatpush.bf16.msra.mxu0 %v2896
    %3186 = vmatpush.bf16.msra.mxu0 %v2894
    %3187 = vmatpush.bf16.msra.mxu0 %v2892
    %3188 = vmatmul.bf16.gmra.mxu0 %v2292
    %v3189 = vpop.f32.mrf.mxu0
    %v3190 = vadd.f32 %v2456, %v3189
    %v3191 = vpop.f32.mrf.mxu0
    %v3192 = vadd.f32 %v2456, %v3191
    %3193 = vmatmul.bf16.gmra.mxu0 %v2301
    %v3194 = vpop.f32.mrf.mxu0
    %v3195 = vadd.f32 %v2456, %v3194
    %v3196 = vpop.f32.mrf.mxu0
    %v3197 = vadd.f32 %v2456, %v3196
    %3198 = vdwg.mxu0
    %3199 = vmatpush.bf16.msra.mxu0 %v2922
    %3200 = vmatpush.bf16.msra.mxu0 %v2920
    %3201 = vmatpush.bf16.msra.mxu0 %v2918
    %3202 = vmatpush.bf16.msra.mxu0 %v2916
    %3203 = vmatpush.bf16.msra.mxu0 %v2914
    %3204 = vmatpush.bf16.msra.mxu0 %v2912
    %3205 = vmatpush.bf16.msra.mxu0 %v2910
    %3206 = vmatpush.bf16.msra.mxu0 %v2908
    %3207 = vmatmul.bf16.gmra.mxu0 %v2293
    %v3208 = vpop.f32.mrf.mxu0
    %v3209 = vadd.f32 %v3190, %v3208
    %v3210 = vpop.f32.mrf.mxu0
    %v3211 = vadd.f32 %v3192, %v3210
    %3212 = vmatmul.bf16.gmra.mxu0 %v2302
    %v3213 = vpop.f32.mrf.mxu0
    %v3214 = vadd.f32 %v3195, %v3213
    %v3215 = vpop.f32.mrf.mxu0
    %v3216 = vadd.f32 %v3197, %v3215
    %3217 = vdwg.mxu0
    %3218 = vmatpush.bf16.msra.mxu0 %v2938
    %3219 = vmatpush.bf16.msra.mxu0 %v2936
    %3220 = vmatpush.bf16.msra.mxu0 %v2934
    %3221 = vmatpush.bf16.msra.mxu0 %v2932
    %3222 = vmatpush.bf16.msra.mxu0 %v2930
    %3223 = vmatpush.bf16.msra.mxu0 %v2928
    %3224 = vmatpush.bf16.msra.mxu0 %v2926
    %3225 = vmatpush.bf16.msra.mxu0 %v2924
    %3226 = vmatmul.bf16.gmra.mxu0 %v2294
    %v3227 = vpop.f32.mrf.mxu0
    %v3228 = vadd.f32 %v3209, %v3227
    %v3229 = vpop.f32.mrf.mxu0
    %v3230 = vadd.f32 %v3211, %v3229
    %3231 = vmatmul.bf16.gmra.mxu0 %v2303
    %v3232 = vpop.f32.mrf.mxu0
    %v3233 = vadd.f32 %v3214, %v3232
    %v3234 = vpop.f32.mrf.mxu0
    %v3235 = vadd.f32 %v3216, %v3234
    %3236 = vdwg.mxu0
    %3237 = vmatpush.bf16.msra.mxu0 %v2954
    %3238 = vmatpush.bf16.msra.mxu0 %v2952
    %3239 = vmatpush.bf16.msra.mxu0 %v2950
    %3240 = vmatpush.bf16.msra.mxu0 %v2948
    %3241 = vmatpush.bf16.msra.mxu0 %v2946
    %3242 = vmatpush.bf16.msra.mxu0 %v2944
    %3243 = vmatpush.bf16.msra.mxu0 %v2942
    %3244 = vmatpush.bf16.msra.mxu0 %v2940
    %3245 = vmatmul.bf16.gmra.mxu0 %v2295
    %v3246 = vpop.f32.mrf.mxu0
    %v3247 = vadd.f32 %v3228, %v3246
    %v3248 = vpop.f32.mrf.mxu0
    %v3249 = vadd.f32 %v3230, %v3248
    %3250 = vmatmul.bf16.gmra.mxu0 %v2304
    %v3251 = vpop.f32.mrf.mxu0
    %v3252 = vadd.f32 %v3233, %v3251
    %v3253 = vpop.f32.mrf.mxu0
    %v3254 = vadd.f32 %v3235, %v3253
    %3255 = vdwg.mxu0
    %3256 = vmatpush.bf16.msra.mxu0 %v2970
    %3257 = vmatpush.bf16.msra.mxu0 %v2968
    %3258 = vmatpush.bf16.msra.mxu0 %v2966
    %3259 = vmatpush.bf16.msra.mxu0 %v2964
    %3260 = vmatpush.bf16.msra.mxu0 %v2962
    %3261 = vmatpush.bf16.msra.mxu0 %v2960
    %3262 = vmatpush.bf16.msra.mxu0 %v2958
    %3263 = vmatpush.bf16.msra.mxu0 %v2956
    %3264 = vmatmul.bf16.gmra.mxu0 %v2296
    %v3265 = vpop.f32.mrf.mxu0
    %v3266 = vadd.f32 %v3247, %v3265
    %v3267 = vpop.f32.mrf.mxu0
    %v3268 = vadd.f32 %v3249, %v3267
    %3269 = vmatmul.bf16.gmra.mxu0 %v2305
    %v3270 = vpop.f32.mrf.mxu0
    %v3271 = vadd.f32 %v3252, %v3270
    %v3272 = vpop.f32.mrf.mxu0
    %v3273 = vadd.f32 %v3254, %v3272
    %3274 = vdwg.mxu0
    %3275 = vmatpush.bf16.msra.mxu0 %v2986
    %3276 = vmatpush.bf16.msra.mxu0 %v2984
    %3277 = vmatpush.bf16.msra.mxu0 %v2982
    %3278 = vmatpush.bf16.msra.mxu0 %v2980
    %3279 = vmatpush.bf16.msra.mxu0 %v2978
    %3280 = vmatpush.bf16.msra.mxu0 %v2976
    %3281 = vmatpush.bf16.msra.mxu0 %v2974
    %3282 = vmatpush.bf16.msra.mxu0 %v2972
    %3283 = vmatmul.bf16.gmra.mxu0 %v2297
    %v3284 = vpop.f32.mrf.mxu0
    %v3285 = vadd.f32 %v3266, %v3284
    %v3286 = vpop.f32.mrf.mxu0
    %v3287 = vadd.f32 %v3268, %v3286
    %3288 = vmatmul.bf16.gmra.mxu0 %v2306
    %v3289 = vpop.f32.mrf.mxu0
    %v3290 = vadd.f32 %v3271, %v3289
    %v3291 = vpop.f32.mrf.mxu0
    %v3292 = vadd.f32 %v3273, %v3291
    %3293 = vdwg.mxu0
    %3294 = vmatpush.bf16.msra.mxu0 %v3002
    %3295 = vmatpush.bf16.msra.mxu0 %v3000
    %3296 = vmatpush.bf16.msra.mxu0 %v2998
    %3297 = vmatpush.bf16.msra.mxu0 %v2996
    %3298 = vmatpush.bf16.msra.mxu0 %v2994
    %3299 = vmatpush.bf16.msra.mxu0 %v2992
    %3300 = vmatpush.bf16.msra.mxu0 %v2990
    %3301 = vmatpush.bf16.msra.mxu0 %v2988
    %3302 = vmatmul.bf16.gmra.mxu0 %v2298
    %v3303 = vpop.f32.mrf.mxu0
    %v3304 = vadd.f32 %v3285, %v3303
    %v3305 = vpop.f32.mrf.mxu0
    %v3306 = vadd.f32 %v3287, %v3305
    %3307 = vmatmul.bf16.gmra.mxu0 %v2307
    %v3308 = vpop.f32.mrf.mxu0
    %v3309 = vadd.f32 %v3290, %v3308
    %v3310 = vpop.f32.mrf.mxu0
    %v3311 = vadd.f32 %v3292, %v3310
    %3312 = vdwg.mxu0
    %3313 = vmatpush.bf16.msra.mxu0 %v3018
    %3314 = vmatpush.bf16.msra.mxu0 %v3016
    %3315 = vmatpush.bf16.msra.mxu0 %v3014
    %3316 = vmatpush.bf16.msra.mxu0 %v3012
    %3317 = vmatpush.bf16.msra.mxu0 %v3010
    %3318 = vmatpush.bf16.msra.mxu0 %v3008
    %3319 = vmatpush.bf16.msra.mxu0 %v3006
    %3320 = vmatpush.bf16.msra.mxu0 %v3004
    %3321 = vmatmul.bf16.gmra.mxu0 %v2299
    %v3322 = vpop.f32.mrf.mxu0
    %v3323 = vadd.f32 %v3304, %v3322
    %v3324 = vpop.f32.mrf.mxu0
    %v3325 = vadd.f32 %v3306, %v3324
    %3326 = vmatmul.bf16.gmra.mxu0 %v2308
    %v3327 = vpop.f32.mrf.mxu0
    %v3328 = vadd.f32 %v3309, %v3327
    %v3329 = vpop.f32.mrf.mxu0
    %v3330 = vadd.f32 %v3311, %v3329
    %3331 = vdwg.mxu0
    %3332 = vmatpush.bf16.msra.mxu0 %v3034
    %3333 = vmatpush.bf16.msra.mxu0 %v3032
    %3334 = vmatpush.bf16.msra.mxu0 %v3030
    %3335 = vmatpush.bf16.msra.mxu0 %v3028
    %3336 = vmatpush.bf16.msra.mxu0 %v3026
    %3337 = vmatpush.bf16.msra.mxu0 %v3024
    %3338 = vmatpush.bf16.msra.mxu0 %v3022
    %3339 = vmatpush.bf16.msra.mxu0 %v3020
    %3340 = vmatmul.bf16.gmra.mxu0 %v2300
    %v3341 = vpop.f32.mrf.mxu0
    %v3342 = vadd.f32 %v3323, %v3341
    %v3343 = vpop.f32.mrf.mxu0
    %v3344 = vadd.f32 %v3325, %v3343
    %3345 = vmatmul.bf16.gmra.mxu0 %v2309
    %v3346 = vpop.f32.mrf.mxu0
    %v3347 = vadd.f32 %v3328, %v3346
    %v3348 = vpop.f32.mrf.mxu0
    %v3349 = vadd.f32 %v3330, %v3348
    %3350 = vdwg.mxu0
    %3351 = vmatpush.bf16.msra.mxu0 %v2907
    %3352 = vmatpush.bf16.msra.mxu0 %v2905
    %3353 = vmatpush.bf16.msra.mxu0 %v2903
    %3354 = vmatpush.bf16.msra.mxu0 %v2901
    %3355 = vmatpush.bf16.msra.mxu0 %v2899
    %3356 = vmatpush.bf16.msra.mxu0 %v2897
    %3357 = vmatpush.bf16.msra.mxu0 %v2895
    %3358 = vmatpush.bf16.msra.mxu0 %v2893
    %3359 = vmatmul.bf16.gmra.mxu0 %v2292
    %v3360 = vpop.f32.mrf.mxu0
    %v3361 = vadd.f32 %v2457, %v3360
    %v3362 = vpop.f32.mrf.mxu0
    %v3363 = vadd.f32 %v2457, %v3362
    %3364 = vmatmul.bf16.gmra.mxu0 %v2301
    %v3365 = vpop.f32.mrf.mxu0
    %v3366 = vadd.f32 %v2457, %v3365
    %v3367 = vpop.f32.mrf.mxu0
    %v3368 = vadd.f32 %v2457, %v3367
    %3369 = vdwg.mxu0
    %3370 = vmatpush.bf16.msra.mxu0 %v2923
    %3371 = vmatpush.bf16.msra.mxu0 %v2921
    %3372 = vmatpush.bf16.msra.mxu0 %v2919
    %3373 = vmatpush.bf16.msra.mxu0 %v2917
    %3374 = vmatpush.bf16.msra.mxu0 %v2915
    %3375 = vmatpush.bf16.msra.mxu0 %v2913
    %3376 = vmatpush.bf16.msra.mxu0 %v2911
    %3377 = vmatpush.bf16.msra.mxu0 %v2909
    %3378 = vmatmul.bf16.gmra.mxu0 %v2293
    %v3379 = vpop.f32.mrf.mxu0
    %v3380 = vadd.f32 %v3361, %v3379
    %v3381 = vpop.f32.mrf.mxu0
    %v3382 = vadd.f32 %v3363, %v3381
    %3383 = vmatmul.bf16.gmra.mxu0 %v2302
    %v3384 = vpop.f32.mrf.mxu0
    %v3385 = vadd.f32 %v3366, %v3384
    %v3386 = vpop.f32.mrf.mxu0
    %v3387 = vadd.f32 %v3368, %v3386
    %3388 = vdwg.mxu0
    %3389 = vmatpush.bf16.msra.mxu0 %v2939
    %3390 = vmatpush.bf16.msra.mxu0 %v2937
    %3391 = vmatpush.bf16.msra.mxu0 %v2935
    %3392 = vmatpush.bf16.msra.mxu0 %v2933
    %3393 = vmatpush.bf16.msra.mxu0 %v2931
    %3394 = vmatpush.bf16.msra.mxu0 %v2929
    %3395 = vmatpush.bf16.msra.mxu0 %v2927
    %3396 = vmatpush.bf16.msra.mxu0 %v2925
    %3397 = vmatmul.bf16.gmra.mxu0 %v2294
    %v3398 = vpop.f32.mrf.mxu0
    %v3399 = vadd.f32 %v3380, %v3398
    %v3400 = vpop.f32.mrf.mxu0
    %v3401 = vadd.f32 %v3382, %v3400
    %3402 = vmatmul.bf16.gmra.mxu0 %v2303
    %v3403 = vpop.f32.mrf.mxu0
    %v3404 = vadd.f32 %v3385, %v3403
    %v3405 = vpop.f32.mrf.mxu0
    %v3406 = vadd.f32 %v3387, %v3405
    %3407 = vdwg.mxu0
    %3408 = vmatpush.bf16.msra.mxu0 %v2955
    %3409 = vmatpush.bf16.msra.mxu0 %v2953
    %3410 = vmatpush.bf16.msra.mxu0 %v2951
    %3411 = vmatpush.bf16.msra.mxu0 %v2949
    %3412 = vmatpush.bf16.msra.mxu0 %v2947
    %3413 = vmatpush.bf16.msra.mxu0 %v2945
    %3414 = vmatpush.bf16.msra.mxu0 %v2943
    %3415 = vmatpush.bf16.msra.mxu0 %v2941
    %3416 = vmatmul.bf16.gmra.mxu0 %v2295
    %v3417 = vpop.f32.mrf.mxu0
    %v3418 = vadd.f32 %v3399, %v3417
    %v3419 = vpop.f32.mrf.mxu0
    %v3420 = vadd.f32 %v3401, %v3419
    %3421 = vmatmul.bf16.gmra.mxu0 %v2304
    %v3422 = vpop.f32.mrf.mxu0
    %v3423 = vadd.f32 %v3404, %v3422
    %v3424 = vpop.f32.mrf.mxu0
    %v3425 = vadd.f32 %v3406, %v3424
    %3426 = vdwg.mxu0
    %3427 = vmatpush.bf16.msra.mxu0 %v2971
    %3428 = vmatpush.bf16.msra.mxu0 %v2969
    %3429 = vmatpush.bf16.msra.mxu0 %v2967
    %3430 = vmatpush.bf16.msra.mxu0 %v2965
    %3431 = vmatpush.bf16.msra.mxu0 %v2963
    %3432 = vmatpush.bf16.msra.mxu0 %v2961
    %3433 = vmatpush.bf16.msra.mxu0 %v2959
    %3434 = vmatpush.bf16.msra.mxu0 %v2957
    %3435 = vmatmul.bf16.gmra.mxu0 %v2296
    %v3436 = vpop.f32.mrf.mxu0
    %v3437 = vadd.f32 %v3418, %v3436
    %v3438 = vpop.f32.mrf.mxu0
    %v3439 = vadd.f32 %v3420, %v3438
    %3440 = vmatmul.bf16.gmra.mxu0 %v2305
    %v3441 = vpop.f32.mrf.mxu0
    %v3442 = vadd.f32 %v3423, %v3441
    %v3443 = vpop.f32.mrf.mxu0
    %v3444 = vadd.f32 %v3425, %v3443
    %3445 = vdwg.mxu0
    %3446 = vmatpush.bf16.msra.mxu0 %v2987
    %3447 = vmatpush.bf16.msra.mxu0 %v2985
    %3448 = vmatpush.bf16.msra.mxu0 %v2983
    %3449 = vmatpush.bf16.msra.mxu0 %v2981
    %3450 = vmatpush.bf16.msra.mxu0 %v2979
    %3451 = vmatpush.bf16.msra.mxu0 %v2977
    %3452 = vmatpush.bf16.msra.mxu0 %v2975
    %3453 = vmatpush.bf16.msra.mxu0 %v2973
    %3454 = vmatmul.bf16.gmra.mxu0 %v2297
    %v3455 = vpop.f32.mrf.mxu0
    %v3456 = vadd.f32 %v3437, %v3455
    %v3457 = vpop.f32.mrf.mxu0
    %v3458 = vadd.f32 %v3439, %v3457
    %3459 = vmatmul.bf16.gmra.mxu0 %v2306
    %v3460 = vpop.f32.mrf.mxu0
    %v3461 = vadd.f32 %v3442, %v3460
    %v3462 = vpop.f32.mrf.mxu0
    %v3463 = vadd.f32 %v3444, %v3462
    %3464 = vdwg.mxu0
    %3465 = vmatpush.bf16.msra.mxu0 %v3003
    %3466 = vmatpush.bf16.msra.mxu0 %v3001
    %3467 = vmatpush.bf16.msra.mxu0 %v2999
    %3468 = vmatpush.bf16.msra.mxu0 %v2997
    %3469 = vmatpush.bf16.msra.mxu0 %v2995
    %3470 = vmatpush.bf16.msra.mxu0 %v2993
    %3471 = vmatpush.bf16.msra.mxu0 %v2991
    %3472 = vmatpush.bf16.msra.mxu0 %v2989
    %3473 = vmatmul.bf16.gmra.mxu0 %v2298
    %v3474 = vpop.f32.mrf.mxu0
    %v3475 = vadd.f32 %v3456, %v3474
    %v3476 = vpop.f32.mrf.mxu0
    %v3477 = vadd.f32 %v3458, %v3476
    %3478 = vmatmul.bf16.gmra.mxu0 %v2307
    %v3479 = vpop.f32.mrf.mxu0
    %v3480 = vadd.f32 %v3461, %v3479
    %v3481 = vpop.f32.mrf.mxu0
    %v3482 = vadd.f32 %v3463, %v3481
    %3483 = vdwg.mxu0
    %3484 = vmatpush.bf16.msra.mxu0 %v3019
    %3485 = vmatpush.bf16.msra.mxu0 %v3017
    %3486 = vmatpush.bf16.msra.mxu0 %v3015
    %3487 = vmatpush.bf16.msra.mxu0 %v3013
    %3488 = vmatpush.bf16.msra.mxu0 %v3011
    %3489 = vmatpush.bf16.msra.mxu0 %v3009
    %3490 = vmatpush.bf16.msra.mxu0 %v3007
    %3491 = vmatpush.bf16.msra.mxu0 %v3005
    %3492 = vmatmul.bf16.gmra.mxu0 %v2299
    %v3493 = vpop.f32.mrf.mxu0
    %v3494 = vadd.f32 %v3475, %v3493
    %v3495 = vpop.f32.mrf.mxu0
    %v3496 = vadd.f32 %v3477, %v3495
    %3497 = vmatmul.bf16.gmra.mxu0 %v2308
    %v3498 = vpop.f32.mrf.mxu0
    %v3499 = vadd.f32 %v3480, %v3498
    %v3500 = vpop.f32.mrf.mxu0
    %v3501 = vadd.f32 %v3482, %v3500
    %3502 = vdwg.mxu0
    %3503 = vmatpush.bf16.msra.mxu0 %v3035
    %3504 = vmatpush.bf16.msra.mxu0 %v3033
    %3505 = vmatpush.bf16.msra.mxu0 %v3031
    %3506 = vmatpush.bf16.msra.mxu0 %v3029
    %3507 = vmatpush.bf16.msra.mxu0 %v3027
    %3508 = vmatpush.bf16.msra.mxu0 %v3025
    %3509 = vmatpush.bf16.msra.mxu0 %v3023
    %3510 = vmatpush.bf16.msra.mxu0 %v3021
    %3511 = vmatmul.bf16.gmra.mxu0 %v2300
    %v3512 = vpop.f32.mrf.mxu0
    %v3513 = vadd.f32 %v3494, %v3512
    %v3514 = vpop.f32.mrf.mxu0
    %v3515 = vadd.f32 %v3496, %v3514
    %3516 = vmatmul.bf16.gmra.mxu0 %v2309
    %v3517 = vpop.f32.mrf.mxu0
    %v3518 = vadd.f32 %v3499, %v3517
    %v3519 = vpop.f32.mrf.mxu0
    %v3520 = vadd.f32 %v3501, %v3519
    %3521 = vdwg.mxu0
    %v3522 = vmax.f32 %v3342, 0.0
    %v3523 = vmax.f32 %v3513, 0.0
    %v3524 = vmax.f32 %v3344, 0.0
    %v3525 = vmax.f32 %v3515, 0.0
    %v3526 = vmax.f32 %v3347, 0.0
    %v3527 = vmax.f32 %v3518, 0.0
    %v3528 = vmax.f32 %v3349, 0.0
    %v3529 = vmax.f32 %v3520, 0.0
    %v3538 = vrot.slane %v3522, 3
    %v3539 = vsel %vm390, %v391, %v3538
    %v3540 = vrot.slane %v3523, 3
    %v3541 = vsel %vm390, %v391, %v3540
    %v3542 = vrot.slane %v3524, 3
    %v3543 = vsel %vm390, %v3538, %v3542
    %v3544 = vrot.slane %v3525, 3
    %v3545 = vsel %vm390, %v3540, %v3544
    %v3546 = vrot.slane %v3526, 3
    %v3547 = vsel %vm390, %v3542, %v3546
    %v3548 = vrot.slane %v3527, 3
    %v3549 = vsel %vm390, %v3544, %v3548
    %v3550 = vrot.slane %v3528, 3
    %v3551 = vsel %vm390, %v3546, %v3550
    %v3552 = vrot.slane %v3529, 3
    %v3553 = vsel %vm390, %v3548, %v3552
    %v3562 = vsel %vm377, %v3539, 0.0
    %v3563 = vsel %vm377, %v3541, 0.0
    %v3564 = vsel %vm378, %v3543, 0.0
    %v3565 = vsel %vm378, %v3545, 0.0
    %v3566 = vsel %vm379, %v3547, 0.0
    %v3567 = vsel %vm379, %v3549, 0.0
    %v3568 = vsel %vm380, %v3551, 0.0
    %v3569 = vsel %vm380, %v3553, 0.0
    %v3570 = vrot.slane %v3522, 4
    %v3571 = vsel %vm432, %v433, %v3570
    %v3572 = vrot.slane %v3523, 4
    %v3573 = vsel %vm432, %v433, %v3572
    %v3574 = vrot.slane %v3524, 4
    %v3575 = vsel %vm432, %v3570, %v3574
    %v3576 = vrot.slane %v3525, 4
    %v3577 = vsel %vm432, %v3572, %v3576
    %v3578 = vrot.slane %v3526, 4
    %v3579 = vsel %vm432, %v3574, %v3578
    %v3580 = vrot.slane %v3527, 4
    %v3581 = vsel %vm432, %v3576, %v3580
    %v3582 = vrot.slane %v3528, 4
    %v3583 = vsel %vm432, %v3578, %v3582
    %v3584 = vrot.slane %v3529, 4
    %v3585 = vsel %vm432, %v3580, %v3584
    %v3594 = vsel %vm428, %v3571, 0.0
    %v3595 = vsel %vm428, %v3573, 0.0
    %v3596 = vsel %vm429, %v3575, 0.0
    %v3597 = vsel %vm429, %v3577, 0.0
    %v3598 = vsel %vm430, %v3579, 0.0
    %v3599 = vsel %vm430, %v3581, 0.0
    %v3600 = vsel %vm431, %v3583, 0.0
    %v3601 = vsel %vm431, %v3585, 0.0
    %v3602 = vrot.slane %v3522, 5
    %v3603 = vsel %vm474, %v475, %v3602
    %v3604 = vrot.slane %v3523, 5
    %v3605 = vsel %vm474, %v475, %v3604
    %v3606 = vrot.slane %v3524, 5
    %v3607 = vsel %vm474, %v3602, %v3606
    %v3608 = vrot.slane %v3525, 5
    %v3609 = vsel %vm474, %v3604, %v3608
    %v3610 = vrot.slane %v3526, 5
    %v3611 = vsel %vm474, %v3606, %v3610
    %v3612 = vrot.slane %v3527, 5
    %v3613 = vsel %vm474, %v3608, %v3612
    %v3614 = vrot.slane %v3528, 5
    %v3615 = vsel %vm474, %v3610, %v3614
    %v3616 = vrot.slane %v3529, 5
    %v3617 = vsel %vm474, %v3612, %v3616
    %v3626 = vsel %vm470, %v3603, 0.0
    %v3627 = vsel %vm470, %v3605, 0.0
    %v3628 = vsel %vm471, %v3607, 0.0
    %v3629 = vsel %vm471, %v3609, 0.0
    %v3630 = vsel %vm472, %v3611, 0.0
    %v3631 = vsel %vm472, %v3613, 0.0
    %v3632 = vsel %vm473, %v3615, 0.0
    %v3633 = vsel %vm473, %v3617, 0.0
    %v3634 = vrot.slane %v3522, 7
    %v3635 = vsel %vm516, %v517, %v3634
    %v3636 = vrot.slane %v3523, 7
    %v3637 = vsel %vm516, %v517, %v3636
    %v3638 = vrot.slane %v3524, 7
    %v3639 = vsel %vm516, %v3634, %v3638
    %v3640 = vrot.slane %v3525, 7
    %v3641 = vsel %vm516, %v3636, %v3640
    %v3642 = vrot.slane %v3526, 7
    %v3643 = vsel %vm516, %v3638, %v3642
    %v3644 = vrot.slane %v3527, 7
    %v3645 = vsel %vm516, %v3640, %v3644
    %v3646 = vrot.slane %v3528, 7
    %v3647 = vsel %vm516, %v3642, %v3646
    %v3648 = vrot.slane %v3529, 7
    %v3649 = vsel %vm516, %v3644, %v3648
    %v3658 = vsel %vm512, %v3635, 0.0
    %v3659 = vsel %vm512, %v3637, 0.0
    %v3660 = vsel %vm513, %v3639, 0.0
    %v3661 = vsel %vm513, %v3641, 0.0
    %v3662 = vsel %vm514, %v3643, 0.0
    %v3663 = vsel %vm514, %v3645, 0.0
    %v3664 = vsel %vm515, %v3647, 0.0
    %v3665 = vsel %vm515, %v3649, 0.0
    %v3666 = vrot.slane %v3522, 1
    %v3667 = vrot.slane %v3524, 1
    %v3668 = vsel %vm558, %v3666, %v3667
    %v3669 = vrot.slane %v3523, 1
    %v3670 = vrot.slane %v3525, 1
    %v3671 = vsel %vm558, %v3669, %v3670
    %v3672 = vrot.slane %v3526, 1
    %v3673 = vsel %vm558, %v3667, %v3672
    %v3674 = vrot.slane %v3527, 1
    %v3675 = vsel %vm558, %v3670, %v3674
    %v3676 = vrot.slane %v3528, 1
    %v3677 = vsel %vm558, %v3672, %v3676
    %v3678 = vrot.slane %v3529, 1
    %v3679 = vsel %vm558, %v3674, %v3678
    %v3680 = vsel %vm558, %v3676, %v573
    %v3681 = vsel %vm558, %v3678, %v573
    %v3690 = vsel %vm554, %v3668, 0.0
    %v3691 = vsel %vm554, %v3671, 0.0
    %v3692 = vsel %vm555, %v3673, 0.0
    %v3693 = vsel %vm555, %v3675, 0.0
    %v3694 = vsel %vm556, %v3677, 0.0
    %v3695 = vsel %vm556, %v3679, 0.0
    %v3696 = vsel %vm557, %v3680, 0.0
    %v3697 = vsel %vm557, %v3681, 0.0
    %v3698 = vsel %vm390, %v3550, %v391
    %v3699 = vsel %vm390, %v3552, %v391
    %v3702 = vsel %vm596, %v3543, 0.0
    %v3703 = vsel %vm596, %v3545, 0.0
    %v3704 = vsel %vm597, %v3547, 0.0
    %v3705 = vsel %vm597, %v3549, 0.0
    %v3706 = vsel %vm598, %v3551, 0.0
    %v3707 = vsel %vm598, %v3553, 0.0
    %v3708 = vsel %vm599, %v3698, 0.0
    %v3709 = vsel %vm599, %v3699, 0.0
    %v3710 = vsel %vm432, %v3582, %v433
    %v3711 = vsel %vm432, %v3584, %v433
    %v3714 = vsel %vm616, %v3575, 0.0
    %v3715 = vsel %vm616, %v3577, 0.0
    %v3716 = vsel %vm617, %v3579, 0.0
    %v3717 = vsel %vm617, %v3581, 0.0
    %v3718 = vsel %vm618, %v3583, 0.0
    %v3719 = vsel %vm618, %v3585, 0.0
    %v3720 = vsel %vm619, %v3710, 0.0
    %v3721 = vsel %vm619, %v3711, 0.0
    %v3722 = vsel %vm474, %v3614, %v475
    %v3723 = vsel %vm474, %v3616, %v475
    %v3726 = vsel %vm636, %v3607, 0.0
    %v3727 = vsel %vm636, %v3609, 0.0
    %v3728 = vsel %vm637, %v3611, 0.0
    %v3729 = vsel %vm637, %v3613, 0.0
    %v3730 = vsel %vm638, %v3615, 0.0
    %v3731 = vsel %vm638, %v3617, 0.0
    %v3732 = vsel %vm639, %v3722, 0.0
    %v3733 = vsel %vm639, %v3723, 0.0
    %v3734 = vpack.c.bf16 %v3564, %v3562
    %v3735 = vpack.c.bf16 %v3565, %v3563
    %v3736 = vpack.c.bf16 %v3596, %v3594
    %v3737 = vpack.c.bf16 %v3597, %v3595
    %v3738 = vpack.c.bf16 %v3628, %v3626
    %v3739 = vpack.c.bf16 %v3629, %v3627
    %v3740 = vpack.c.bf16 %v3660, %v3658
    %v3741 = vpack.c.bf16 %v3661, %v3659
    %v3742 = vpack.c.bf16 %v3524, %v3522
    %v3743 = vpack.c.bf16 %v3525, %v3523
    %v3744 = vpack.c.bf16 %v3692, %v3690
    %v3745 = vpack.c.bf16 %v3693, %v3691
    %v3746 = vpack.c.bf16 %v3704, %v3702
    %v3747 = vpack.c.bf16 %v3705, %v3703
    %v3748 = vpack.c.bf16 %v3716, %v3714
    %v3749 = vpack.c.bf16 %v3717, %v3715
    %v3750 = vpack.c.bf16 %v3728, %v3726
    %v3751 = vpack.c.bf16 %v3729, %v3727
    %v3752 = vpack.c.bf16 %v3568, %v3566
    %v3753 = vpack.c.bf16 %v3569, %v3567
    %v3754 = vpack.c.bf16 %v3600, %v3598
    %v3755 = vpack.c.bf16 %v3601, %v3599
    %v3756 = vpack.c.bf16 %v3632, %v3630
    %v3757 = vpack.c.bf16 %v3633, %v3631
    %v3758 = vpack.c.bf16 %v3664, %v3662
    %v3759 = vpack.c.bf16 %v3665, %v3663
    %v3760 = vpack.c.bf16 %v3528, %v3526
    %v3761 = vpack.c.bf16 %v3529, %v3527
    %v3762 = vpack.c.bf16 %v3696, %v3694
    %v3763 = vpack.c.bf16 %v3697, %v3695
    %v3764 = vpack.c.bf16 %v3708, %v3706
    %v3765 = vpack.c.bf16 %v3709, %v3707
    %v3766 = vpack.c.bf16 %v3720, %v3718
    %v3767 = vpack.c.bf16 %v3721, %v3719
    %v3768 = vpack.c.bf16 %v3732, %v3730
    %v3769 = vpack.c.bf16 %v3733, %v3731
    %v3770 = vld [vmem:[#allocation4] sm:$0xf]
    %v3771 = vld [vmem:[#allocation4 + $0x4] sm:$0xf]
    %v3772 = vld [vmem:[#allocation4 + $0x8] sm:$0xf]
    %v3773 = vld [vmem:[#allocation4 + $0xc] sm:$0xf]
    %v3774 = vld [vmem:[#allocation4 + $0x10] sm:$0xf]
    %v3775 = vld [vmem:[#allocation4 + $0x14] sm:$0xf]
    %v3776 = vld [vmem:[#allocation4 + $0x18] sm:$0xf]
    %v3777 = vld [vmem:[#allocation4 + $0x1c] sm:$0xf]
    %v3778 = vld [vmem:[#allocation4 + $0x20] sm:$0xf]
    %v3779 = vld [vmem:[#allocation4 + $0x24] sm:$0xf]
    %v3780 = vld [vmem:[#allocation4 + $0x28] sm:$0xf]
    %v3781 = vld [vmem:[#allocation4 + $0x2c] sm:$0xf]
    %v3782 = vld [vmem:[#allocation4 + $0x30] sm:$0xf]
    %v3783 = vld [vmem:[#allocation4 + $0x34] sm:$0xf]
    %v3784 = vld [vmem:[#allocation4 + $0x38] sm:$0xf]
    %v3785 = vld [vmem:[#allocation4 + $0x3c] sm:$0xf]
    %v3786 = vld [vmem:[#allocation4 + $0x40] sm:$0xf]
    %v3787 = vld [vmem:[#allocation4 + $0x44] sm:$0xf]
    %v3788 = vld [vmem:[#allocation4 + $0x48] sm:$0xf]
    %v3789 = vld [vmem:[#allocation4 + $0x4c] sm:$0xf]
    %v3790 = vld [vmem:[#allocation4 + $0x50] sm:$0xf]
    %v3791 = vld [vmem:[#allocation4 + $0x54] sm:$0xf]
    %v3792 = vld [vmem:[#allocation4 + $0x58] sm:$0xf]
    %v3793 = vld [vmem:[#allocation4 + $0x5c] sm:$0xf]
    %v3794 = vld [vmem:[#allocation4 + $0x60] sm:$0xf]
    %v3795 = vld [vmem:[#allocation4 + $0x64] sm:$0xf]
    %v3796 = vld [vmem:[#allocation4 + $0x68] sm:$0xf]
    %v3797 = vld [vmem:[#allocation4 + $0x6c] sm:$0xf]
    %v3798 = vld [vmem:[#allocation4 + $0x70] sm:$0xf]
    %v3799 = vld [vmem:[#allocation4 + $0x74] sm:$0xf]
    %v3800 = vld [vmem:[#allocation4 + $0x78] sm:$0xf]
    %v3801 = vld [vmem:[#allocation4 + $0x7c] sm:$0xf]
    %v3802 = vld [vmem:[#allocation4 + $0x80] sm:$0xf]
    %v3803 = vld [vmem:[#allocation4 + $0x84] sm:$0xf]
    %v3804 = vld [vmem:[#allocation4 + $0x88] sm:$0xf]
    %v3805 = vld [vmem:[#allocation4 + $0x8c] sm:$0xf]
    %v3806 = vld [vmem:[#allocation4 + $0x90] sm:$0xf]
    %v3807 = vld [vmem:[#allocation4 + $0x94] sm:$0xf]
    %v3808 = vld [vmem:[#allocation4 + $0x98] sm:$0xf]
    %v3809 = vld [vmem:[#allocation4 + $0x9c] sm:$0xf]
    %v3810 = vld [vmem:[#allocation4 + $0xa0] sm:$0xf]
    %v3811 = vld [vmem:[#allocation4 + $0xa4] sm:$0xf]
    %v3812 = vld [vmem:[#allocation4 + $0xa8] sm:$0xf]
    %v3813 = vld [vmem:[#allocation4 + $0xac] sm:$0xf]
    %v3814 = vld [vmem:[#allocation4 + $0xb0] sm:$0xf]
    %v3815 = vld [vmem:[#allocation4 + $0xb4] sm:$0xf]
    %v3816 = vld [vmem:[#allocation4 + $0xb8] sm:$0xf]
    %v3817 = vld [vmem:[#allocation4 + $0xbc] sm:$0xf]
    %v3818 = vld [vmem:[#allocation4 + $0xc0] sm:$0xf]
    %v3819 = vld [vmem:[#allocation4 + $0xc4] sm:$0xf]
    %v3820 = vld [vmem:[#allocation4 + $0xc8] sm:$0xf]
    %v3821 = vld [vmem:[#allocation4 + $0xcc] sm:$0xf]
    %v3822 = vld [vmem:[#allocation4 + $0xd0] sm:$0xf]
    %v3823 = vld [vmem:[#allocation4 + $0xd4] sm:$0xf]
    %v3824 = vld [vmem:[#allocation4 + $0xd8] sm:$0xf]
    %v3825 = vld [vmem:[#allocation4 + $0xdc] sm:$0xf]
    %v3826 = vld [vmem:[#allocation4 + $0xe0] sm:$0xf]
    %v3827 = vld [vmem:[#allocation4 + $0xe4] sm:$0xf]
    %v3828 = vld [vmem:[#allocation4 + $0xe8] sm:$0xf]
    %v3829 = vld [vmem:[#allocation4 + $0xec] sm:$0xf]
    %v3830 = vld [vmem:[#allocation4 + $0xf0] sm:$0xf]
    %v3831 = vld [vmem:[#allocation4 + $0xf4] sm:$0xf]
    %v3832 = vld [vmem:[#allocation4 + $0xf8] sm:$0xf]
    %v3833 = vld [vmem:[#allocation4 + $0xfc] sm:$0xf]
    %v3834 = vld [vmem:[#allocation4 + $0x100] sm:$0xf]
    %v3835 = vld [vmem:[#allocation4 + $0x104] sm:$0xf]
    %v3836 = vld [vmem:[#allocation4 + $0x108] sm:$0xf]
    %v3837 = vld [vmem:[#allocation4 + $0x10c] sm:$0xf]
    %v3838 = vld [vmem:[#allocation4 + $0x110] sm:$0xf]
    %v3839 = vld [vmem:[#allocation4 + $0x114] sm:$0xf]
    %v3840 = vld [vmem:[#allocation4 + $0x118] sm:$0xf]
    %v3841 = vld [vmem:[#allocation4 + $0x11c] sm:$0xf]
    %v3842 = vld [vmem:[#allocation4 + $0x120] sm:$0xf]
    %v3843 = vld [vmem:[#allocation4 + $0x124] sm:$0xf]
    %v3844 = vld [vmem:[#allocation4 + $0x128] sm:$0xf]
    %v3845 = vld [vmem:[#allocation4 + $0x12c] sm:$0xf]
    %v3846 = vld [vmem:[#allocation4 + $0x130] sm:$0xf]
    %v3847 = vld [vmem:[#allocation4 + $0x134] sm:$0xf]
    %v3848 = vld [vmem:[#allocation4 + $0x138] sm:$0xf]
    %v3849 = vld [vmem:[#allocation4 + $0x13c] sm:$0xf]
    %v3850 = vld [vmem:[#allocation4 + $0x140] sm:$0xf]
    %v3851 = vld [vmem:[#allocation4 + $0x144] sm:$0xf]
    %v3852 = vld [vmem:[#allocation4 + $0x148] sm:$0xf]
    %v3853 = vld [vmem:[#allocation4 + $0x14c] sm:$0xf]
    %v3854 = vld [vmem:[#allocation4 + $0x150] sm:$0xf]
    %v3855 = vld [vmem:[#allocation4 + $0x154] sm:$0xf]
    %v3856 = vld [vmem:[#allocation4 + $0x158] sm:$0xf]
    %v3857 = vld [vmem:[#allocation4 + $0x15c] sm:$0xf]
    %v3858 = vld [vmem:[#allocation4 + $0x160] sm:$0xf]
    %v3859 = vld [vmem:[#allocation4 + $0x164] sm:$0xf]
    %v3860 = vld [vmem:[#allocation4 + $0x168] sm:$0xf]
    %v3861 = vld [vmem:[#allocation4 + $0x16c] sm:$0xf]
    %v3862 = vld [vmem:[#allocation4 + $0x170] sm:$0xf]
    %v3863 = vld [vmem:[#allocation4 + $0x174] sm:$0xf]
    %v3864 = vld [vmem:[#allocation4 + $0x178] sm:$0xf]
    %v3865 = vld [vmem:[#allocation4 + $0x17c] sm:$0xf]
    %v3866 = vld [vmem:[#allocation4 + $0x180] sm:$0xf]
    %v3867 = vld [vmem:[#allocation4 + $0x184] sm:$0xf]
    %v3868 = vld [vmem:[#allocation4 + $0x188] sm:$0xf]
    %v3869 = vld [vmem:[#allocation4 + $0x18c] sm:$0xf]
    %v3870 = vld [vmem:[#allocation4 + $0x190] sm:$0xf]
    %v3871 = vld [vmem:[#allocation4 + $0x194] sm:$0xf]
    %v3872 = vld [vmem:[#allocation4 + $0x198] sm:$0xf]
    %v3873 = vld [vmem:[#allocation4 + $0x19c] sm:$0xf]
    %v3874 = vld [vmem:[#allocation4 + $0x1a0] sm:$0xf]
    %v3875 = vld [vmem:[#allocation4 + $0x1a4] sm:$0xf]
    %v3876 = vld [vmem:[#allocation4 + $0x1a8] sm:$0xf]
    %v3877 = vld [vmem:[#allocation4 + $0x1ac] sm:$0xf]
    %v3878 = vld [vmem:[#allocation4 + $0x1b0] sm:$0xf]
    %v3879 = vld [vmem:[#allocation4 + $0x1b4] sm:$0xf]
    %v3880 = vld [vmem:[#allocation4 + $0x1b8] sm:$0xf]
    %v3881 = vld [vmem:[#allocation4 + $0x1bc] sm:$0xf]
    %v3882 = vld [vmem:[#allocation4 + $0x1c0] sm:$0xf]
    %v3883 = vld [vmem:[#allocation4 + $0x1c4] sm:$0xf]
    %v3884 = vld [vmem:[#allocation4 + $0x1c8] sm:$0xf]
    %v3885 = vld [vmem:[#allocation4 + $0x1cc] sm:$0xf]
    %v3886 = vld [vmem:[#allocation4 + $0x1d0] sm:$0xf]
    %v3887 = vld [vmem:[#allocation4 + $0x1d4] sm:$0xf]
    %v3888 = vld [vmem:[#allocation4 + $0x1d8] sm:$0xf]
    %v3889 = vld [vmem:[#allocation4 + $0x1dc] sm:$0xf]
    %v3890 = vld [vmem:[#allocation4 + $0x1e0] sm:$0xf]
    %v3891 = vld [vmem:[#allocation4 + $0x1e4] sm:$0xf]
    %v3892 = vld [vmem:[#allocation4 + $0x1e8] sm:$0xf]
    %v3893 = vld [vmem:[#allocation4 + $0x1ec] sm:$0xf]
    %v3894 = vld [vmem:[#allocation4 + $0x1f0] sm:$0xf]
    %v3895 = vld [vmem:[#allocation4 + $0x1f4] sm:$0xf]
    %v3896 = vld [vmem:[#allocation4 + $0x1f8] sm:$0xf]
    %v3897 = vld [vmem:[#allocation4 + $0x1fc] sm:$0xf]
    %v3898 = vld [vmem:[#allocation4 + $0x200] sm:$0xf]
    %v3899 = vld [vmem:[#allocation4 + $0x204] sm:$0xf]
    %v3900 = vld [vmem:[#allocation4 + $0x208] sm:$0xf]
    %v3901 = vld [vmem:[#allocation4 + $0x20c] sm:$0xf]
    %v3902 = vld [vmem:[#allocation4 + $0x210] sm:$0xf]
    %v3903 = vld [vmem:[#allocation4 + $0x214] sm:$0xf]
    %v3904 = vld [vmem:[#allocation4 + $0x218] sm:$0xf]
    %v3905 = vld [vmem:[#allocation4 + $0x21c] sm:$0xf]
    %v3906 = vld [vmem:[#allocation4 + $0x220] sm:$0xf]
    %v3907 = vld [vmem:[#allocation4 + $0x224] sm:$0xf]
    %v3908 = vld [vmem:[#allocation4 + $0x228] sm:$0xf]
    %v3909 = vld [vmem:[#allocation4 + $0x22c] sm:$0xf]
    %v3910 = vld [vmem:[#allocation4 + $0x230] sm:$0xf]
    %v3911 = vld [vmem:[#allocation4 + $0x234] sm:$0xf]
    %v3912 = vld [vmem:[#allocation4 + $0x238] sm:$0xf]
    %v3913 = vld [vmem:[#allocation4 + $0x23c] sm:$0xf]
    %v3914 = vld [vmem:[#allocation4 + $0x240] sm:$0xf]
    %v3915 = vld [vmem:[#allocation4 + $0x244] sm:$0xf]
    %v3916 = vld [vmem:[#allocation4 + $0x248] sm:$0xf]
    %v3917 = vld [vmem:[#allocation4 + $0x24c] sm:$0xf]
    %v3918 = vld [vmem:[#allocation4 + $0x250] sm:$0xf]
    %v3919 = vld [vmem:[#allocation4 + $0x254] sm:$0xf]
    %v3920 = vld [vmem:[#allocation4 + $0x258] sm:$0xf]
    %v3921 = vld [vmem:[#allocation4 + $0x25c] sm:$0xf]
    %v3922 = vld [vmem:[#allocation4 + $0x260] sm:$0xf]
    %v3923 = vld [vmem:[#allocation4 + $0x264] sm:$0xf]
    %v3924 = vld [vmem:[#allocation4 + $0x268] sm:$0xf]
    %v3925 = vld [vmem:[#allocation4 + $0x26c] sm:$0xf]
    %v3926 = vld [vmem:[#allocation4 + $0x270] sm:$0xf]
    %v3927 = vld [vmem:[#allocation4 + $0x274] sm:$0xf]
    %v3928 = vld [vmem:[#allocation4 + $0x278] sm:$0xf]
    %v3929 = vld [vmem:[#allocation4 + $0x27c] sm:$0xf]
    %v3930 = vld [vmem:[#allocation4 + $0x280] sm:$0xf]
    %v3931 = vld [vmem:[#allocation4 + $0x284] sm:$0xf]
    %v3932 = vld [vmem:[#allocation4 + $0x288] sm:$0xf]
    %v3933 = vld [vmem:[#allocation4 + $0x28c] sm:$0xf]
    %v3934 = vld [vmem:[#allocation4 + $0x290] sm:$0xf]
    %v3935 = vld [vmem:[#allocation4 + $0x294] sm:$0xf]
    %v3936 = vld [vmem:[#allocation4 + $0x298] sm:$0xf]
    %v3937 = vld [vmem:[#allocation4 + $0x29c] sm:$0xf]
    %v3938 = vld [vmem:[#allocation4 + $0x2a0] sm:$0xf]
    %v3939 = vld [vmem:[#allocation4 + $0x2a4] sm:$0xf]
    %v3940 = vld [vmem:[#allocation4 + $0x2a8] sm:$0xf]
    %v3941 = vld [vmem:[#allocation4 + $0x2ac] sm:$0xf]
    %v3942 = vld [vmem:[#allocation4 + $0x2b0] sm:$0xf]
    %v3943 = vld [vmem:[#allocation4 + $0x2b4] sm:$0xf]
    %v3944 = vld [vmem:[#allocation4 + $0x2b8] sm:$0xf]
    %v3945 = vld [vmem:[#allocation4 + $0x2bc] sm:$0xf]
    %v3946 = vld [vmem:[#allocation4 + $0x2c0] sm:$0xf]
    %v3947 = vld [vmem:[#allocation4 + $0x2c4] sm:$0xf]
    %v3948 = vld [vmem:[#allocation4 + $0x2c8] sm:$0xf]
    %v3949 = vld [vmem:[#allocation4 + $0x2cc] sm:$0xf]
    %v3950 = vld [vmem:[#allocation4 + $0x2d0] sm:$0xf]
    %v3951 = vld [vmem:[#allocation4 + $0x2d4] sm:$0xf]
    %v3952 = vld [vmem:[#allocation4 + $0x2d8] sm:$0xf]
    %v3953 = vld [vmem:[#allocation4 + $0x2dc] sm:$0xf]
    %v3954 = vld [vmem:[#allocation4 + $0x2e0] sm:$0xf]
    %v3955 = vld [vmem:[#allocation4 + $0x2e4] sm:$0xf]
    %v3956 = vld [vmem:[#allocation4 + $0x2e8] sm:$0xf]
    %v3957 = vld [vmem:[#allocation4 + $0x2ec] sm:$0xf]
    %v3958 = vld [vmem:[#allocation4 + $0x2f0] sm:$0xf]
    %v3959 = vld [vmem:[#allocation4 + $0x2f4] sm:$0xf]
    %v3960 = vld [vmem:[#allocation4 + $0x2f8] sm:$0xf]
    %v3961 = vld [vmem:[#allocation4 + $0x2fc] sm:$0xf]
    %v3962 = vld [vmem:[#allocation4 + $0x300] sm:$0xf]
    %v3963 = vld [vmem:[#allocation4 + $0x304] sm:$0xf]
    %v3964 = vld [vmem:[#allocation4 + $0x308] sm:$0xf]
    %v3965 = vld [vmem:[#allocation4 + $0x30c] sm:$0xf]
    %v3966 = vld [vmem:[#allocation4 + $0x310] sm:$0xf]
    %v3967 = vld [vmem:[#allocation4 + $0x314] sm:$0xf]
    %v3968 = vld [vmem:[#allocation4 + $0x318] sm:$0xf]
    %v3969 = vld [vmem:[#allocation4 + $0x31c] sm:$0xf]
    %v3970 = vld [vmem:[#allocation4 + $0x320] sm:$0xf]
    %v3971 = vld [vmem:[#allocation4 + $0x324] sm:$0xf]
    %v3972 = vld [vmem:[#allocation4 + $0x328] sm:$0xf]
    %v3973 = vld [vmem:[#allocation4 + $0x32c] sm:$0xf]
    %v3974 = vld [vmem:[#allocation4 + $0x330] sm:$0xf]
    %v3975 = vld [vmem:[#allocation4 + $0x334] sm:$0xf]
    %v3976 = vld [vmem:[#allocation4 + $0x338] sm:$0xf]
    %v3977 = vld [vmem:[#allocation4 + $0x33c] sm:$0xf]
    %v3978 = vld [vmem:[#allocation4 + $0x340] sm:$0xf]
    %v3979 = vld [vmem:[#allocation4 + $0x344] sm:$0xf]
    %v3980 = vld [vmem:[#allocation4 + $0x348] sm:$0xf]
    %v3981 = vld [vmem:[#allocation4 + $0x34c] sm:$0xf]
    %v3982 = vld [vmem:[#allocation4 + $0x350] sm:$0xf]
    %v3983 = vld [vmem:[#allocation4 + $0x354] sm:$0xf]
    %v3984 = vld [vmem:[#allocation4 + $0x358] sm:$0xf]
    %v3985 = vld [vmem:[#allocation4 + $0x35c] sm:$0xf]
    %v3986 = vld [vmem:[#allocation4 + $0x360] sm:$0xf]
    %v3987 = vld [vmem:[#allocation4 + $0x364] sm:$0xf]
    %v3988 = vld [vmem:[#allocation4 + $0x368] sm:$0xf]
    %v3989 = vld [vmem:[#allocation4 + $0x36c] sm:$0xf]
    %v3990 = vld [vmem:[#allocation4 + $0x370] sm:$0xf]
    %v3991 = vld [vmem:[#allocation4 + $0x374] sm:$0xf]
    %v3992 = vld [vmem:[#allocation4 + $0x378] sm:$0xf]
    %v3993 = vld [vmem:[#allocation4 + $0x37c] sm:$0xf]
    %v3994 = vld [vmem:[#allocation4 + $0x380] sm:$0xf]
    %v3995 = vld [vmem:[#allocation4 + $0x384] sm:$0xf]
    %v3996 = vld [vmem:[#allocation4 + $0x388] sm:$0xf]
    %v3997 = vld [vmem:[#allocation4 + $0x38c] sm:$0xf]
    %v3998 = vld [vmem:[#allocation4 + $0x390] sm:$0xf]
    %v3999 = vld [vmem:[#allocation4 + $0x394] sm:$0xf]
    %v4000 = vld [vmem:[#allocation4 + $0x398] sm:$0xf]
    %v4001 = vld [vmem:[#allocation4 + $0x39c] sm:$0xf]
    %v4002 = vld [vmem:[#allocation4 + $0x3a0] sm:$0xf]
    %v4003 = vld [vmem:[#allocation4 + $0x3a4] sm:$0xf]
    %v4004 = vld [vmem:[#allocation4 + $0x3a8] sm:$0xf]
    %v4005 = vld [vmem:[#allocation4 + $0x3ac] sm:$0xf]
    %v4006 = vld [vmem:[#allocation4 + $0x3b0] sm:$0xf]
    %v4007 = vld [vmem:[#allocation4 + $0x3b4] sm:$0xf]
    %v4008 = vld [vmem:[#allocation4 + $0x3b8] sm:$0xf]
    %v4009 = vld [vmem:[#allocation4 + $0x3bc] sm:$0xf]
    %v4010 = vld [vmem:[#allocation4 + $0x3c0] sm:$0xf]
    %v4011 = vld [vmem:[#allocation4 + $0x3c4] sm:$0xf]
    %v4012 = vld [vmem:[#allocation4 + $0x3c8] sm:$0xf]
    %v4013 = vld [vmem:[#allocation4 + $0x3cc] sm:$0xf]
    %v4014 = vld [vmem:[#allocation4 + $0x3d0] sm:$0xf]
    %v4015 = vld [vmem:[#allocation4 + $0x3d4] sm:$0xf]
    %v4016 = vld [vmem:[#allocation4 + $0x3d8] sm:$0xf]
    %v4017 = vld [vmem:[#allocation4 + $0x3dc] sm:$0xf]
    %v4018 = vld [vmem:[#allocation4 + $0x3e0] sm:$0xf]
    %v4019 = vld [vmem:[#allocation4 + $0x3e4] sm:$0xf]
    %v4020 = vld [vmem:[#allocation4 + $0x3e8] sm:$0xf]
    %v4021 = vld [vmem:[#allocation4 + $0x3ec] sm:$0xf]
    %v4022 = vld [vmem:[#allocation4 + $0x3f0] sm:$0xf]
    %v4023 = vld [vmem:[#allocation4 + $0x3f4] sm:$0xf]
    %v4024 = vld [vmem:[#allocation4 + $0x3f8] sm:$0xf]
    %v4025 = vld [vmem:[#allocation4 + $0x3fc] sm:$0xf]
    %v4026 = vld [vmem:[#allocation4 + $0x400] sm:$0xf]
    %v4027 = vld [vmem:[#allocation4 + $0x404] sm:$0xf]
    %v4028 = vld [vmem:[#allocation4 + $0x408] sm:$0xf]
    %v4029 = vld [vmem:[#allocation4 + $0x40c] sm:$0xf]
    %v4030 = vld [vmem:[#allocation4 + $0x410] sm:$0xf]
    %v4031 = vld [vmem:[#allocation4 + $0x414] sm:$0xf]
    %v4032 = vld [vmem:[#allocation4 + $0x418] sm:$0xf]
    %v4033 = vld [vmem:[#allocation4 + $0x41c] sm:$0xf]
    %v4034 = vld [vmem:[#allocation4 + $0x420] sm:$0xf]
    %v4035 = vld [vmem:[#allocation4 + $0x424] sm:$0xf]
    %v4036 = vld [vmem:[#allocation4 + $0x428] sm:$0xf]
    %v4037 = vld [vmem:[#allocation4 + $0x42c] sm:$0xf]
    %v4038 = vld [vmem:[#allocation4 + $0x430] sm:$0xf]
    %v4039 = vld [vmem:[#allocation4 + $0x434] sm:$0xf]
    %v4040 = vld [vmem:[#allocation4 + $0x438] sm:$0xf]
    %v4041 = vld [vmem:[#allocation4 + $0x43c] sm:$0xf]
    %v4042 = vld [vmem:[#allocation4 + $0x440] sm:$0xf]
    %v4043 = vld [vmem:[#allocation4 + $0x444] sm:$0xf]
    %v4044 = vld [vmem:[#allocation4 + $0x448] sm:$0xf]
    %v4045 = vld [vmem:[#allocation4 + $0x44c] sm:$0xf]
    %v4046 = vld [vmem:[#allocation4 + $0x450] sm:$0xf]
    %v4047 = vld [vmem:[#allocation4 + $0x454] sm:$0xf]
    %v4048 = vld [vmem:[#allocation4 + $0x458] sm:$0xf]
    %v4049 = vld [vmem:[#allocation4 + $0x45c] sm:$0xf]
    %v4050 = vld [vmem:[#allocation4 + $0x460] sm:$0xf]
    %v4051 = vld [vmem:[#allocation4 + $0x464] sm:$0xf]
    %v4052 = vld [vmem:[#allocation4 + $0x468] sm:$0xf]
    %v4053 = vld [vmem:[#allocation4 + $0x46c] sm:$0xf]
    %v4054 = vld [vmem:[#allocation4 + $0x470] sm:$0xf]
    %v4055 = vld [vmem:[#allocation4 + $0x474] sm:$0xf]
    %v4056 = vld [vmem:[#allocation4 + $0x478] sm:$0xf]
    %v4057 = vld [vmem:[#allocation4 + $0x47c] sm:$0xf]
    %v4058 = vld [vmem:[%s8] sm:$0x1]
    %v4060 = vperm.slane %v4058, 0
    %v4350 = vunpack.c.l.b16 %v3770
    %v4351 = vunpack.c.l.b16 %v3771
    %v4352 = vunpack.c.l.b16 %v3772
    %v4353 = vunpack.c.l.b16 %v3773
    %v4354 = vunpack.c.l.b16 %v3774
    %v4355 = vunpack.c.l.b16 %v3775
    %v4356 = vunpack.c.l.b16 %v3776
    %v4357 = vunpack.c.l.b16 %v3777
    %v4358 = vunpack.c.l.b16 %v3778
    %v4359 = vunpack.c.l.b16 %v3779
    %v4360 = vunpack.c.l.b16 %v3780
    %v4361 = vunpack.c.l.b16 %v3781
    %v4362 = vunpack.c.l.b16 %v3782
    %v4363 = vunpack.c.l.b16 %v3783
    %v4364 = vunpack.c.l.b16 %v3784
    %v4365 = vunpack.c.l.b16 %v3785
    %v4366 = vunpack.c.l.b16 %v3786
    %v4367 = vunpack.c.l.b16 %v3787
    %v4368 = vunpack.c.l.b16 %v3788
    %v4369 = vunpack.c.l.b16 %v3789
    %v4370 = vunpack.c.l.b16 %v3790
    %v4371 = vunpack.c.l.b16 %v3791
    %v4372 = vunpack.c.l.b16 %v3792
    %v4373 = vunpack.c.l.b16 %v3793
    %v4374 = vunpack.c.l.b16 %v3794
    %v4375 = vunpack.c.l.b16 %v3795
    %v4376 = vunpack.c.l.b16 %v3796
    %v4377 = vunpack.c.l.b16 %v3797
    %v4378 = vunpack.c.l.b16 %v3798
    %v4379 = vunpack.c.l.b16 %v3799
    %v4380 = vunpack.c.l.b16 %v3800
    %v4381 = vunpack.c.l.b16 %v3801
    %v4382 = vunpack.c.l.b16 %v3802
    %v4383 = vunpack.c.l.b16 %v3803
    %v4384 = vunpack.c.l.b16 %v3804
    %v4385 = vunpack.c.l.b16 %v3805
    %v4386 = vunpack.c.l.b16 %v3806
    %v4387 = vunpack.c.l.b16 %v3807
    %v4388 = vunpack.c.l.b16 %v3808
    %v4389 = vunpack.c.l.b16 %v3809
    %v4390 = vunpack.c.l.b16 %v3810
    %v4391 = vunpack.c.l.b16 %v3811
    %v4392 = vunpack.c.l.b16 %v3812
    %v4393 = vunpack.c.l.b16 %v3813
    %v4394 = vunpack.c.l.b16 %v3814
    %v4395 = vunpack.c.l.b16 %v3815
    %v4396 = vunpack.c.l.b16 %v3816
    %v4397 = vunpack.c.l.b16 %v3817
    %v4398 = vunpack.c.l.b16 %v3818
    %v4399 = vunpack.c.l.b16 %v3819
    %v4400 = vunpack.c.l.b16 %v3820
    %v4401 = vunpack.c.l.b16 %v3821
    %v4402 = vunpack.c.l.b16 %v3822
    %v4403 = vunpack.c.l.b16 %v3823
    %v4404 = vunpack.c.l.b16 %v3824
    %v4405 = vunpack.c.l.b16 %v3825
    %v4406 = vunpack.c.l.b16 %v3826
    %v4407 = vunpack.c.l.b16 %v3827
    %v4408 = vunpack.c.l.b16 %v3828
    %v4409 = vunpack.c.l.b16 %v3829
    %v4410 = vunpack.c.l.b16 %v3830
    %v4411 = vunpack.c.l.b16 %v3831
    %v4412 = vunpack.c.l.b16 %v3832
    %v4413 = vunpack.c.l.b16 %v3833
    %v4414 = vunpack.c.l.b16 %v3834
    %v4415 = vunpack.c.l.b16 %v3835
    %v4416 = vunpack.c.l.b16 %v3836
    %v4417 = vunpack.c.l.b16 %v3837
    %v4418 = vunpack.c.l.b16 %v3838
    %v4419 = vunpack.c.l.b16 %v3839
    %v4420 = vunpack.c.l.b16 %v3840
    %v4421 = vunpack.c.l.b16 %v3841
    %v4422 = vunpack.c.l.b16 %v3842
    %v4423 = vunpack.c.l.b16 %v3843
    %v4424 = vunpack.c.l.b16 %v3844
    %v4425 = vunpack.c.l.b16 %v3845
    %v4426 = vunpack.c.l.b16 %v3846
    %v4427 = vunpack.c.l.b16 %v3847
    %v4428 = vunpack.c.l.b16 %v3848
    %v4429 = vunpack.c.l.b16 %v3849
    %v4430 = vunpack.c.l.b16 %v3850
    %v4431 = vunpack.c.l.b16 %v3851
    %v4432 = vunpack.c.l.b16 %v3852
    %v4433 = vunpack.c.l.b16 %v3853
    %v4434 = vunpack.c.l.b16 %v3854
    %v4435 = vunpack.c.l.b16 %v3855
    %v4436 = vunpack.c.l.b16 %v3856
    %v4437 = vunpack.c.l.b16 %v3857
    %v4438 = vunpack.c.l.b16 %v3858
    %v4439 = vunpack.c.l.b16 %v3859
    %v4440 = vunpack.c.l.b16 %v3860
    %v4441 = vunpack.c.l.b16 %v3861
    %v4442 = vunpack.c.l.b16 %v3862
    %v4443 = vunpack.c.l.b16 %v3863
    %v4444 = vunpack.c.l.b16 %v3864
    %v4445 = vunpack.c.l.b16 %v3865
    %v4446 = vunpack.c.l.b16 %v3866
    %v4447 = vunpack.c.l.b16 %v3867
    %v4448 = vunpack.c.l.b16 %v3868
    %v4449 = vunpack.c.l.b16 %v3869
    %v4450 = vunpack.c.l.b16 %v3870
    %v4451 = vunpack.c.l.b16 %v3871
    %v4452 = vunpack.c.l.b16 %v3872
    %v4453 = vunpack.c.l.b16 %v3873
    %v4454 = vunpack.c.l.b16 %v3874
    %v4455 = vunpack.c.l.b16 %v3875
    %v4456 = vunpack.c.l.b16 %v3876
    %v4457 = vunpack.c.l.b16 %v3877
    %v4458 = vunpack.c.l.b16 %v3878
    %v4459 = vunpack.c.l.b16 %v3879
    %v4460 = vunpack.c.l.b16 %v3880
    %v4461 = vunpack.c.l.b16 %v3881
    %v4462 = vunpack.c.l.b16 %v3882
    %v4463 = vunpack.c.l.b16 %v3883
    %v4464 = vunpack.c.l.b16 %v3884
    %v4465 = vunpack.c.l.b16 %v3885
    %v4466 = vunpack.c.l.b16 %v3886
    %v4467 = vunpack.c.l.b16 %v3887
    %v4468 = vunpack.c.l.b16 %v3888
    %v4469 = vunpack.c.l.b16 %v3889
    %v4470 = vunpack.c.l.b16 %v3890
    %v4471 = vunpack.c.l.b16 %v3891
    %v4472 = vunpack.c.l.b16 %v3892
    %v4473 = vunpack.c.l.b16 %v3893
    %v4474 = vunpack.c.l.b16 %v3894
    %v4475 = vunpack.c.l.b16 %v3895
    %v4476 = vunpack.c.l.b16 %v3896
    %v4477 = vunpack.c.l.b16 %v3897
    %v4478 = vunpack.c.l.b16 %v3898
    %v4479 = vunpack.c.l.b16 %v3899
    %v4480 = vunpack.c.l.b16 %v3900
    %v4481 = vunpack.c.l.b16 %v3901
    %v4482 = vunpack.c.l.b16 %v3902
    %v4483 = vunpack.c.l.b16 %v3903
    %v4484 = vunpack.c.l.b16 %v3904
    %v4485 = vunpack.c.l.b16 %v3905
    %v4486 = vunpack.c.l.b16 %v3906
    %v4487 = vunpack.c.l.b16 %v3907
    %v4488 = vunpack.c.l.b16 %v3908
    %v4489 = vunpack.c.l.b16 %v3909
    %v4490 = vunpack.c.l.b16 %v3910
    %v4491 = vunpack.c.l.b16 %v3911
    %v4492 = vunpack.c.l.b16 %v3912
    %v4493 = vunpack.c.l.b16 %v3913
    %v4494 = vunpack.c.l.b16 %v3914
    %v4495 = vunpack.c.l.b16 %v3915
    %v4496 = vunpack.c.l.b16 %v3916
    %v4497 = vunpack.c.l.b16 %v3917
    %v4498 = vunpack.c.l.b16 %v3918
    %v4499 = vunpack.c.l.b16 %v3919
    %v4500 = vunpack.c.l.b16 %v3920
    %v4501 = vunpack.c.l.b16 %v3921
    %v4502 = vunpack.c.l.b16 %v3922
    %v4503 = vunpack.c.l.b16 %v3923
    %v4504 = vunpack.c.l.b16 %v3924
    %v4505 = vunpack.c.l.b16 %v3925
    %v4506 = vunpack.c.l.b16 %v3926
    %v4507 = vunpack.c.l.b16 %v3927
    %v4508 = vunpack.c.l.b16 %v3928
    %v4509 = vunpack.c.l.b16 %v3929
    %v4510 = vunpack.c.l.b16 %v3930
    %v4511 = vunpack.c.l.b16 %v3931
    %v4512 = vunpack.c.l.b16 %v3932
    %v4513 = vunpack.c.l.b16 %v3933
    %v4514 = vunpack.c.l.b16 %v3934
    %v4515 = vunpack.c.l.b16 %v3935
    %v4516 = vunpack.c.l.b16 %v3936
    %v4517 = vunpack.c.l.b16 %v3937
    %v4518 = vunpack.c.l.b16 %v3938
    %v4519 = vunpack.c.l.b16 %v3939
    %v4520 = vunpack.c.l.b16 %v3940
    %v4521 = vunpack.c.l.b16 %v3941
    %v4522 = vunpack.c.l.b16 %v3942
    %v4523 = vunpack.c.l.b16 %v3943
    %v4524 = vunpack.c.l.b16 %v3944
    %v4525 = vunpack.c.l.b16 %v3945
    %v4526 = vunpack.c.l.b16 %v3946
    %v4527 = vunpack.c.l.b16 %v3947
    %v4528 = vunpack.c.l.b16 %v3948
    %v4529 = vunpack.c.l.b16 %v3949
    %v4530 = vunpack.c.l.b16 %v3950
    %v4531 = vunpack.c.l.b16 %v3951
    %v4532 = vunpack.c.l.b16 %v3952
    %v4533 = vunpack.c.l.b16 %v3953
    %v4534 = vunpack.c.l.b16 %v3954
    %v4535 = vunpack.c.l.b16 %v3955
    %v4536 = vunpack.c.l.b16 %v3956
    %v4537 = vunpack.c.l.b16 %v3957
    %v4538 = vunpack.c.l.b16 %v3958
    %v4539 = vunpack.c.l.b16 %v3959
    %v4540 = vunpack.c.l.b16 %v3960
    %v4541 = vunpack.c.l.b16 %v3961
    %v4542 = vunpack.c.l.b16 %v3962
    %v4543 = vunpack.c.l.b16 %v3963
    %v4544 = vunpack.c.l.b16 %v3964
    %v4545 = vunpack.c.l.b16 %v3965
    %v4546 = vunpack.c.l.b16 %v3966
    %v4547 = vunpack.c.l.b16 %v3967
    %v4548 = vunpack.c.l.b16 %v3968
    %v4549 = vunpack.c.l.b16 %v3969
    %v4550 = vunpack.c.l.b16 %v3970
    %v4551 = vunpack.c.l.b16 %v3971
    %v4552 = vunpack.c.l.b16 %v3972
    %v4553 = vunpack.c.l.b16 %v3973
    %v4554 = vunpack.c.l.b16 %v3974
    %v4555 = vunpack.c.l.b16 %v3975
    %v4556 = vunpack.c.l.b16 %v3976
    %v4557 = vunpack.c.l.b16 %v3977
    %v4558 = vunpack.c.l.b16 %v3978
    %v4559 = vunpack.c.l.b16 %v3979
    %v4560 = vunpack.c.l.b16 %v3980
    %v4561 = vunpack.c.l.b16 %v3981
    %v4562 = vunpack.c.l.b16 %v3982
    %v4563 = vunpack.c.l.b16 %v3983
    %v4564 = vunpack.c.l.b16 %v3984
    %v4565 = vunpack.c.l.b16 %v3985
    %v4566 = vunpack.c.l.b16 %v3986
    %v4567 = vunpack.c.l.b16 %v3987
    %v4568 = vunpack.c.l.b16 %v3988
    %v4569 = vunpack.c.l.b16 %v3989
    %v4570 = vunpack.c.l.b16 %v3990
    %v4571 = vunpack.c.l.b16 %v3991
    %v4572 = vunpack.c.l.b16 %v3992
    %v4573 = vunpack.c.l.b16 %v3993
    %v4574 = vunpack.c.l.b16 %v3994
    %v4575 = vunpack.c.l.b16 %v3995
    %v4576 = vunpack.c.l.b16 %v3996
    %v4577 = vunpack.c.l.b16 %v3997
    %v4578 = vunpack.c.l.b16 %v3998
    %v4579 = vunpack.c.l.b16 %v3999
    %v4580 = vunpack.c.l.b16 %v4000
    %v4581 = vunpack.c.l.b16 %v4001
    %v4582 = vunpack.c.l.b16 %v4002
    %v4583 = vunpack.c.l.b16 %v4003
    %v4584 = vunpack.c.l.b16 %v4004
    %v4585 = vunpack.c.l.b16 %v4005
    %v4586 = vunpack.c.l.b16 %v4006
    %v4587 = vunpack.c.l.b16 %v4007
    %v4588 = vunpack.c.l.b16 %v4008
    %v4589 = vunpack.c.l.b16 %v4009
    %v4590 = vunpack.c.l.b16 %v4010
    %v4591 = vunpack.c.l.b16 %v4011
    %v4592 = vunpack.c.l.b16 %v4012
    %v4593 = vunpack.c.l.b16 %v4013
    %v4594 = vunpack.c.l.b16 %v4014
    %v4595 = vunpack.c.l.b16 %v4015
    %v4596 = vunpack.c.l.b16 %v4016
    %v4597 = vunpack.c.l.b16 %v4017
    %v4598 = vunpack.c.l.b16 %v4018
    %v4599 = vunpack.c.l.b16 %v4019
    %v4600 = vunpack.c.l.b16 %v4020
    %v4601 = vunpack.c.l.b16 %v4021
    %v4602 = vunpack.c.l.b16 %v4022
    %v4603 = vunpack.c.l.b16 %v4023
    %v4604 = vunpack.c.l.b16 %v4024
    %v4605 = vunpack.c.l.b16 %v4025
    %v4606 = vunpack.c.l.b16 %v4026
    %v4607 = vunpack.c.l.b16 %v4027
    %v4608 = vunpack.c.l.b16 %v4028
    %v4609 = vunpack.c.l.b16 %v4029
    %v4610 = vunpack.c.l.b16 %v4030
    %v4611 = vunpack.c.l.b16 %v4031
    %v4612 = vunpack.c.l.b16 %v4032
    %v4613 = vunpack.c.l.b16 %v4033
    %v4614 = vunpack.c.l.b16 %v4034
    %v4615 = vunpack.c.l.b16 %v4035
    %v4616 = vunpack.c.l.b16 %v4036
    %v4617 = vunpack.c.l.b16 %v4037
    %v4618 = vunpack.c.l.b16 %v4038
    %v4619 = vunpack.c.l.b16 %v4039
    %v4620 = vunpack.c.l.b16 %v4040
    %v4621 = vunpack.c.l.b16 %v4041
    %v4622 = vunpack.c.l.b16 %v4042
    %v4623 = vunpack.c.l.b16 %v4043
    %v4624 = vunpack.c.l.b16 %v4044
    %v4625 = vunpack.c.l.b16 %v4045
    %v4626 = vunpack.c.l.b16 %v4046
    %v4627 = vunpack.c.l.b16 %v4047
    %v4628 = vunpack.c.l.b16 %v4048
    %v4629 = vunpack.c.l.b16 %v4049
    %v4630 = vunpack.c.l.b16 %v4050
    %v4631 = vunpack.c.l.b16 %v4051
    %v4632 = vunpack.c.l.b16 %v4052
    %v4633 = vunpack.c.l.b16 %v4053
    %v4634 = vunpack.c.l.b16 %v4054
    %v4635 = vunpack.c.l.b16 %v4055
    %v4636 = vunpack.c.l.b16 %v4056
    %v4637 = vunpack.c.l.b16 %v4057
    %v4638 = vpack.c.b16 %v4351, %v4350
    %v4639 = vpack.c.b16 %v4353, %v4352
    %v4640 = vpack.c.b16 %v4355, %v4354
    %v4641 = vpack.c.b16 %v4357, %v4356
    %v4642 = vpack.c.b16 %v4359, %v4358
    %v4643 = vpack.c.b16 %v4361, %v4360
    %v4644 = vpack.c.b16 %v4363, %v4362
    %v4645 = vpack.c.b16 %v4365, %v4364
    %v4646 = vpack.c.b16 %v4367, %v4366
    %v4647 = vpack.c.b16 %v4369, %v4368
    %v4648 = vpack.c.b16 %v4371, %v4370
    %v4649 = vpack.c.b16 %v4373, %v4372
    %v4650 = vpack.c.b16 %v4375, %v4374
    %v4651 = vpack.c.b16 %v4377, %v4376
    %v4652 = vpack.c.b16 %v4379, %v4378
    %v4653 = vpack.c.b16 %v4381, %v4380
    %v4654 = vpack.c.b16 %v4383, %v4382
    %v4655 = vpack.c.b16 %v4385, %v4384
    %v4656 = vpack.c.b16 %v4387, %v4386
    %v4657 = vpack.c.b16 %v4389, %v4388
    %v4658 = vpack.c.b16 %v4391, %v4390
    %v4659 = vpack.c.b16 %v4393, %v4392
    %v4660 = vpack.c.b16 %v4395, %v4394
    %v4661 = vpack.c.b16 %v4397, %v4396
    %v4662 = vpack.c.b16 %v4399, %v4398
    %v4663 = vpack.c.b16 %v4401, %v4400
    %v4664 = vpack.c.b16 %v4403, %v4402
    %v4665 = vpack.c.b16 %v4405, %v4404
    %v4666 = vpack.c.b16 %v4407, %v4406
    %v4667 = vpack.c.b16 %v4409, %v4408
    %v4668 = vpack.c.b16 %v4411, %v4410
    %v4669 = vpack.c.b16 %v4413, %v4412
    %v4670 = vpack.c.b16 %v4415, %v4414
    %v4671 = vpack.c.b16 %v4417, %v4416
    %v4672 = vpack.c.b16 %v4419, %v4418
    %v4673 = vpack.c.b16 %v4421, %v4420
    %v4674 = vpack.c.b16 %v4423, %v4422
    %v4675 = vpack.c.b16 %v4425, %v4424
    %v4676 = vpack.c.b16 %v4427, %v4426
    %v4677 = vpack.c.b16 %v4429, %v4428
    %v4678 = vpack.c.b16 %v4431, %v4430
    %v4679 = vpack.c.b16 %v4433, %v4432
    %v4680 = vpack.c.b16 %v4435, %v4434
    %v4681 = vpack.c.b16 %v4437, %v4436
    %v4682 = vpack.c.b16 %v4439, %v4438
    %v4683 = vpack.c.b16 %v4441, %v4440
    %v4684 = vpack.c.b16 %v4443, %v4442
    %v4685 = vpack.c.b16 %v4445, %v4444
    %v4686 = vpack.c.b16 %v4447, %v4446
    %v4687 = vpack.c.b16 %v4449, %v4448
    %v4688 = vpack.c.b16 %v4451, %v4450
    %v4689 = vpack.c.b16 %v4453, %v4452
    %v4690 = vpack.c.b16 %v4455, %v4454
    %v4691 = vpack.c.b16 %v4457, %v4456
    %v4692 = vpack.c.b16 %v4459, %v4458
    %v4693 = vpack.c.b16 %v4461, %v4460
    %v4694 = vpack.c.b16 %v4463, %v4462
    %v4695 = vpack.c.b16 %v4465, %v4464
    %v4696 = vpack.c.b16 %v4467, %v4466
    %v4697 = vpack.c.b16 %v4469, %v4468
    %v4698 = vpack.c.b16 %v4471, %v4470
    %v4699 = vpack.c.b16 %v4473, %v4472
    %v4700 = vpack.c.b16 %v4475, %v4474
    %v4701 = vpack.c.b16 %v4477, %v4476
    %v4702 = vpack.c.b16 %v4479, %v4478
    %v4703 = vpack.c.b16 %v4481, %v4480
    %v4704 = vpack.c.b16 %v4483, %v4482
    %v4705 = vpack.c.b16 %v4485, %v4484
    %v4706 = vpack.c.b16 %v4487, %v4486
    %v4707 = vpack.c.b16 %v4489, %v4488
    %v4708 = vpack.c.b16 %v4491, %v4490
    %v4709 = vpack.c.b16 %v4493, %v4492
    %v4710 = vpack.c.b16 %v4495, %v4494
    %v4711 = vpack.c.b16 %v4497, %v4496
    %v4712 = vpack.c.b16 %v4499, %v4498
    %v4713 = vpack.c.b16 %v4501, %v4500
    %v4714 = vpack.c.b16 %v4503, %v4502
    %v4715 = vpack.c.b16 %v4505, %v4504
    %v4716 = vpack.c.b16 %v4507, %v4506
    %v4717 = vpack.c.b16 %v4509, %v4508
    %v4718 = vpack.c.b16 %v4511, %v4510
    %v4719 = vpack.c.b16 %v4513, %v4512
    %v4720 = vpack.c.b16 %v4515, %v4514
    %v4721 = vpack.c.b16 %v4517, %v4516
    %v4722 = vpack.c.b16 %v4519, %v4518
    %v4723 = vpack.c.b16 %v4521, %v4520
    %v4724 = vpack.c.b16 %v4523, %v4522
    %v4725 = vpack.c.b16 %v4525, %v4524
    %v4726 = vpack.c.b16 %v4527, %v4526
    %v4727 = vpack.c.b16 %v4529, %v4528
    %v4728 = vpack.c.b16 %v4531, %v4530
    %v4729 = vpack.c.b16 %v4533, %v4532
    %v4730 = vpack.c.b16 %v4535, %v4534
    %v4731 = vpack.c.b16 %v4537, %v4536
    %v4732 = vpack.c.b16 %v4539, %v4538
    %v4733 = vpack.c.b16 %v4541, %v4540
    %v4734 = vpack.c.b16 %v4543, %v4542
    %v4735 = vpack.c.b16 %v4545, %v4544
    %v4736 = vpack.c.b16 %v4547, %v4546
    %v4737 = vpack.c.b16 %v4549, %v4548
    %v4738 = vpack.c.b16 %v4551, %v4550
    %v4739 = vpack.c.b16 %v4553, %v4552
    %v4740 = vpack.c.b16 %v4555, %v4554
    %v4741 = vpack.c.b16 %v4557, %v4556
    %v4742 = vpack.c.b16 %v4559, %v4558
    %v4743 = vpack.c.b16 %v4561, %v4560
    %v4744 = vpack.c.b16 %v4563, %v4562
    %v4745 = vpack.c.b16 %v4565, %v4564
    %v4746 = vpack.c.b16 %v4567, %v4566
    %v4747 = vpack.c.b16 %v4569, %v4568
    %v4748 = vpack.c.b16 %v4571, %v4570
    %v4749 = vpack.c.b16 %v4573, %v4572
    %v4750 = vpack.c.b16 %v4575, %v4574
    %v4751 = vpack.c.b16 %v4577, %v4576
    %v4752 = vpack.c.b16 %v4579, %v4578
    %v4753 = vpack.c.b16 %v4581, %v4580
    %v4754 = vpack.c.b16 %v4583, %v4582
    %v4755 = vpack.c.b16 %v4585, %v4584
    %v4756 = vpack.c.b16 %v4587, %v4586
    %v4757 = vpack.c.b16 %v4589, %v4588
    %v4758 = vpack.c.b16 %v4591, %v4590
    %v4759 = vpack.c.b16 %v4593, %v4592
    %v4760 = vpack.c.b16 %v4595, %v4594
    %v4761 = vpack.c.b16 %v4597, %v4596
    %v4762 = vpack.c.b16 %v4599, %v4598
    %v4763 = vpack.c.b16 %v4601, %v4600
    %v4764 = vpack.c.b16 %v4603, %v4602
    %v4765 = vpack.c.b16 %v4605, %v4604
    %v4766 = vpack.c.b16 %v4607, %v4606
    %v4767 = vpack.c.b16 %v4609, %v4608
    %v4768 = vpack.c.b16 %v4611, %v4610
    %v4769 = vpack.c.b16 %v4613, %v4612
    %v4770 = vpack.c.b16 %v4615, %v4614
    %v4771 = vpack.c.b16 %v4617, %v4616
    %v4772 = vpack.c.b16 %v4619, %v4618
    %v4773 = vpack.c.b16 %v4621, %v4620
    %v4774 = vpack.c.b16 %v4623, %v4622
    %v4775 = vpack.c.b16 %v4625, %v4624
    %v4776 = vpack.c.b16 %v4627, %v4626
    %v4777 = vpack.c.b16 %v4629, %v4628
    %v4778 = vpack.c.b16 %v4631, %v4630
    %v4779 = vpack.c.b16 %v4633, %v4632
    %v4780 = vpack.c.b16 %v4635, %v4634
    %v4781 = vpack.c.b16 %v4637, %v4636
    %4926 = vmatpush.bf16.msra.mxu0 %v4645
    %4927 = vmatpush.bf16.msra.mxu0 %v4644
    %4928 = vmatpush.bf16.msra.mxu0 %v4643
    %4929 = vmatpush.bf16.msra.mxu0 %v4642
    %4930 = vmatpush.bf16.msra.mxu0 %v4641
    %4931 = vmatpush.bf16.msra.mxu0 %v4640
    %4932 = vmatpush.bf16.msra.mxu0 %v4639
    %4933 = vmatpush.bf16.msra.mxu0 %v4638
    %4934 = vmatmul.bf16.gmra.mxu0 %v3734
    %v4935 = vpop.f32.mrf.mxu0
    %v4936 = vadd.f32 %v4060, %v4935
    %v4937 = vpop.f32.mrf.mxu0
    %v4938 = vadd.f32 %v4060, %v4937
    %4939 = vmatmul.bf16.gmra.mxu0 %v3752
    %v4940 = vpop.f32.mrf.mxu0
    %v4941 = vadd.f32 %v4060, %v4940
    %v4942 = vpop.f32.mrf.mxu0
    %v4943 = vadd.f32 %v4060, %v4942
    %4944 = vdwg.mxu0
    %4945 = vmatpush.bf16.msra.mxu0 %v4653
    %4946 = vmatpush.bf16.msra.mxu0 %v4652
    %4947 = vmatpush.bf16.msra.mxu0 %v4651
    %4948 = vmatpush.bf16.msra.mxu0 %v4650
    %4949 = vmatpush.bf16.msra.mxu0 %v4649
    %4950 = vmatpush.bf16.msra.mxu0 %v4648
    %4951 = vmatpush.bf16.msra.mxu0 %v4647
    %4952 = vmatpush.bf16.msra.mxu0 %v4646
    %4953 = vmatmul.bf16.gmra.mxu0 %v3735
    %v4954 = vpop.f32.mrf.mxu0
    %v4955 = vadd.f32 %v4936, %v4954
    %v4956 = vpop.f32.mrf.mxu0
    %v4957 = vadd.f32 %v4938, %v4956
    %4958 = vmatmul.bf16.gmra.mxu0 %v3753
    %v4959 = vpop.f32.mrf.mxu0
    %v4960 = vadd.f32 %v4941, %v4959
    %v4961 = vpop.f32.mrf.mxu0
    %v4962 = vadd.f32 %v4943, %v4961
    %4963 = vdwg.mxu0
    %4964 = vmatpush.bf16.msra.mxu0 %v4661
    %4965 = vmatpush.bf16.msra.mxu0 %v4660
    %4966 = vmatpush.bf16.msra.mxu0 %v4659
    %4967 = vmatpush.bf16.msra.mxu0 %v4658
    %4968 = vmatpush.bf16.msra.mxu0 %v4657
    %4969 = vmatpush.bf16.msra.mxu0 %v4656
    %4970 = vmatpush.bf16.msra.mxu0 %v4655
    %4971 = vmatpush.bf16.msra.mxu0 %v4654
    %4972 = vmatmul.bf16.gmra.mxu0 %v3736
    %v4973 = vpop.f32.mrf.mxu0
    %v4974 = vadd.f32 %v4955, %v4973
    %v4975 = vpop.f32.mrf.mxu0
    %v4976 = vadd.f32 %v4957, %v4975
    %4977 = vmatmul.bf16.gmra.mxu0 %v3754
    %v4978 = vpop.f32.mrf.mxu0
    %v4979 = vadd.f32 %v4960, %v4978
    %v4980 = vpop.f32.mrf.mxu0
    %v4981 = vadd.f32 %v4962, %v4980
    %4982 = vdwg.mxu0
    %4983 = vmatpush.bf16.msra.mxu0 %v4669
    %4984 = vmatpush.bf16.msra.mxu0 %v4668
    %4985 = vmatpush.bf16.msra.mxu0 %v4667
    %4986 = vmatpush.bf16.msra.mxu0 %v4666
    %4987 = vmatpush.bf16.msra.mxu0 %v4665
    %4988 = vmatpush.bf16.msra.mxu0 %v4664
    %4989 = vmatpush.bf16.msra.mxu0 %v4663
    %4990 = vmatpush.bf16.msra.mxu0 %v4662
    %4991 = vmatmul.bf16.gmra.mxu0 %v3737
    %v4992 = vpop.f32.mrf.mxu0
    %v4993 = vadd.f32 %v4974, %v4992
    %v4994 = vpop.f32.mrf.mxu0
    %v4995 = vadd.f32 %v4976, %v4994
    %4996 = vmatmul.bf16.gmra.mxu0 %v3755
    %v4997 = vpop.f32.mrf.mxu0
    %v4998 = vadd.f32 %v4979, %v4997
    %v4999 = vpop.f32.mrf.mxu0
    %v5000 = vadd.f32 %v4981, %v4999
    %5001 = vdwg.mxu0
    %5002 = vmatpush.bf16.msra.mxu0 %v4677
    %5003 = vmatpush.bf16.msra.mxu0 %v4676
    %5004 = vmatpush.bf16.msra.mxu0 %v4675
    %5005 = vmatpush.bf16.msra.mxu0 %v4674
    %5006 = vmatpush.bf16.msra.mxu0 %v4673
    %5007 = vmatpush.bf16.msra.mxu0 %v4672
    %5008 = vmatpush.bf16.msra.mxu0 %v4671
    %5009 = vmatpush.bf16.msra.mxu0 %v4670
    %5010 = vmatmul.bf16.gmra.mxu0 %v3738
    %v5011 = vpop.f32.mrf.mxu0
    %v5012 = vadd.f32 %v4993, %v5011
    %v5013 = vpop.f32.mrf.mxu0
    %v5014 = vadd.f32 %v4995, %v5013
    %5015 = vmatmul.bf16.gmra.mxu0 %v3756
    %v5016 = vpop.f32.mrf.mxu0
    %v5017 = vadd.f32 %v4998, %v5016
    %v5018 = vpop.f32.mrf.mxu0
    %v5019 = vadd.f32 %v5000, %v5018
    %5020 = vdwg.mxu0
    %5021 = vmatpush.bf16.msra.mxu0 %v4685
    %5022 = vmatpush.bf16.msra.mxu0 %v4684
    %5023 = vmatpush.bf16.msra.mxu0 %v4683
    %5024 = vmatpush.bf16.msra.mxu0 %v4682
    %5025 = vmatpush.bf16.msra.mxu0 %v4681
    %5026 = vmatpush.bf16.msra.mxu0 %v4680
    %5027 = vmatpush.bf16.msra.mxu0 %v4679
    %5028 = vmatpush.bf16.msra.mxu0 %v4678
    %5029 = vmatmul.bf16.gmra.mxu0 %v3739
    %v5030 = vpop.f32.mrf.mxu0
    %v5031 = vadd.f32 %v5012, %v5030
    %v5032 = vpop.f32.mrf.mxu0
    %v5033 = vadd.f32 %v5014, %v5032
    %5034 = vmatmul.bf16.gmra.mxu0 %v3757
    %v5035 = vpop.f32.mrf.mxu0
    %v5036 = vadd.f32 %v5017, %v5035
    %v5037 = vpop.f32.mrf.mxu0
    %v5038 = vadd.f32 %v5019, %v5037
    %5039 = vdwg.mxu0
    %5040 = vmatpush.bf16.msra.mxu0 %v4693
    %5041 = vmatpush.bf16.msra.mxu0 %v4692
    %5042 = vmatpush.bf16.msra.mxu0 %v4691
    %5043 = vmatpush.bf16.msra.mxu0 %v4690
    %5044 = vmatpush.bf16.msra.mxu0 %v4689
    %5045 = vmatpush.bf16.msra.mxu0 %v4688
    %5046 = vmatpush.bf16.msra.mxu0 %v4687
    %5047 = vmatpush.bf16.msra.mxu0 %v4686
    %5048 = vmatmul.bf16.gmra.mxu0 %v3740
    %v5049 = vpop.f32.mrf.mxu0
    %v5050 = vadd.f32 %v5031, %v5049
    %v5051 = vpop.f32.mrf.mxu0
    %v5052 = vadd.f32 %v5033, %v5051
    %5053 = vmatmul.bf16.gmra.mxu0 %v3758
    %v5054 = vpop.f32.mrf.mxu0
    %v5055 = vadd.f32 %v5036, %v5054
    %v5056 = vpop.f32.mrf.mxu0
    %v5057 = vadd.f32 %v5038, %v5056
    %5058 = vdwg.mxu0
    %5059 = vmatpush.bf16.msra.mxu0 %v4701
    %5060 = vmatpush.bf16.msra.mxu0 %v4700
    %5061 = vmatpush.bf16.msra.mxu0 %v4699
    %5062 = vmatpush.bf16.msra.mxu0 %v4698
    %5063 = vmatpush.bf16.msra.mxu0 %v4697
    %5064 = vmatpush.bf16.msra.mxu0 %v4696
    %5065 = vmatpush.bf16.msra.mxu0 %v4695
    %5066 = vmatpush.bf16.msra.mxu0 %v4694
    %5067 = vmatmul.bf16.gmra.mxu0 %v3741
    %v5068 = vpop.f32.mrf.mxu0
    %v5069 = vadd.f32 %v5050, %v5068
    %v5070 = vpop.f32.mrf.mxu0
    %v5071 = vadd.f32 %v5052, %v5070
    %5072 = vmatmul.bf16.gmra.mxu0 %v3759
    %v5073 = vpop.f32.mrf.mxu0
    %v5074 = vadd.f32 %v5055, %v5073
    %v5075 = vpop.f32.mrf.mxu0
    %v5076 = vadd.f32 %v5057, %v5075
    %5077 = vdwg.mxu0
    %5078 = vmatpush.bf16.msra.mxu0 %v4709
    %5079 = vmatpush.bf16.msra.mxu0 %v4708
    %5080 = vmatpush.bf16.msra.mxu0 %v4707
    %5081 = vmatpush.bf16.msra.mxu0 %v4706
    %5082 = vmatpush.bf16.msra.mxu0 %v4705
    %5083 = vmatpush.bf16.msra.mxu0 %v4704
    %5084 = vmatpush.bf16.msra.mxu0 %v4703
    %5085 = vmatpush.bf16.msra.mxu0 %v4702
    %5086 = vmatmul.bf16.gmra.mxu0 %v3742
    %v5087 = vpop.f32.mrf.mxu0
    %v5088 = vadd.f32 %v5069, %v5087
    %v5089 = vpop.f32.mrf.mxu0
    %v5090 = vadd.f32 %v5071, %v5089
    %5091 = vmatmul.bf16.gmra.mxu0 %v3760
    %v5092 = vpop.f32.mrf.mxu0
    %v5093 = vadd.f32 %v5074, %v5092
    %v5094 = vpop.f32.mrf.mxu0
    %v5095 = vadd.f32 %v5076, %v5094
    %5096 = vdwg.mxu0
    %5097 = vmatpush.bf16.msra.mxu0 %v4717
    %5098 = vmatpush.bf16.msra.mxu0 %v4716
    %5099 = vmatpush.bf16.msra.mxu0 %v4715
    %5100 = vmatpush.bf16.msra.mxu0 %v4714
    %5101 = vmatpush.bf16.msra.mxu0 %v4713
    %5102 = vmatpush.bf16.msra.mxu0 %v4712
    %5103 = vmatpush.bf16.msra.mxu0 %v4711
    %5104 = vmatpush.bf16.msra.mxu0 %v4710
    %5105 = vmatmul.bf16.gmra.mxu0 %v3743
    %v5106 = vpop.f32.mrf.mxu0
    %v5107 = vadd.f32 %v5088, %v5106
    %v5108 = vpop.f32.mrf.mxu0
    %v5109 = vadd.f32 %v5090, %v5108
    %5110 = vmatmul.bf16.gmra.mxu0 %v3761
    %v5111 = vpop.f32.mrf.mxu0
    %v5112 = vadd.f32 %v5093, %v5111
    %v5113 = vpop.f32.mrf.mxu0
    %v5114 = vadd.f32 %v5095, %v5113
    %5115 = vdwg.mxu0
    %5116 = vmatpush.bf16.msra.mxu0 %v4725
    %5117 = vmatpush.bf16.msra.mxu0 %v4724
    %5118 = vmatpush.bf16.msra.mxu0 %v4723
    %5119 = vmatpush.bf16.msra.mxu0 %v4722
    %5120 = vmatpush.bf16.msra.mxu0 %v4721
    %5121 = vmatpush.bf16.msra.mxu0 %v4720
    %5122 = vmatpush.bf16.msra.mxu0 %v4719
    %5123 = vmatpush.bf16.msra.mxu0 %v4718
    %5124 = vmatmul.bf16.gmra.mxu0 %v3744
    %v5125 = vpop.f32.mrf.mxu0
    %v5126 = vadd.f32 %v5107, %v5125
    %v5127 = vpop.f32.mrf.mxu0
    %v5128 = vadd.f32 %v5109, %v5127
    %5129 = vmatmul.bf16.gmra.mxu0 %v3762
    %v5130 = vpop.f32.mrf.mxu0
    %v5131 = vadd.f32 %v5112, %v5130
    %v5132 = vpop.f32.mrf.mxu0
    %v5133 = vadd.f32 %v5114, %v5132
    %5134 = vdwg.mxu0
    %5135 = vmatpush.bf16.msra.mxu0 %v4733
    %5136 = vmatpush.bf16.msra.mxu0 %v4732
    %5137 = vmatpush.bf16.msra.mxu0 %v4731
    %5138 = vmatpush.bf16.msra.mxu0 %v4730
    %5139 = vmatpush.bf16.msra.mxu0 %v4729
    %5140 = vmatpush.bf16.msra.mxu0 %v4728
    %5141 = vmatpush.bf16.msra.mxu0 %v4727
    %5142 = vmatpush.bf16.msra.mxu0 %v4726
    %5143 = vmatmul.bf16.gmra.mxu0 %v3745
    %v5144 = vpop.f32.mrf.mxu0
    %v5145 = vadd.f32 %v5126, %v5144
    %v5146 = vpop.f32.mrf.mxu0
    %v5147 = vadd.f32 %v5128, %v5146
    %5148 = vmatmul.bf16.gmra.mxu0 %v3763
    %v5149 = vpop.f32.mrf.mxu0
    %v5150 = vadd.f32 %v5131, %v5149
    %v5151 = vpop.f32.mrf.mxu0
    %v5152 = vadd.f32 %v5133, %v5151
    %5153 = vdwg.mxu0
    %5154 = vmatpush.bf16.msra.mxu0 %v4741
    %5155 = vmatpush.bf16.msra.mxu0 %v4740
    %5156 = vmatpush.bf16.msra.mxu0 %v4739
    %5157 = vmatpush.bf16.msra.mxu0 %v4738
    %5158 = vmatpush.bf16.msra.mxu0 %v4737
    %5159 = vmatpush.bf16.msra.mxu0 %v4736
    %5160 = vmatpush.bf16.msra.mxu0 %v4735
    %5161 = vmatpush.bf16.msra.mxu0 %v4734
    %5162 = vmatmul.bf16.gmra.mxu0 %v3746
    %v5163 = vpop.f32.mrf.mxu0
    %v5164 = vadd.f32 %v5145, %v5163
    %v5165 = vpop.f32.mrf.mxu0
    %v5166 = vadd.f32 %v5147, %v5165
    %5167 = vmatmul.bf16.gmra.mxu0 %v3764
    %v5168 = vpop.f32.mrf.mxu0
    %v5169 = vadd.f32 %v5150, %v5168
    %v5170 = vpop.f32.mrf.mxu0
    %v5171 = vadd.f32 %v5152, %v5170
    %5172 = vdwg.mxu0
    %5173 = vmatpush.bf16.msra.mxu0 %v4749
    %5174 = vmatpush.bf16.msra.mxu0 %v4748
    %5175 = vmatpush.bf16.msra.mxu0 %v4747
    %5176 = vmatpush.bf16.msra.mxu0 %v4746
    %5177 = vmatpush.bf16.msra.mxu0 %v4745
    %5178 = vmatpush.bf16.msra.mxu0 %v4744
    %5179 = vmatpush.bf16.msra.mxu0 %v4743
    %5180 = vmatpush.bf16.msra.mxu0 %v4742
    %5181 = vmatmul.bf16.gmra.mxu0 %v3747
    %v5182 = vpop.f32.mrf.mxu0
    %v5183 = vadd.f32 %v5164, %v5182
    %v5184 = vpop.f32.mrf.mxu0
    %v5185 = vadd.f32 %v5166, %v5184
    %5186 = vmatmul.bf16.gmra.mxu0 %v3765
    %v5187 = vpop.f32.mrf.mxu0
    %v5188 = vadd.f32 %v5169, %v5187
    %v5189 = vpop.f32.mrf.mxu0
    %v5190 = vadd.f32 %v5171, %v5189
    %5191 = vdwg.mxu0
    %5192 = vmatpush.bf16.msra.mxu0 %v4757
    %5193 = vmatpush.bf16.msra.mxu0 %v4756
    %5194 = vmatpush.bf16.msra.mxu0 %v4755
    %5195 = vmatpush.bf16.msra.mxu0 %v4754
    %5196 = vmatpush.bf16.msra.mxu0 %v4753
    %5197 = vmatpush.bf16.msra.mxu0 %v4752
    %5198 = vmatpush.bf16.msra.mxu0 %v4751
    %5199 = vmatpush.bf16.msra.mxu0 %v4750
    %5200 = vmatmul.bf16.gmra.mxu0 %v3748
    %v5201 = vpop.f32.mrf.mxu0
    %v5202 = vadd.f32 %v5183, %v5201
    %v5203 = vpop.f32.mrf.mxu0
    %v5204 = vadd.f32 %v5185, %v5203
    %5205 = vmatmul.bf16.gmra.mxu0 %v3766
    %v5206 = vpop.f32.mrf.mxu0
    %v5207 = vadd.f32 %v5188, %v5206
    %v5208 = vpop.f32.mrf.mxu0
    %v5209 = vadd.f32 %v5190, %v5208
    %5210 = vdwg.mxu0
    %5211 = vmatpush.bf16.msra.mxu0 %v4765
    %5212 = vmatpush.bf16.msra.mxu0 %v4764
    %5213 = vmatpush.bf16.msra.mxu0 %v4763
    %5214 = vmatpush.bf16.msra.mxu0 %v4762
    %5215 = vmatpush.bf16.msra.mxu0 %v4761
    %5216 = vmatpush.bf16.msra.mxu0 %v4760
    %5217 = vmatpush.bf16.msra.mxu0 %v4759
    %5218 = vmatpush.bf16.msra.mxu0 %v4758
    %5219 = vmatmul.bf16.gmra.mxu0 %v3749
    %v5220 = vpop.f32.mrf.mxu0
    %v5221 = vadd.f32 %v5202, %v5220
    %v5222 = vpop.f32.mrf.mxu0
    %v5223 = vadd.f32 %v5204, %v5222
    %5224 = vmatmul.bf16.gmra.mxu0 %v3767
    %v5225 = vpop.f32.mrf.mxu0
    %v5226 = vadd.f32 %v5207, %v5225
    %v5227 = vpop.f32.mrf.mxu0
    %v5228 = vadd.f32 %v5209, %v5227
    %5229 = vdwg.mxu0
    %5230 = vmatpush.bf16.msra.mxu0 %v4773
    %5231 = vmatpush.bf16.msra.mxu0 %v4772
    %5232 = vmatpush.bf16.msra.mxu0 %v4771
    %5233 = vmatpush.bf16.msra.mxu0 %v4770
    %5234 = vmatpush.bf16.msra.mxu0 %v4769
    %5235 = vmatpush.bf16.msra.mxu0 %v4768
    %5236 = vmatpush.bf16.msra.mxu0 %v4767
    %5237 = vmatpush.bf16.msra.mxu0 %v4766
    %5238 = vmatmul.bf16.gmra.mxu0 %v3750
    %v5239 = vpop.f32.mrf.mxu0
    %v5240 = vadd.f32 %v5221, %v5239
    %v5241 = vpop.f32.mrf.mxu0
    %v5242 = vadd.f32 %v5223, %v5241
    %5243 = vmatmul.bf16.gmra.mxu0 %v3768
    %v5244 = vpop.f32.mrf.mxu0
    %v5245 = vadd.f32 %v5226, %v5244
    %v5246 = vpop.f32.mrf.mxu0
    %v5247 = vadd.f32 %v5228, %v5246
    %5248 = vdwg.mxu0
    %5249 = vmatpush.bf16.msra.mxu0 %v4781
    %5250 = vmatpush.bf16.msra.mxu0 %v4780
    %5251 = vmatpush.bf16.msra.mxu0 %v4779
    %5252 = vmatpush.bf16.msra.mxu0 %v4778
    %5253 = vmatpush.bf16.msra.mxu0 %v4777
    %5254 = vmatpush.bf16.msra.mxu0 %v4776
    %5255 = vmatpush.bf16.msra.mxu0 %v4775
    %5256 = vmatpush.bf16.msra.mxu0 %v4774
    %5257 = vmatmul.bf16.gmra.mxu0 %v3751
    %v5258 = vpop.f32.mrf.mxu0
    %v5259 = vadd.f32 %v5240, %v5258
    %v5260 = vpop.f32.mrf.mxu0
    %v5261 = vadd.f32 %v5242, %v5260
    %5262 = vmatmul.bf16.gmra.mxu0 %v3769
    %v5263 = vpop.f32.mrf.mxu0
    %v5264 = vadd.f32 %v5245, %v5263
    %v5265 = vpop.f32.mrf.mxu0
    %v5266 = vadd.f32 %v5247, %v5265
    %5267 = vdwg.mxu0
    %v5268 = vsub.f32 0.0, %v5259
    %v5269 = vsub.f32 0.0, %v5261
    %v5270 = vsub.f32 0.0, %v5264
    %v5271 = vsub.f32 0.0, %v5266
    %v5272 = vmul.f32 %v5268, 1.442695
    %v5273 = vpow.pop %v5272
    %v5274 = vmul.f32 %v5269, 1.442695
    %v5275 = vpow.pop %v5274
    %v5276 = vmul.f32 %v5270, 1.442695
    %v5277 = vpow.pop %v5276
    %v5278 = vmul.f32 %v5271, 1.442695
    %v5279 = vpow.pop %v5278
    %v5280 = vadd.f32 %v5273, 1.0
    %v5281 = vadd.f32 %v5275, 1.0
    %v5282 = vadd.f32 %v5277, 1.0
    %v5283 = vadd.f32 %v5279, 1.0
    %v5284 = vrcp.pop %v5280
    %v5285 = vrcp.pop %v5281
    %v5286 = vrcp.pop %v5282
    %v5287 = vrcp.pop %v5283
    %5288 = vst [vmem:[%s9] sm:$0xff] %v5284
    %5289 = vst [vmem:[%s9 + $0x8] sm:$0xff] %v5285
    %5290 = vst [vmem:[%s9 + $0x10] sm:$0xff] %v5286
    %5291 = vst [vmem:[%s9 + $0x18] sm:$0xff] %v5287
    // Predicated region
    $region46: #{anomaly_detector_forward.1} parent=1 // pred_check
      _
    $region47: #{anomaly_detector_forward.1} parent=1 // pred_check_branch
      %5293 = sbr.rel (0) target = $region49
    $region48: #{anomaly_detector_forward.1} parent=1 // pred_region
      _
    $region49: #{anomaly_detector_forward.1} parent=1 // pred_fallthru
      _
    // Predicated region
    $region50: #{anomaly_detector_forward.1} parent=1 // pred_check
      _
    $region51: #{anomaly_detector_forward.1} parent=1 // pred_check_branch
      %5295 = sbr.rel (0) target = $region53
    $region52: #{anomaly_detector_forward.1} parent=1 // pred_region
      _
    $region53: #{anomaly_detector_forward.1} parent=1 // pred_fallthru
      _
    %5296 = vsyncpa [#allocation3], 1
    %5297 = vsyncpa [#allocation5], 1

</llo_original>
